<compile_context>
chip_gen: v7x
topology: tpu7x:2x2x1
jax: 0.10.0
libtpu: 0.0.40
codegen_flags: <defaults>
</compile_context>

<pallas_src>
import jax
import jax.numpy as jnp
import numpy as np
from jax.experimental import pallas as pl
from jax.experimental.pallas import tpu as pltpu

HIDDEN = 32
IMG_DIM = 2048


def _round_up(x, m):
    return ((x + m - 1) // m) * m


def negative_mapper_kernel(bin_ref, img_ref, h0_ref, c0_ref, alpha_ref,
                           wih_ref, whh_ref, b_ref,
                           w1_ref, b1_ref, w3a_ref, w3b_ref, b3_ref,
                           out_ref):
    H = HIDDEN
    T = bin_ref.shape[0]          # static

    wih = wih_ref[...]            # (I, 4H)  f32
    whh = whh_ref[...]            # (H, 4H)  f32
    b = b_ref[...]                # (1, 4H)  f32  (= b_ih + b_hh)

    h = h0_ref[...]               # (TB, H)
    c = c0_ref[...]               # (TB, H)

    # ---- LSTM recurrence (gate order [i|f|g|o], as in PyTorch) ------------
    for t in range(T):
        x_t = bin_ref[t]          # (TB, I)
        gates = (jnp.dot(x_t, wih, preferred_element_type=jnp.float32)
                 + jnp.dot(h, whh, preferred_element_type=jnp.float32)
                 + b)                                             # (TB, 4H)
        # Full-vreg transcendentals (4H = 128 lanes), then cheap lane slices.
        sig = jax.nn.sigmoid(gates)
        tg = jnp.tanh(gates)
        i_g = sig[:, 0:H]
        f_g = sig[:, H:2 * H]
        o_g = sig[:, 3 * H:4 * H]
        g_g = tg[:, 2 * H:3 * H]
        c = f_g * c + i_g * g_g
        h = o_g * jnp.tanh(c)

    # ---- heads -------------------------------------------------------------
    bin_mm = jnp.dot(h, w1_ref[...],
                     preferred_element_type=jnp.float32)          # (TB, NP)
    # mlp3 UN-fused: bf16 2048->32 (dominant weight is only 2048x32), f32 acc,
    # then f32 32->NP.  First-layer bias is folded into b3 (exact).
    img_hid = jnp.dot(img_ref[...], w3a_ref[...],
                      preferred_element_type=jnp.float32)         # (TB, 32)
    img_mm = jnp.dot(img_hid, w3b_ref[...],
                     preferred_element_type=jnp.float32)          # (TB, NP)

    alpha = alpha_ref[...]                                        # (1, NP)
    bias = b3_ref[...] + alpha * (b1_ref[...] - b3_ref[...])      # (1, NP)
    out_ref[...] = img_mm + alpha * (bin_mm - img_mm) + bias


def init_params(key, input_size, nclass):
    """PyTorch-equivalent parameters, pre-transposed to (in, out)."""
    ks = jax.random.split(key, 10)
    s = 0.1
    H = HIDDEN
    nout = nclass + 1
    return {
        # LSTM weights (in, 4H), gate order [i|f|g|o]; bias = b_ih + b_hh folded.
        "wih": jax.random.normal(ks[0], (input_size, 4 * H), jnp.float32) * s,
        "whh": jax.random.normal(ks[1], (H, 4 * H), jnp.float32) * s,
        "b":   jax.random.normal(ks[2], (1, 4 * H), jnp.float32) * s,
        # mlp1: Linear(32, nclass+1)
        "w1":  jax.random.normal(ks[3], (H, nout), jnp.float32) * s,
        "b1":  jax.random.normal(ks[4], (1, nout), jnp.float32) * s,
        # mlp3: Linear(2048, 32) -> Linear(32, nclass+1)  (no activation between)
        "w3a": jax.random.normal(ks[5], (IMG_DIM, H), jnp.float32) * s,
        "b3a": jax.random.normal(ks[6], (1, H), jnp.float32) * s,
        "w3b": jax.random.normal(ks[7], (H, nout), jnp.float32) * s,
        "b3b": jax.random.normal(ks[8], (1, nout), jnp.float32) * s,
        # mlp4 is unused in forward -> omitted.
    }


def prepare_kernel_params(params, nclass):
    """One-time host-side prep: pad output columns to 128, fold mlp3 bias, bf16 w3a."""
    nout = nclass + 1
    npad = _round_up(nout, 128)

    def pad_cols(a):
        return jnp.pad(a, ((0, 0), (0, npad - a.shape[-1])))

    # Only the BIAS is folded through the second linear (exact, no nonlinearity
    # between the two layers).  The weights stay UN-fused so the 2048-deep
    # weight remains (2048, 32) instead of a padded (2048, 128).
    b3 = params["b3a"] @ params["w3b"] + params["b3b"]      # (1, nout)

    return {
        "wih": params["wih"].astype(jnp.float32),
        "whh": params["whh"].astype(jnp.float32),
        "b":   params["b"].astype(jnp.float32),
        "w1":  pad_cols(params["w1"]).astype(jnp.float32),
        "b1":  pad_cols(params["b1"]).astype(jnp.float32),
        "w3a": params["w3a"].astype(jnp.bfloat16),          # bf16 weights, f32 acc
        "w3b": pad_cols(params["w3b"]).astype(jnp.float32), # keep f32 (no 2nd rounding)
        "b3":  pad_cols(b3).astype(jnp.float32),
        "npad": npad,
    }


def negative_mapper_forward(kparams, bin_feature, img_features, h, c, alpha_hand,
                            bin_feature_len, input_size, nclass):
    """Wrapper mimicking NegativeMapper.forward (layout plumbing only)."""
    B = img_features.shape[0]
    T = bin_feature_len
    I = input_size
    H = HIDDEN
    nout = nclass + 1
    npad = kparams["npad"]

    # Batch tiling: TB = 256 fills the MXU for large batches; tiny batches are
    # padded up to a sublane multiple (8) and run as a single grid step.
    TB = 256 if B > 256 else _round_up(B, 8)
    Bp = _round_up(B, TB)
    grid = (Bp // TB,)
    padB = Bp - B

    # bin_feature.view([-1, T, I]) -> time-major (T, Bp, I) so each grid batch
    # tile is a clean (T, TB, I) block and bin_ref[t] is a leading-axis index.
    bin3 = jnp.reshape(bin_feature, (-1, T, I)).astype(jnp.float32)    # (B, T, I)
    bin_tm = jnp.transpose(bin3, (1, 0, 2))                            # (T, B, I)
    bin_tm = jnp.pad(bin_tm, ((0, 0), (0, padB), (0, 0)))              # (T, Bp, I)

    # (num_layers=1, B, 32) -> (Bp, 32)
    h0 = jnp.pad(jnp.reshape(h, (B, H)).astype(jnp.float32), ((0, padB), (0, 0)))
    c0 = jnp.pad(jnp.reshape(c, (B, H)).astype(jnp.float32), ((0, padB), (0, 0)))
    img_bf16 = jnp.pad(img_features.astype(jnp.bfloat16), ((0, padB), (0, 0)))
    # alpha as a lane-broadcast vector (runtime-varying, negligible DMA).
    alpha_v = jnp.full((1, npad), alpha_hand, jnp.float32)

    const2 = lambda bt: (0, 0)

    out = pl.pallas_call(
        negative_mapper_kernel,
        out_shape=jax.ShapeDtypeStruct((Bp, npad), jnp.float32),
        grid=grid,
        in_specs=[
            pl.BlockSpec((T, TB, I), lambda bt: (0, bt, 0)),       # bin (time-major)
            pl.BlockSpec((TB, IMG_DIM), lambda bt: (bt, 0)),       # img (bf16)
            pl.BlockSpec((TB, H), lambda bt: (bt, 0)),             # h0
            pl.BlockSpec((TB, H), lambda bt: (bt, 0)),             # c0
            pl.BlockSpec((1, npad), const2),                       # alpha vector
            pl.BlockSpec((I, 4 * H), const2),                      # wih
            pl.BlockSpec((H, 4 * H), const2),                      # whh
            pl.BlockSpec((1, 4 * H), const2),                      # b
            pl.BlockSpec((H, npad), const2),                       # w1
            pl.BlockSpec((1, npad), const2),                       # b1
            pl.BlockSpec((IMG_DIM, H), const2),                    # w3a (bf16)
            pl.BlockSpec((H, npad), const2),                       # w3b (f32)
            pl.BlockSpec((1, npad), const2),                       # b3 (folded)
        ],
        out_specs=pl.BlockSpec((TB, npad), lambda bt: (bt, 0)),
        compiler_params=pltpu.CompilerParams(
            dimension_semantics=("parallel",)),   # v7x: shard batch over 2 TCs
    )(bin_tm, img_bf16, h0, c0, alpha_v,
      kparams["wih"], kparams["whh"], kparams["b"],
      kparams["w1"], kparams["b1"], kparams["w3a"], kparams["w3b"], kparams["b3"])

    # Drop batch padding and lane padding.
    return out[:B, :nout]


def reference_forward(params, bin_feature, img_features, h, c, alpha_hand,
                      bin_feature_len, input_size, nclass):
    """Pure-JAX f32 reference of the PyTorch forward (unfused, for correctness)."""
    B = img_features.shape[0]
    H = HIDDEN
    x = jnp.reshape(bin_feature, (-1, bin_feature_len, input_size)).astype(jnp.float32)
    hh = jnp.reshape(h, (B, H)).astype(jnp.float32)
    cc = jnp.reshape(c, (B, H)).astype(jnp.float32)
    for t in range(bin_feature_len):
        gates = x[:, t, :] @ params["wih"] + hh @ params["whh"] + params["b"]
        i_g = jax.nn.sigmoid(gates[:, 0:H])
        f_g = jax.nn.sigmoid(gates[:, H:2 * H])
        g_g = jnp.tanh(gates[:, 2 * H:3 * H])
        o_g = jax.nn.sigmoid(gates[:, 3 * H:4 * H])
        cc = f_g * cc + i_g * g_g
        hh = o_g * jnp.tanh(cc)
    bin_result = hh @ params["w1"] + params["b1"]
    hid = img_features.astype(jnp.float32) @ params["w3a"] + params["b3a"]
    img_result = hid @ params["w3b"] + params["b3b"]
    a = jnp.float32(alpha_hand)
    return a * bin_result + (1.0 - a) * img_result


if __name__ == "__main__":
    # Small, forward-consistent shapes.
    B = 2                 # batch
    bin_feature_len = 8   # LSTM sequence length
    input_size = 16       # LSTM input size
    nclass = 10           # -> outputs have nclass + 1 = 11 columns

    key = jax.random.PRNGKey(0)
    k_param, k_bin, k_img, k_h, k_c = jax.random.split(key, 5)

    params = init_params(k_param, input_size, nclass)
    kparams = prepare_kernel_params(params, nclass)

    bin_feature = jax.random.normal(k_bin, (B, bin_feature_len * input_size), jnp.float32)
    img_features = jax.random.normal(k_img, (B, IMG_DIM), jnp.float32)
    h = jax.random.normal(k_h, (1, B, HIDDEN), jnp.float32) * 0.1   # (num_layers, B, H)
    c = jax.random.normal(k_c, (1, B, HIDDEN), jnp.float32) * 0.1
    alpha_hand = 0.3

    out = negative_mapper_forward(kparams, bin_feature, img_features, h, c, alpha_hand,
                                  bin_feature_len, input_size, nclass)
    out = jax.block_until_ready(out)

    ref = reference_forward(params, bin_feature, img_features, h, c, alpha_hand,
                            bin_feature_len, input_size, nclass)
    ref = jax.block_until_ready(ref)

    assert out.shape == (B, nclass + 1), out.shape
    # Tolerance covers the intentional bf16 cast on the 2048-deep img matmul
    # (f32 accumulation, f32 second layer); everything else is exact f32.
    assert np.allclose(np.asarray(out), np.asarray(ref), atol=3e-2, rtol=3e-2), (
        np.max(np.abs(np.asarray(out) - np.asarray(ref))))

    print("KERNEL_OK")
</pallas_src>

<mosaic_0001>
module attributes {stable_mosaic.version = 11 : i64} {
  func.func @negative_mapper_kernel(%arg0: i32, %arg1: memref<8x8x16xf32, #tpu.memory_space<vmem>>, %arg2: memref<8x2048xbf16, #tpu.memory_space<vmem>>, %arg3: memref<8x32xf32, #tpu.memory_space<vmem>>, %arg4: memref<8x32xf32, #tpu.memory_space<vmem>>, %arg5: memref<1x128xf32, #tpu.memory_space<vmem>>, %arg6: memref<16x128xf32, #tpu.memory_space<vmem>>, %arg7: memref<32x128xf32, #tpu.memory_space<vmem>>, %arg8: memref<1x128xf32, #tpu.memory_space<vmem>>, %arg9: memref<32x128xf32, #tpu.memory_space<vmem>>, %arg10: memref<1x128xf32, #tpu.memory_space<vmem>>, %arg11: memref<2048x32xbf16, #tpu.memory_space<vmem>>, %arg12: memref<32x128xf32, #tpu.memory_space<vmem>>, %arg13: memref<1x128xf32, #tpu.memory_space<vmem>>, %arg14: memref<8x128xf32, #tpu.memory_space<vmem>>) attributes {dimension_semantics = [#tpu.dimension_semantics<parallel>], iteration_bounds = array<i64: 1>, scalar_prefetch = 0 : i64, scratch_operands = 0 : i64, tpu.core_type = #tpu.core_type<tc>, window_params = [{transform_indices = @transform_0, window_bounds = array<i64: 8, 8, 16>}, {transform_indices = @transform_1, window_bounds = array<i64: 8, 2048>}, {transform_indices = @transform_2, window_bounds = array<i64: 8, 32>}, {transform_indices = @transform_3, window_bounds = array<i64: 8, 32>}, {pipeline_mode = #tpu.pipeline_mode<synchronous>, transform_indices = @transform_4, window_bounds = array<i64: 1, 128>}, {pipeline_mode = #tpu.pipeline_mode<synchronous>, transform_indices = @transform_5, window_bounds = array<i64: 16, 128>}, {pipeline_mode = #tpu.pipeline_mode<synchronous>, transform_indices = @transform_6, window_bounds = array<i64: 32, 128>}, {pipeline_mode = #tpu.pipeline_mode<synchronous>, transform_indices = @transform_7, window_bounds = array<i64: 1, 128>}, {pipeline_mode = #tpu.pipeline_mode<synchronous>, transform_indices = @transform_8, window_bounds = array<i64: 32, 128>}, {pipeline_mode = #tpu.pipeline_mode<synchronous>, transform_indices = @transform_9, window_bounds = array<i64: 1, 128>}, {pipeline_mode = #tpu.pipeline_mode<synchronous>, transform_indices = @transform_10, window_bounds = array<i64: 2048, 32>}, {pipeline_mode = #tpu.pipeline_mode<synchronous>, transform_indices = @transform_11, window_bounds = array<i64: 32, 128>}, {pipeline_mode = #tpu.pipeline_mode<synchronous>, transform_indices = @transform_12, window_bounds = array<i64: 1, 128>}, {transform_indices = @transform_13, window_bounds = array<i64: 8, 128>}]} {
    %c0 = arith.constant 0 : index
    %c0_0 = arith.constant 0 : index
    %0 = vector.load %arg6[%c0, %c0_0] : memref<16x128xf32, #tpu.memory_space<vmem>>, vector<16x128xf32>
    %c0_1 = arith.constant 0 : index
    %c0_2 = arith.constant 0 : index
    %1 = vector.load %arg7[%c0_1, %c0_2] : memref<32x128xf32, #tpu.memory_space<vmem>>, vector<32x128xf32>
    %c0_3 = arith.constant 0 : index
    %c0_4 = arith.constant 0 : index
    %2 = vector.load %arg8[%c0_3, %c0_4] : memref<1x128xf32, #tpu.memory_space<vmem>>, vector<1x128xf32>
    %c0_5 = arith.constant 0 : index
    %c0_6 = arith.constant 0 : index
    %3 = vector.load %arg3[%c0_5, %c0_6] : memref<8x32xf32, #tpu.memory_space<vmem>>, vector<8x32xf32>
    %c0_7 = arith.constant 0 : index
    %c0_8 = arith.constant 0 : index
    %4 = vector.load %arg4[%c0_7, %c0_8] : memref<8x32xf32, #tpu.memory_space<vmem>>, vector<8x32xf32>
    %c0_9 = arith.constant 0 : index
    %c0_10 = arith.constant 0 : index
    %c0_11 = arith.constant 0 : index
    %5 = vector.load %arg1[%c0_9, %c0_10, %c0_11] : memref<8x8x16xf32, #tpu.memory_space<vmem>>, vector<1x8x16xf32>
    %6 = vector.shape_cast %5 : vector<1x8x16xf32> to vector<8x16xf32>
    %cst = arith.constant dense<0.000000e+00> : vector<8x128xf32>
    %7 = tpu.matmul %6, %0, %cst {dimension_numbers = #tpu.dot_dimension_numbers<[1], [0], [0], [1], [0, 0, 1, 1], [], []>} : vector<8x16xf32>, vector<16x128xf32>, vector<8x128xf32> -> vector<8x128xf32>
    %cst_12 = arith.constant dense<0.000000e+00> : vector<8x128xf32>
    %8 = tpu.matmul %3, %1, %cst_12 {dimension_numbers = #tpu.dot_dimension_numbers<[1], [0], [0], [1], [0, 0, 1, 1], [], []>} : vector<8x32xf32>, vector<32x128xf32>, vector<8x128xf32> -> vector<8x128xf32>
    %9 = arith.addf %7, %8 : vector<8x128xf32>
    %10 = vector.broadcast %2 : vector<1x128xf32> to vector<8x128xf32>
    %11 = arith.addf %9, %10 : vector<8x128xf32>
    %12 = arith.negf %11 : vector<8x128xf32>
    %13 = math.exp %12 : vector<8x128xf32>
    %cst_13 = arith.constant 1.000000e+00 : f32
    %14 = vector.broadcast %cst_13 : f32 to vector<8x128xf32>
    %15 = arith.addf %14, %13 : vector<8x128xf32>
    %16 = arith.divf %14, %15 : vector<8x128xf32>
    %17 = math.tanh %11 : vector<8x128xf32>
    %18 = vector.extract_strided_slice %16 {offsets = [0, 0], sizes = [8, 32], strides = [1, 1]} : vector<8x128xf32> to vector<8x32xf32>
    %19 = vector.extract_strided_slice %16 {offsets = [0, 32], sizes = [8, 32], strides = [1, 1]} : vector<8x128xf32> to vector<8x32xf32>
    %20 = vector.extract_strided_slice %16 {offsets = [0, 96], sizes = [8, 32], strides = [1, 1]} : vector<8x128xf32> to vector<8x32xf32>
    %21 = vector.extract_strided_slice %17 {offsets = [0, 64], sizes = [8, 32], strides = [1, 1]} : vector<8x128xf32> to vector<8x32xf32>
    %22 = arith.mulf %19, %4 : vector<8x32xf32>
    %23 = arith.mulf %18, %21 : vector<8x32xf32>
    %24 = arith.addf %22, %23 : vector<8x32xf32>
    %25 = math.tanh %24 : vector<8x32xf32>
    %26 = arith.mulf %20, %25 : vector<8x32xf32>
    %c1 = arith.constant 1 : index
    %c0_14 = arith.constant 0 : index
    %c0_15 = arith.constant 0 : index
    %27 = vector.load %arg1[%c1, %c0_14, %c0_15] : memref<8x8x16xf32, #tpu.memory_space<vmem>>, vector<1x8x16xf32>
    %28 = vector.shape_cast %27 : vector<1x8x16xf32> to vector<8x16xf32>
    %cst_16 = arith.constant dense<0.000000e+00> : vector<8x128xf32>
    %29 = tpu.matmul %28, %0, %cst_16 {dimension_numbers = #tpu.dot_dimension_numbers<[1], [0], [0], [1], [0, 0, 1, 1], [], []>} : vector<8x16xf32>, vector<16x128xf32>, vector<8x128xf32> -> vector<8x128xf32>
    %cst_17 = arith.constant dense<0.000000e+00> : vector<8x128xf32>
    %30 = tpu.matmul %26, %1, %cst_17 {dimension_numbers = #tpu.dot_dimension_numbers<[1], [0], [0], [1], [0, 0, 1, 1], [], []>} : vector<8x32xf32>, vector<32x128xf32>, vector<8x128xf32> -> vector<8x128xf32>
    %31 = arith.addf %29, %30 : vector<8x128xf32>
    %32 = vector.broadcast %2 : vector<1x128xf32> to vector<8x128xf32>
    %33 = arith.addf %31, %32 : vector<8x128xf32>
    %34 = arith.negf %33 : vector<8x128xf32>
    %35 = math.exp %34 : vector<8x128xf32>
    %cst_18 = arith.constant 1.000000e+00 : f32
    %36 = vector.broadcast %cst_18 : f32 to vector<8x128xf32>
    %37 = arith.addf %36, %35 : vector<8x128xf32>
    %38 = arith.divf %36, %37 : vector<8x128xf32>
    %39 = math.tanh %33 : vector<8x128xf32>
    %40 = vector.extract_strided_slice %38 {offsets = [0, 0], sizes = [8, 32], strides = [1, 1]} : vector<8x128xf32> to vector<8x32xf32>
    %41 = vector.extract_strided_slice %38 {offsets = [0, 32], sizes = [8, 32], strides = [1, 1]} : vector<8x128xf32> to vector<8x32xf32>
    %42 = vector.extract_strided_slice %38 {offsets = [0, 96], sizes = [8, 32], strides = [1, 1]} : vector<8x128xf32> to vector<8x32xf32>
    %43 = vector.extract_strided_slice %39 {offsets = [0, 64], sizes = [8, 32], strides = [1, 1]} : vector<8x128xf32> to vector<8x32xf32>
    %44 = arith.mulf %41, %24 : vector<8x32xf32>
    %45 = arith.mulf %40, %43 : vector<8x32xf32>
    %46 = arith.addf %44, %45 : vector<8x32xf32>
    %47 = math.tanh %46 : vector<8x32xf32>
    %48 = arith.mulf %42, %47 : vector<8x32xf32>
    %c2 = arith.constant 2 : index
    %c0_19 = arith.constant 0 : index
    %c0_20 = arith.constant 0 : index
    %49 = vector.load %arg1[%c2, %c0_19, %c0_20] : memref<8x8x16xf32, #tpu.memory_space<vmem>>, vector<1x8x16xf32>
    %50 = vector.shape_cast %49 : vector<1x8x16xf32> to vector<8x16xf32>
    %cst_21 = arith.constant dense<0.000000e+00> : vector<8x128xf32>
    %51 = tpu.matmul %50, %0, %cst_21 {dimension_numbers = #tpu.dot_dimension_numbers<[1], [0], [0], [1], [0, 0, 1, 1], [], []>} : vector<8x16xf32>, vector<16x128xf32>, vector<8x128xf32> -> vector<8x128xf32>
    %cst_22 = arith.constant dense<0.000000e+00> : vector<8x128xf32>
    %52 = tpu.matmul %48, %1, %cst_22 {dimension_numbers = #tpu.dot_dimension_numbers<[1], [0], [0], [1], [0, 0, 1, 1], [], []>} : vector<8x32xf32>, vector<32x128xf32>, vector<8x128xf32> -> vector<8x128xf32>
    %53 = arith.addf %51, %52 : vector<8x128xf32>
    %54 = vector.broadcast %2 : vector<1x128xf32> to vector<8x128xf32>
    %55 = arith.addf %53, %54 : vector<8x128xf32>
    %56 = arith.negf %55 : vector<8x128xf32>
    %57 = math.exp %56 : vector<8x128xf32>
    %cst_23 = arith.constant 1.000000e+00 : f32
    %58 = vector.broadcast %cst_23 : f32 to vector<8x128xf32>
    %59 = arith.addf %58, %57 : vector<8x128xf32>
    %60 = arith.divf %58, %59 : vector<8x128xf32>
    %61 = math.tanh %55 : vector<8x128xf32>
    %62 = vector.extract_strided_slice %60 {offsets = [0, 0], sizes = [8, 32], strides = [1, 1]} : vector<8x128xf32> to vector<8x32xf32>
    %63 = vector.extract_strided_slice %60 {offsets = [0, 32], sizes = [8, 32], strides = [1, 1]} : vector<8x128xf32> to vector<8x32xf32>
    %64 = vector.extract_strided_slice %60 {offsets = [0, 96], sizes = [8, 32], strides = [1, 1]} : vector<8x128xf32> to vector<8x32xf32>
    %65 = vector.extract_strided_slice %61 {offsets = [0, 64], sizes = [8, 32], strides = [1, 1]} : vector<8x128xf32> to vector<8x32xf32>
    %66 = arith.mulf %63, %46 : vector<8x32xf32>
    %67 = arith.mulf %62, %65 : vector<8x32xf32>
    %68 = arith.addf %66, %67 : vector<8x32xf32>
    %69 = math.tanh %68 : vector<8x32xf32>
    %70 = arith.mulf %64, %69 : vector<8x32xf32>
    %c3 = arith.constant 3 : index
    %c0_24 = arith.constant 0 : index
    %c0_25 = arith.constant 0 : index
    %71 = vector.load %arg1[%c3, %c0_24, %c0_25] : memref<8x8x16xf32, #tpu.memory_space<vmem>>, vector<1x8x16xf32>
    %72 = vector.shape_cast %71 : vector<1x8x16xf32> to vector<8x16xf32>
    %cst_26 = arith.constant dense<0.000000e+00> : vector<8x128xf32>
    %73 = tpu.matmul %72, %0, %cst_26 {dimension_numbers = #tpu.dot_dimension_numbers<[1], [0], [0], [1], [0, 0, 1, 1], [], []>} : vector<8x16xf32>, vector<16x128xf32>, vector<8x128xf32> -> vector<8x128xf32>
    %cst_27 = arith.constant dense<0.000000e+00> : vector<8x128xf32>
    %74 = tpu.matmul %70, %1, %cst_27 {dimension_numbers = #tpu.dot_dimension_numbers<[1], [0], [0], [1], [0, 0, 1, 1], [], []>} : vector<8x32xf32>, vector<32x128xf32>, vector<8x128xf32> -> vector<8x128xf32>
    %75 = arith.addf %73, %74 : vector<8x128xf32>
    %76 = vector.broadcast %2 : vector<1x128xf32> to vector<8x128xf32>
    %77 = arith.addf %75, %76 : vector<8x128xf32>
    %78 = arith.negf %77 : vector<8x128xf32>
    %79 = math.exp %78 : vector<8x128xf32>
    %cst_28 = arith.constant 1.000000e+00 : f32
    %80 = vector.broadcast %cst_28 : f32 to vector<8x128xf32>
    %81 = arith.addf %80, %79 : vector<8x128xf32>
    %82 = arith.divf %80, %81 : vector<8x128xf32>
    %83 = math.tanh %77 : vector<8x128xf32>
    %84 = vector.extract_strided_slice %82 {offsets = [0, 0], sizes = [8, 32], strides = [1, 1]} : vector<8x128xf32> to vector<8x32xf32>
    %85 = vector.extract_strided_slice %82 {offsets = [0, 32], sizes = [8, 32], strides = [1, 1]} : vector<8x128xf32> to vector<8x32xf32>
    %86 = vector.extract_strided_slice %82 {offsets = [0, 96], sizes = [8, 32], strides = [1, 1]} : vector<8x128xf32> to vector<8x32xf32>
    %87 = vector.extract_strided_slice %83 {offsets = [0, 64], sizes = [8, 32], strides = [1, 1]} : vector<8x128xf32> to vector<8x32xf32>
    %88 = arith.mulf %85, %68 : vector<8x32xf32>
    %89 = arith.mulf %84, %87 : vector<8x32xf32>
    %90 = arith.addf %88, %89 : vector<8x32xf32>
    %91 = math.tanh %90 : vector<8x32xf32>
    %92 = arith.mulf %86, %91 : vector<8x32xf32>
    %c4 = arith.constant 4 : index
    %c0_29 = arith.constant 0 : index
    %c0_30 = arith.constant 0 : index
    %93 = vector.load %arg1[%c4, %c0_29, %c0_30] : memref<8x8x16xf32, #tpu.memory_space<vmem>>, vector<1x8x16xf32>
    %94 = vector.shape_cast %93 : vector<1x8x16xf32> to vector<8x16xf32>
    %cst_31 = arith.constant dense<0.000000e+00> : vector<8x128xf32>
    %95 = tpu.matmul %94, %0, %cst_31 {dimension_numbers = #tpu.dot_dimension_numbers<[1], [0], [0], [1], [0, 0, 1, 1], [], []>} : vector<8x16xf32>, vector<16x128xf32>, vector<8x128xf32> -> vector<8x128xf32>
    %cst_32 = arith.constant dense<0.000000e+00> : vector<8x128xf32>
    %96 = tpu.matmul %92, %1, %cst_32 {dimension_numbers = #tpu.dot_dimension_numbers<[1], [0], [0], [1], [0, 0, 1, 1], [], []>} : vector<8x32xf32>, vector<32x128xf32>, vector<8x128xf32> -> vector<8x128xf32>
    %97 = arith.addf %95, %96 : vector<8x128xf32>
    %98 = vector.broadcast %2 : vector<1x128xf32> to vector<8x128xf32>
    %99 = arith.addf %97, %98 : vector<8x128xf32>
    %100 = arith.negf %99 : vector<8x128xf32>
    %101 = math.exp %100 : vector<8x128xf32>
    %cst_33 = arith.constant 1.000000e+00 : f32
    %102 = vector.broadcast %cst_33 : f32 to vector<8x128xf32>
    %103 = arith.addf %102, %101 : vector<8x128xf32>
    %104 = arith.divf %102, %103 : vector<8x128xf32>
    %105 = math.tanh %99 : vector<8x128xf32>
    %106 = vector.extract_strided_slice %104 {offsets = [0, 0], sizes = [8, 32], strides = [1, 1]} : vector<8x128xf32> to vector<8x32xf32>
    %107 = vector.extract_strided_slice %104 {offsets = [0, 32], sizes = [8, 32], strides = [1, 1]} : vector<8x128xf32> to vector<8x32xf32>
    %108 = vector.extract_strided_slice %104 {offsets = [0, 96], sizes = [8, 32], strides = [1, 1]} : vector<8x128xf32> to vector<8x32xf32>
    %109 = vector.extract_strided_slice %105 {offsets = [0, 64], sizes = [8, 32], strides = [1, 1]} : vector<8x128xf32> to vector<8x32xf32>
    %110 = arith.mulf %107, %90 : vector<8x32xf32>
    %111 = arith.mulf %106, %109 : vector<8x32xf32>
    %112 = arith.addf %110, %111 : vector<8x32xf32>
    %113 = math.tanh %112 : vector<8x32xf32>
    %114 = arith.mulf %108, %113 : vector<8x32xf32>
    %c5 = arith.constant 5 : index
    %c0_34 = arith.constant 0 : index
    %c0_35 = arith.constant 0 : index
    %115 = vector.load %arg1[%c5, %c0_34, %c0_35] : memref<8x8x16xf32, #tpu.memory_space<vmem>>, vector<1x8x16xf32>
    %116 = vector.shape_cast %115 : vector<1x8x16xf32> to vector<8x16xf32>
    %cst_36 = arith.constant dense<0.000000e+00> : vector<8x128xf32>
    %117 = tpu.matmul %116, %0, %cst_36 {dimension_numbers = #tpu.dot_dimension_numbers<[1], [0], [0], [1], [0, 0, 1, 1], [], []>} : vector<8x16xf32>, vector<16x128xf32>, vector<8x128xf32> -> vector<8x128xf32>
    %cst_37 = arith.constant dense<0.000000e+00> : vector<8x128xf32>
    %118 = tpu.matmul %114, %1, %cst_37 {dimension_numbers = #tpu.dot_dimension_numbers<[1], [0], [0], [1], [0, 0, 1, 1], [], []>} : vector<8x32xf32>, vector<32x128xf32>, vector<8x128xf32> -> vector<8x128xf32>
    %119 = arith.addf %117, %118 : vector<8x128xf32>
    %120 = vector.broadcast %2 : vector<1x128xf32> to vector<8x128xf32>
    %121 = arith.addf %119, %120 : vector<8x128xf32>
    %122 = arith.negf %121 : vector<8x128xf32>
    %123 = math.exp %122 : vector<8x128xf32>
    %cst_38 = arith.constant 1.000000e+00 : f32
    %124 = vector.broadcast %cst_38 : f32 to vector<8x128xf32>
    %125 = arith.addf %124, %123 : vector<8x128xf32>
    %126 = arith.divf %124, %125 : vector<8x128xf32>
    %127 = math.tanh %121 : vector<8x128xf32>
    %128 = vector.extract_strided_slice %126 {offsets = [0, 0], sizes = [8, 32], strides = [1, 1]} : vector<8x128xf32> to vector<8x32xf32>
    %129 = vector.extract_strided_slice %126 {offsets = [0, 32], sizes = [8, 32], strides = [1, 1]} : vector<8x128xf32> to vector<8x32xf32>
    %130 = vector.extract_strided_slice %126 {offsets = [0, 96], sizes = [8, 32], strides = [1, 1]} : vector<8x128xf32> to vector<8x32xf32>
    %131 = vector.extract_strided_slice %127 {offsets = [0, 64], sizes = [8, 32], strides = [1, 1]} : vector<8x128xf32> to vector<8x32xf32>
    %132 = arith.mulf %129, %112 : vector<8x32xf32>
    %133 = arith.mulf %128, %131 : vector<8x32xf32>
    %134 = arith.addf %132, %133 : vector<8x32xf32>
    %135 = math.tanh %134 : vector<8x32xf32>
    %136 = arith.mulf %130, %135 : vector<8x32xf32>
    %c6 = arith.constant 6 : index
    %c0_39 = arith.constant 0 : index
    %c0_40 = arith.constant 0 : index
    %137 = vector.load %arg1[%c6, %c0_39, %c0_40] : memref<8x8x16xf32, #tpu.memory_space<vmem>>, vector<1x8x16xf32>
    %138 = vector.shape_cast %137 : vector<1x8x16xf32> to vector<8x16xf32>
    %cst_41 = arith.constant dense<0.000000e+00> : vector<8x128xf32>
    %139 = tpu.matmul %138, %0, %cst_41 {dimension_numbers = #tpu.dot_dimension_numbers<[1], [0], [0], [1], [0, 0, 1, 1], [], []>} : vector<8x16xf32>, vector<16x128xf32>, vector<8x128xf32> -> vector<8x128xf32>
    %cst_42 = arith.constant dense<0.000000e+00> : vector<8x128xf32>
    %140 = tpu.matmul %136, %1, %cst_42 {dimension_numbers = #tpu.dot_dimension_numbers<[1], [0], [0], [1], [0, 0, 1, 1], [], []>} : vector<8x32xf32>, vector<32x128xf32>, vector<8x128xf32> -> vector<8x128xf32>
    %141 = arith.addf %139, %140 : vector<8x128xf32>
    %142 = vector.broadcast %2 : vector<1x128xf32> to vector<8x128xf32>
    %143 = arith.addf %141, %142 : vector<8x128xf32>
    %144 = arith.negf %143 : vector<8x128xf32>
    %145 = math.exp %144 : vector<8x128xf32>
    %cst_43 = arith.constant 1.000000e+00 : f32
    %146 = vector.broadcast %cst_43 : f32 to vector<8x128xf32>
    %147 = arith.addf %146, %145 : vector<8x128xf32>
    %148 = arith.divf %146, %147 : vector<8x128xf32>
    %149 = math.tanh %143 : vector<8x128xf32>
    %150 = vector.extract_strided_slice %148 {offsets = [0, 0], sizes = [8, 32], strides = [1, 1]} : vector<8x128xf32> to vector<8x32xf32>
    %151 = vector.extract_strided_slice %148 {offsets = [0, 32], sizes = [8, 32], strides = [1, 1]} : vector<8x128xf32> to vector<8x32xf32>
    %152 = vector.extract_strided_slice %148 {offsets = [0, 96], sizes = [8, 32], strides = [1, 1]} : vector<8x128xf32> to vector<8x32xf32>
    %153 = vector.extract_strided_slice %149 {offsets = [0, 64], sizes = [8, 32], strides = [1, 1]} : vector<8x128xf32> to vector<8x32xf32>
    %154 = arith.mulf %151, %134 : vector<8x32xf32>
    %155 = arith.mulf %150, %153 : vector<8x32xf32>
    %156 = arith.addf %154, %155 : vector<8x32xf32>
    %157 = math.tanh %156 : vector<8x32xf32>
    %158 = arith.mulf %152, %157 : vector<8x32xf32>
    %c7 = arith.constant 7 : index
    %c0_44 = arith.constant 0 : index
    %c0_45 = arith.constant 0 : index
    %159 = vector.load %arg1[%c7, %c0_44, %c0_45] : memref<8x8x16xf32, #tpu.memory_space<vmem>>, vector<1x8x16xf32>
    %160 = vector.shape_cast %159 : vector<1x8x16xf32> to vector<8x16xf32>
    %cst_46 = arith.constant dense<0.000000e+00> : vector<8x128xf32>
    %161 = tpu.matmul %160, %0, %cst_46 {dimension_numbers = #tpu.dot_dimension_numbers<[1], [0], [0], [1], [0, 0, 1, 1], [], []>} : vector<8x16xf32>, vector<16x128xf32>, vector<8x128xf32> -> vector<8x128xf32>
    %cst_47 = arith.constant dense<0.000000e+00> : vector<8x128xf32>
    %162 = tpu.matmul %158, %1, %cst_47 {dimension_numbers = #tpu.dot_dimension_numbers<[1], [0], [0], [1], [0, 0, 1, 1], [], []>} : vector<8x32xf32>, vector<32x128xf32>, vector<8x128xf32> -> vector<8x128xf32>
    %163 = arith.addf %161, %162 : vector<8x128xf32>
    %164 = vector.broadcast %2 : vector<1x128xf32> to vector<8x128xf32>
    %165 = arith.addf %163, %164 : vector<8x128xf32>
    %166 = arith.negf %165 : vector<8x128xf32>
    %167 = math.exp %166 : vector<8x128xf32>
    %cst_48 = arith.constant 1.000000e+00 : f32
    %168 = vector.broadcast %cst_48 : f32 to vector<8x128xf32>
    %169 = arith.addf %168, %167 : vector<8x128xf32>
    %170 = arith.divf %168, %169 : vector<8x128xf32>
    %171 = math.tanh %165 : vector<8x128xf32>
    %172 = vector.extract_strided_slice %170 {offsets = [0, 0], sizes = [8, 32], strides = [1, 1]} : vector<8x128xf32> to vector<8x32xf32>
    %173 = vector.extract_strided_slice %170 {offsets = [0, 32], sizes = [8, 32], strides = [1, 1]} : vector<8x128xf32> to vector<8x32xf32>
    %174 = vector.extract_strided_slice %170 {offsets = [0, 96], sizes = [8, 32], strides = [1, 1]} : vector<8x128xf32> to vector<8x32xf32>
    %175 = vector.extract_strided_slice %171 {offsets = [0, 64], sizes = [8, 32], strides = [1, 1]} : vector<8x128xf32> to vector<8x32xf32>
    %176 = arith.mulf %173, %156 : vector<8x32xf32>
    %177 = arith.mulf %172, %175 : vector<8x32xf32>
    %178 = arith.addf %176, %177 : vector<8x32xf32>
    %179 = math.tanh %178 : vector<8x32xf32>
    %180 = arith.mulf %174, %179 : vector<8x32xf32>
    %c0_49 = arith.constant 0 : index
    %c0_50 = arith.constant 0 : index
    %181 = vector.load %arg9[%c0_49, %c0_50] : memref<32x128xf32, #tpu.memory_space<vmem>>, vector<32x128xf32>
    %cst_51 = arith.constant dense<0.000000e+00> : vector<8x128xf32>
    %182 = tpu.matmul %180, %181, %cst_51 {dimension_numbers = #tpu.dot_dimension_numbers<[1], [0], [0], [1], [0, 0, 1, 1], [], []>} : vector<8x32xf32>, vector<32x128xf32>, vector<8x128xf32> -> vector<8x128xf32>
    %c0_52 = arith.constant 0 : index
    %c0_53 = arith.constant 0 : index
    %183 = vector.load %arg2[%c0_52, %c0_53] : memref<8x2048xbf16, #tpu.memory_space<vmem>>, vector<8x2048xbf16>
    %c0_54 = arith.constant 0 : index
    %c0_55 = arith.constant 0 : index
    %184 = vector.load %arg11[%c0_54, %c0_55] : memref<2048x32xbf16, #tpu.memory_space<vmem>>, vector<2048x32xbf16>
    %cst_56 = arith.constant dense<0.000000e+00> : vector<8x32xf32>
    %185 = tpu.matmul %183, %184, %cst_56 {dimension_numbers = #tpu.dot_dimension_numbers<[1], [0], [0], [1], [0, 0, 1, 1], [], []>} : vector<8x2048xbf16>, vector<2048x32xbf16>, vector<8x32xf32> -> vector<8x32xf32>
    %c0_57 = arith.constant 0 : index
    %c0_58 = arith.constant 0 : index
    %186 = vector.load %arg12[%c0_57, %c0_58] : memref<32x128xf32, #tpu.memory_space<vmem>>, vector<32x128xf32>
    %cst_59 = arith.constant dense<0.000000e+00> : vector<8x128xf32>
    %187 = tpu.matmul %185, %186, %cst_59 {dimension_numbers = #tpu.dot_dimension_numbers<[1], [0], [0], [1], [0, 0, 1, 1], [], []>} : vector<8x32xf32>, vector<32x128xf32>, vector<8x128xf32> -> vector<8x128xf32>
    %c0_60 = arith.constant 0 : index
    %c0_61 = arith.constant 0 : index
    %188 = vector.load %arg5[%c0_60, %c0_61] : memref<1x128xf32, #tpu.memory_space<vmem>>, vector<1x128xf32>
    %c0_62 = arith.constant 0 : index
    %c0_63 = arith.constant 0 : index
    %189 = vector.load %arg13[%c0_62, %c0_63] : memref<1x128xf32, #tpu.memory_space<vmem>>, vector<1x128xf32>
    %c0_64 = arith.constant 0 : index
    %c0_65 = arith.constant 0 : index
    %190 = vector.load %arg10[%c0_64, %c0_65] : memref<1x128xf32, #tpu.memory_space<vmem>>, vector<1x128xf32>
    %c0_66 = arith.constant 0 : index
    %c0_67 = arith.constant 0 : index
    %191 = vector.load %arg13[%c0_66, %c0_67] : memref<1x128xf32, #tpu.memory_space<vmem>>, vector<1x128xf32>
    %192 = arith.subf %190, %191 : vector<1x128xf32>
    %193 = arith.mulf %188, %192 : vector<1x128xf32>
    %194 = arith.addf %189, %193 : vector<1x128xf32>
    %195 = arith.subf %182, %187 : vector<8x128xf32>
    %196 = vector.broadcast %188 : vector<1x128xf32> to vector<8x128xf32>
    %197 = arith.mulf %196, %195 : vector<8x128xf32>
    %198 = arith.addf %187, %197 : vector<8x128xf32>
    %199 = vector.broadcast %194 : vector<1x128xf32> to vector<8x128xf32>
    %200 = arith.addf %198, %199 : vector<8x128xf32>
    %c0_68 = arith.constant 0 : index
    %c0_69 = arith.constant 0 : index
    %201 = vector.load %arg14[%c0_68, %c0_69] : memref<8x128xf32, #tpu.memory_space<vmem>>, vector<8x128xf32>
    tpu.vector_store %arg14[%c0_68, %c0_69], %200 {strides = array<i32>} : memref<8x128xf32, #tpu.memory_space<vmem>>, vector<8x128xf32>,
    return
  }
  func.func @transform_0(%arg0: i32) -> (i32, i32, i32) {
    %c0_i32 = arith.constant 0 : i32
    %c0_i32_0 = arith.constant 0 : i32
    %c0_i32_1 = arith.constant 0 : i32
    return %c0_i32, %arg0, %c0_i32_0 : i32, i32, i32
  }
  func.func @transform_1(%arg0: i32) -> (i32, i32) {
    %c0_i32 = arith.constant 0 : i32
    %c0_i32_0 = arith.constant 0 : i32
    return %arg0, %c0_i32 : i32, i32
  }
  func.func @transform_2(%arg0: i32) -> (i32, i32) {
    %c0_i32 = arith.constant 0 : i32
    %c0_i32_0 = arith.constant 0 : i32
    return %arg0, %c0_i32 : i32, i32
  }
  func.func @transform_3(%arg0: i32) -> (i32, i32) {
    %c0_i32 = arith.constant 0 : i32
    %c0_i32_0 = arith.constant 0 : i32
    return %arg0, %c0_i32 : i32, i32
  }
  func.func @transform_4(%arg0: i32) -> (i32, i32) {
    %c0_i32 = arith.constant 0 : i32
    %c0_i32_0 = arith.constant 0 : i32
    %c0_i32_1 = arith.constant 0 : i32
    return %c0_i32, %c0_i32_0 : i32, i32
  }
  func.func @transform_5(%arg0: i32) -> (i32, i32) {
    %c0_i32 = arith.constant 0 : i32
    %c0_i32_0 = arith.constant 0 : i32
    %c0_i32_1 = arith.constant 0 : i32
    return %c0_i32, %c0_i32_0 : i32, i32
  }
  func.func @transform_6(%arg0: i32) -> (i32, i32) {
    %c0_i32 = arith.constant 0 : i32
    %c0_i32_0 = arith.constant 0 : i32
    %c0_i32_1 = arith.constant 0 : i32
    return %c0_i32, %c0_i32_0 : i32, i32
  }
  func.func @transform_7(%arg0: i32) -> (i32, i32) {
    %c0_i32 = arith.constant 0 : i32
    %c0_i32_0 = arith.constant 0 : i32
    %c0_i32_1 = arith.constant 0 : i32
    return %c0_i32, %c0_i32_0 : i32, i32
  }
  func.func @transform_8(%arg0: i32) -> (i32, i32) {
    %c0_i32 = arith.constant 0 : i32
    %c0_i32_0 = arith.constant 0 : i32
    %c0_i32_1 = arith.constant 0 : i32
    return %c0_i32, %c0_i32_0 : i32, i32
  }
  func.func @transform_9(%arg0: i32) -> (i32, i32) {
    %c0_i32 = arith.constant 0 : i32
    %c0_i32_0 = arith.constant 0 : i32
    %c0_i32_1 = arith.constant 0 : i32
    return %c0_i32, %c0_i32_0 : i32, i32
  }
  func.func @transform_10(%arg0: i32) -> (i32, i32) {
    %c0_i32 = arith.constant 0 : i32
    %c0_i32_0 = arith.constant 0 : i32
    %c0_i32_1 = arith.constant 0 : i32
    return %c0_i32, %c0_i32_0 : i32, i32
  }
  func.func @transform_11(%arg0: i32) -> (i32, i32) {
    %c0_i32 = arith.constant 0 : i32
    %c0_i32_0 = arith.constant 0 : i32
    %c0_i32_1 = arith.constant 0 : i32
    return %c0_i32, %c0_i32_0 : i32, i32
  }
  func.func @transform_12(%arg0: i32) -> (i32, i32) {
    %c0_i32 = arith.constant 0 : i32
    %c0_i32_0 = arith.constant 0 : i32
    %c0_i32_1 = arith.constant 0 : i32
    return %c0_i32, %c0_i32_0 : i32, i32
  }
  func.func @transform_13(%arg0: i32) -> (i32, i32) {
    %c0_i32 = arith.constant 0 : i32
    %c0_i32_0 = arith.constant 0 : i32
    return %arg0, %c0_i32 : i32, i32
  }
}

</mosaic_0001>

<llo_original>
// kernel: tpu_custom_call.1
$region0: #{tpu_custom_call.1}
  #allocation0 [shape = 'u32[]', space=smem, size = 0x4, offset = 0x4, fixed_abs, tag = 'smem constant byte address 0x4 - core index']
  #allocation1 [shape = 'u32[144,128]{1,0:T(1,128)}', space=vmem, size = 0x12000, scoped, tag = 'internal scratch']
  %s0 = inlined_call_operand.vmem [shape: f32[8,8,16], index: 0, kind: input, shape index: {}]
  %s1 = inlined_call_operand.vmem [shape: bf16[8,2048], index: 1, kind: input, shape index: {}]
  %s2 = inlined_call_operand.vmem [shape: f32[8,32], index: 2, kind: input, shape index: {}]
  %s3 = inlined_call_operand.vmem [shape: f32[8,32], index: 3, kind: input, shape index: {}]
  %s4 = inlined_call_operand.vmem [shape: f32[1,128], index: 4, kind: input, shape index: {}]
  %s5 = inlined_call_operand.vmem [shape: f32[16,128], index: 5, kind: input, shape index: {}]
  %s6 = inlined_call_operand.vmem [shape: f32[32,128], index: 6, kind: input, shape index: {}]
  %s7 = inlined_call_operand.vmem [shape: f32[1,128], index: 7, kind: input, shape index: {}]
  %s8 = inlined_call_operand.vmem [shape: f32[32,128], index: 8, kind: input, shape index: {}]
  %s9 = inlined_call_operand.vmem [shape: f32[1,128], index: 9, kind: input, shape index: {}]
  %s10 = inlined_call_operand.vmem [shape: bf16[2048,32], index: 10, kind: input, shape index: {}]
  %s11 = inlined_call_operand.vmem [shape: f32[32,128], index: 11, kind: input, shape index: {}]
  %s12 = inlined_call_operand.vmem [shape: f32[1,128], index: 12, kind: input, shape index: {}]
  %s13 = inlined_call_operand.hbm [shape: f32[8,128], index: 13, kind: output, shape index: {}]
  %s14 = sld [smem:[#allocation0]]
  $region62: #{tpu_custom_call.1} parent=0
    _
  %s16 = ssub.s32 1, %s14
  %s17 = scalar_select 0, %s16, %s14
  $region1: #{tpu_custom_call.1} parent=0
    #allocation2 [shape = 'u8[4096]{0}', space=vmem, size = 0x1000, scoped, tag = 'output window, operand 0, single buffered']
    #allocation3 [shape = 's32[1]{0}', space=sflag, size = 0x4, scoped, tag = 'scoped memory for tpu_custom_call.1']
    %18 = vsyncpa [#allocation3], 0
    // Predicated region
    $region2: #{tpu_custom_call.1} parent=1 // pred_check
      _
    $region3: #{tpu_custom_call.1} parent=1 // pred_check_branch
      %20 = sbr.rel (0) target = $region5
    $region4: #{tpu_custom_call.1} parent=1 // pred_region
      _
    $region5: #{tpu_custom_call.1} parent=1 // pred_fallthru
      _
    // Predicated region
    $region6: #{tpu_custom_call.1} parent=1 // pred_check
      _
    $region7: #{tpu_custom_call.1} parent=1 // pred_check_branch
      %22 = sbr.rel (0) target = $region9
    $region8: #{tpu_custom_call.1} parent=1 // pred_region
      _
    $region9: #{tpu_custom_call.1} parent=1 // pred_fallthru
      _
    // Predicated region
    $region10: #{tpu_custom_call.1} parent=1 // pred_check
      _
    $region11: #{tpu_custom_call.1} parent=1 // pred_check_branch
      %24 = sbr.rel (0) target = $region13
    $region12: #{tpu_custom_call.1} parent=1 // pred_region
      _
    $region13: #{tpu_custom_call.1} parent=1 // pred_fallthru
      _
    // Predicated region
    $region14: #{tpu_custom_call.1} parent=1 // pred_check
      _
    $region15: #{tpu_custom_call.1} parent=1 // pred_check_branch
      %26 = sbr.rel (0) target = $region17
    $region16: #{tpu_custom_call.1} parent=1 // pred_region
      _
    $region17: #{tpu_custom_call.1} parent=1 // pred_fallthru
      _
    // Predicated region
    $region18: #{tpu_custom_call.1} parent=1 // pred_check
      _
    $region19: #{tpu_custom_call.1} parent=1 // pred_check_branch
      %28 = sbr.rel (0) target = $region21
    $region20: #{tpu_custom_call.1} parent=1 // pred_region
      _
    $region21: #{tpu_custom_call.1} parent=1 // pred_fallthru
      _
    // Predicated region
    $region22: #{tpu_custom_call.1} parent=1 // pred_check
      _
    $region23: #{tpu_custom_call.1} parent=1 // pred_check_branch
      %30 = sbr.rel (0) target = $region25
    $region24: #{tpu_custom_call.1} parent=1 // pred_region
      _
    $region25: #{tpu_custom_call.1} parent=1 // pred_fallthru
      _
    // Predicated region
    $region26: #{tpu_custom_call.1} parent=1 // pred_check
      _
    $region27: #{tpu_custom_call.1} parent=1 // pred_check_branch
      %32 = sbr.rel (0) target = $region29
    $region28: #{tpu_custom_call.1} parent=1 // pred_region
      _
    $region29: #{tpu_custom_call.1} parent=1 // pred_fallthru
      _
    // Predicated region
    $region30: #{tpu_custom_call.1} parent=1 // pred_check
      _
    $region31: #{tpu_custom_call.1} parent=1 // pred_check_branch
      %34 = sbr.rel (0) target = $region33
    $region32: #{tpu_custom_call.1} parent=1 // pred_region
      _
    $region33: #{tpu_custom_call.1} parent=1 // pred_fallthru
      _
    // Predicated region
    $region34: #{tpu_custom_call.1} parent=1 // pred_check
      _
    $region35: #{tpu_custom_call.1} parent=1 // pred_check_branch
      %36 = sbr.rel (0) target = $region37
    $region36: #{tpu_custom_call.1} parent=1 // pred_region
      _
    $region37: #{tpu_custom_call.1} parent=1 // pred_fallthru
      _
    // Predicated region
    $region38: #{tpu_custom_call.1} parent=1 // pred_check
      _
    $region39: #{tpu_custom_call.1} parent=1 // pred_check_branch
      %38 = sbr.rel (0) target = $region41
    $region40: #{tpu_custom_call.1} parent=1 // pred_region
      _
    $region41: #{tpu_custom_call.1} parent=1 // pred_fallthru
      _
    // Predicated region
    $region42: #{tpu_custom_call.1} parent=1 // pred_check
      _
    $region43: #{tpu_custom_call.1} parent=1 // pred_check_branch
      %40 = sbr.rel (0) target = $region45
    $region44: #{tpu_custom_call.1} parent=1 // pred_region
      _
    $region45: #{tpu_custom_call.1} parent=1 // pred_fallthru
      _
    // Predicated region
    $region46: #{tpu_custom_call.1} parent=1 // pred_check
      _
    $region47: #{tpu_custom_call.1} parent=1 // pred_check_branch
      %42 = sbr.rel (0) target = $region49
    $region48: #{tpu_custom_call.1} parent=1 // pred_region
      _
    $region49: #{tpu_custom_call.1} parent=1 // pred_fallthru
      _
    // Predicated region
    $region50: #{tpu_custom_call.1} parent=1 // pred_check
      _
    $region51: #{tpu_custom_call.1} parent=1 // pred_check_branch
      %44 = sbr.rel (0) target = $region53
    $region52: #{tpu_custom_call.1} parent=1 // pred_region
      _
    $region53: #{tpu_custom_call.1} parent=1 // pred_fallthru
      _
    %v46 = vld [vmem:[%s5] sm:$0xff]
    %v47 = vld [vmem:[%s5 + $0x8] sm:$0xff]
    %v48 = vld [vmem:[%s6] sm:$0xff]
    %v49 = vld [vmem:[%s6 + $0x8] sm:$0xff]
    %v50 = vld [vmem:[%s6 + $0x10] sm:$0xff]
    %v51 = vld [vmem:[%s6 + $0x18] sm:$0xff]
    %v52 = vld [vmem:[%s7] sm:$0x1]
    %v53 = vld [vmem:[%s2] sm:$0xff]
    %v54 = vld [vmem:[%s3] sm:$0xff]
    %v55 = vld [vmem:[%s0] sm:$0xff]
    %vm56 = vcmask 261120
    %v58 = vsel %vm56, %v53, 0
    %60 = vmatprep.subr.mxu0 0.0
    %61 = vmatpush1.msra.mxu0 %v48
    %62 = vmatprep.subr.mxu0 0.0
    %63 = vmatpush1.msra.mxu0 %v49
    %64 = vmatprep.subr.mxu0 0.0
    %65 = vmatpush1.msra.mxu0 %v50
    %66 = vmatprep.subr.mxu0 0.0
    %67 = vmatpush1.msra.mxu0 %v51
    %68 = vmatprep.subr.mxu0 0.0
    %69 = vmatpush1.msra.mxu0 0.0
    %70 = vmatprep.subr.mxu0 0.0
    %71 = vmatpush1.msra.mxu0 0.0
    %72 = vmatprep.subr.mxu0 0.0
    %73 = vmatpush1.msra.mxu0 0.0
    %74 = vmatprep.subr.mxu0 0.0
    %75 = vmatpush1.msra.mxu0 0.0
    %76 = vmatprep.subr.mxu0 0.0
    %77 = vmatpush1.msra.mxu0 0.0
    %78 = vmatprep.subr.mxu0 0.0
    %79 = vmatpush1.msra.mxu0 0.0
    %80 = vmatprep.subr.mxu0 0.0
    %81 = vmatpush1.msra.mxu0 0.0
    %82 = vmatprep.subr.mxu0 0.0
    %83 = vmatpush1.msra.mxu0 0.0
    %84 = vmatprep.subr.mxu0 0.0
    %85 = vmatpush1.msra.mxu0 0.0
    %86 = vmatprep.subr.mxu0 0.0
    %87 = vmatpush1.msra.mxu0 0.0
    %88 = vmatprep.subr.mxu0 0.0
    %89 = vmatpush1.msra.mxu0 0.0
    %90 = vmatprep.subr.mxu0 0.0
    %91 = vmatpush1.msra.mxu0 0.0
    %92 = vmatprep.subr.mxu0 0.0
    %93 = vmatpush1.msra.mxu0 0.0
    %94 = vmatprep.subr.mxu0 0.0
    %95 = vmatpush1.msra.mxu0 0.0
    %96 = vmatprep.subr.mxu0 0.0
    %97 = vmatpush1.msra.mxu0 0.0
    %98 = vmatprep.subr.mxu0 0.0
    %99 = vmatpush1.msra.mxu0 0.0
    %100 = vmatprep.subr.mxu0 0.0
    %101 = vmatpush1.msra.mxu0 0.0
    %102 = vmatprep.subr.mxu0 0.0
    %103 = vmatpush1.msra.mxu0 0.0
    %104 = vmatprep.subr.mxu0 0.0
    %105 = vmatpush1.msra.mxu0 0.0
    %106 = vmatprep.subr.mxu0 0.0
    %107 = vmatpush1.msra.mxu0 0.0
    %108 = vmatprep.subr.mxu0 0.0
    %109 = vmatpush1.msra.mxu0 0.0
    %110 = vmatprep.subr.mxu0 0.0
    %111 = vmatpush1.msra.mxu0 0.0
    %112 = vmatprep.subr.mxu0 0.0
    %113 = vmatpush1.msra.mxu0 0.0
    %114 = vmatprep.subr.mxu0 0.0
    %115 = vmatpush1.msra.mxu0 0.0
    %116 = vmatprep.subr.mxu0 0.0
    %117 = vmatpush1.msra.mxu0 0.0
    %118 = vmatprep.subr.mxu0 0.0
    %119 = vmatpush1.msra.mxu0 0.0
    %120 = vmatprep.subr.mxu0 0.0
    %121 = vmatpush1.msra.mxu0 0.0
    %122 = vmatprep.subr.mxu0 0.0
    %123 = vmatpush1.msra.mxu0 0.0
    %124 = vmatprep.mubr.f32.mxu0 0.0
    %125 = vmatmul.mubr.f32.gmra.mrb[0].mxu0 %v58
    %v126 = vpop.f32.mrb[0].mxu0
    %v127 = vadd.f32 0.0, %v126
    %v128 = vpop.f32.mrb[0].mxu0
    %129 = vdwg.mxu0
    %vm130 = vcmask 130048
    %v132 = vsel %vm130, %v55, 0
    %134 = vmatprep.subr.mxu0 0.0
    %135 = vmatpush1.msra.mxu0 %v46
    %136 = vmatprep.subr.mxu0 0.0
    %137 = vmatpush1.msra.mxu0 %v47
    %138 = vmatprep.subr.mxu0 0.0
    %139 = vmatpush1.msra.mxu0 0.0
    %140 = vmatprep.subr.mxu0 0.0
    %141 = vmatpush1.msra.mxu0 0.0
    %142 = vmatprep.subr.mxu0 0.0
    %143 = vmatpush1.msra.mxu0 0.0
    %144 = vmatprep.subr.mxu0 0.0
    %145 = vmatpush1.msra.mxu0 0.0
    %146 = vmatprep.subr.mxu0 0.0
    %147 = vmatpush1.msra.mxu0 0.0
    %148 = vmatprep.subr.mxu0 0.0
    %149 = vmatpush1.msra.mxu0 0.0
    %150 = vmatprep.subr.mxu0 0.0
    %151 = vmatpush1.msra.mxu0 0.0
    %152 = vmatprep.subr.mxu0 0.0
    %153 = vmatpush1.msra.mxu0 0.0
    %154 = vmatprep.subr.mxu0 0.0
    %155 = vmatpush1.msra.mxu0 0.0
    %156 = vmatprep.subr.mxu0 0.0
    %157 = vmatpush1.msra.mxu0 0.0
    %158 = vmatprep.subr.mxu0 0.0
    %159 = vmatpush1.msra.mxu0 0.0
    %160 = vmatprep.subr.mxu0 0.0
    %161 = vmatpush1.msra.mxu0 0.0
    %162 = vmatprep.subr.mxu0 0.0
    %163 = vmatpush1.msra.mxu0 0.0
    %164 = vmatprep.subr.mxu0 0.0
    %165 = vmatpush1.msra.mxu0 0.0
    %166 = vmatprep.subr.mxu0 0.0
    %167 = vmatpush1.msra.mxu0 0.0
    %168 = vmatprep.subr.mxu0 0.0
    %169 = vmatpush1.msra.mxu0 0.0
    %170 = vmatprep.subr.mxu0 0.0
    %171 = vmatpush1.msra.mxu0 0.0
    %172 = vmatprep.subr.mxu0 0.0
    %173 = vmatpush1.msra.mxu0 0.0
    %174 = vmatprep.subr.mxu0 0.0
    %175 = vmatpush1.msra.mxu0 0.0
    %176 = vmatprep.subr.mxu0 0.0
    %177 = vmatpush1.msra.mxu0 0.0
    %178 = vmatprep.subr.mxu0 0.0
    %179 = vmatpush1.msra.mxu0 0.0
    %180 = vmatprep.subr.mxu0 0.0
    %181 = vmatpush1.msra.mxu0 0.0
    %182 = vmatprep.subr.mxu0 0.0
    %183 = vmatpush1.msra.mxu0 0.0
    %184 = vmatprep.subr.mxu0 0.0
    %185 = vmatpush1.msra.mxu0 0.0
    %186 = vmatprep.subr.mxu0 0.0
    %187 = vmatpush1.msra.mxu0 0.0
    %188 = vmatprep.subr.mxu0 0.0
    %189 = vmatpush1.msra.mxu0 0.0
    %190 = vmatprep.subr.mxu0 0.0
    %191 = vmatpush1.msra.mxu0 0.0
    %192 = vmatprep.subr.mxu0 0.0
    %193 = vmatpush1.msra.mxu0 0.0
    %194 = vmatprep.subr.mxu0 0.0
    %195 = vmatpush1.msra.mxu0 0.0
    %196 = vmatprep.subr.mxu0 0.0
    %197 = vmatpush1.msra.mxu0 0.0
    %198 = vmatprep.mubr.f32.mxu0 0.0
    %199 = vmatmul.mubr.f32.gmra.mrb[0].mxu0 %v132
    %v200 = vpop.f32.mrb[0].mxu0
    %v201 = vadd.f32 %v127, %v200
    %v202 = vpop.f32.mrb[0].mxu0
    %203 = vdwg.mxu0
    %v205 = vlaneseq
    %v206 = vshrl.u32 %v205, 7
    %v207 = vsub.s32 0, %v206
    %v208 = vrot.slane %v52, %v207
    %v210 = vadd.f32 %v201, %v208
    %v211 = vxor.u32 %v210, 2147483648
    %v212 = vmul.f32 %v211, 1.442695
    %v213 = vpow.pop %v212
    %v214 = vadd.f32 %v213, 1.0
    %v215 = vrcp.pop %v214
    %v216 = vmul.f32 1.0, %v215
    %v217 = vtanh.pop %v210
    %219 = vrot.lane.b32.xlu0 %v54, 32
    %v220 = vpop.permute.xlu0 %219
    %v222 = vmul.f32 %v216, %v220
    %224 = vrot.lane.b32.xlu0 %v217, 64
    %v225 = vpop.permute.xlu0 %224
    %v227 = vmul.f32 %v216, %v225
    %229 = vrot.lane.b32.xlu0 %v227, 32
    %v230 = vpop.permute.xlu0 %229
    %v232 = vadd.f32 %v222, %v230
    %v233 = vtanh.pop %v232
    %235 = vrot.lane.b32.xlu0 %v233, 64
    %v236 = vpop.permute.xlu0 %235
    %v238 = vmul.f32 %v216, %v236
    %s239 = scalar_lea.vmem %s0, 8
    %v240 = vld [vmem:[%s239] sm:$0xff]
    %242 = vrot.lane.b32.xlu0 %v238, 32
    %v243 = vpop.permute.xlu0 %242
    %v244 = vsel %vm56, %v243, 0
    %246 = vmatprep.subr.mxu0 0.0
    %247 = vmatpush1.msra.mxu0 %v48
    %248 = vmatprep.subr.mxu0 0.0
    %249 = vmatpush1.msra.mxu0 %v49
    %250 = vmatprep.subr.mxu0 0.0
    %251 = vmatpush1.msra.mxu0 %v50
    %252 = vmatprep.subr.mxu0 0.0
    %253 = vmatpush1.msra.mxu0 %v51
    %254 = vmatprep.subr.mxu0 0.0
    %255 = vmatpush1.msra.mxu0 0.0
    %256 = vmatprep.subr.mxu0 0.0
    %257 = vmatpush1.msra.mxu0 0.0
    %258 = vmatprep.subr.mxu0 0.0
    %259 = vmatpush1.msra.mxu0 0.0
    %260 = vmatprep.subr.mxu0 0.0
    %261 = vmatpush1.msra.mxu0 0.0
    %262 = vmatprep.subr.mxu0 0.0
    %263 = vmatpush1.msra.mxu0 0.0
    %264 = vmatprep.subr.mxu0 0.0
    %265 = vmatpush1.msra.mxu0 0.0
    %266 = vmatprep.subr.mxu0 0.0
    %267 = vmatpush1.msra.mxu0 0.0
    %268 = vmatprep.subr.mxu0 0.0
    %269 = vmatpush1.msra.mxu0 0.0
    %270 = vmatprep.subr.mxu0 0.0
    %271 = vmatpush1.msra.mxu0 0.0
    %272 = vmatprep.subr.mxu0 0.0
    %273 = vmatpush1.msra.mxu0 0.0
    %274 = vmatprep.subr.mxu0 0.0
    %275 = vmatpush1.msra.mxu0 0.0
    %276 = vmatprep.subr.mxu0 0.0
    %277 = vmatpush1.msra.mxu0 0.0
    %278 = vmatprep.subr.mxu0 0.0
    %279 = vmatpush1.msra.mxu0 0.0
    %280 = vmatprep.subr.mxu0 0.0
    %281 = vmatpush1.msra.mxu0 0.0
    %282 = vmatprep.subr.mxu0 0.0
    %283 = vmatpush1.msra.mxu0 0.0
    %284 = vmatprep.subr.mxu0 0.0
    %285 = vmatpush1.msra.mxu0 0.0
    %286 = vmatprep.subr.mxu0 0.0
    %287 = vmatpush1.msra.mxu0 0.0
    %288 = vmatprep.subr.mxu0 0.0
    %289 = vmatpush1.msra.mxu0 0.0
    %290 = vmatprep.subr.mxu0 0.0
    %291 = vmatpush1.msra.mxu0 0.0
    %292 = vmatprep.subr.mxu0 0.0
    %293 = vmatpush1.msra.mxu0 0.0
    %294 = vmatprep.subr.mxu0 0.0
    %295 = vmatpush1.msra.mxu0 0.0
    %296 = vmatprep.subr.mxu0 0.0
    %297 = vmatpush1.msra.mxu0 0.0
    %298 = vmatprep.subr.mxu0 0.0
    %299 = vmatpush1.msra.mxu0 0.0
    %300 = vmatprep.subr.mxu0 0.0
    %301 = vmatpush1.msra.mxu0 0.0
    %302 = vmatprep.subr.mxu0 0.0
    %303 = vmatpush1.msra.mxu0 0.0
    %304 = vmatprep.subr.mxu0 0.0
    %305 = vmatpush1.msra.mxu0 0.0
    %306 = vmatprep.subr.mxu0 0.0
    %307 = vmatpush1.msra.mxu0 0.0
    %308 = vmatprep.subr.mxu0 0.0
    %309 = vmatpush1.msra.mxu0 0.0
    %310 = vmatprep.mubr.f32.mxu0 0.0
    %311 = vmatmul.mubr.f32.gmra.mrb[0].mxu0 %v244
    %v312 = vpop.f32.mrb[0].mxu0
    %v313 = vadd.f32 0.0, %v312
    %v314 = vpop.f32.mrb[0].mxu0
    %315 = vdwg.mxu0
    %v317 = vsel %vm130, %v240, 0
    %319 = vmatprep.subr.mxu0 0.0
    %320 = vmatpush1.msra.mxu0 %v46
    %321 = vmatprep.subr.mxu0 0.0
    %322 = vmatpush1.msra.mxu0 %v47
    %323 = vmatprep.subr.mxu0 0.0
    %324 = vmatpush1.msra.mxu0 0.0
    %325 = vmatprep.subr.mxu0 0.0
    %326 = vmatpush1.msra.mxu0 0.0
    %327 = vmatprep.subr.mxu0 0.0
    %328 = vmatpush1.msra.mxu0 0.0
    %329 = vmatprep.subr.mxu0 0.0
    %330 = vmatpush1.msra.mxu0 0.0
    %331 = vmatprep.subr.mxu0 0.0
    %332 = vmatpush1.msra.mxu0 0.0
    %333 = vmatprep.subr.mxu0 0.0
    %334 = vmatpush1.msra.mxu0 0.0
    %335 = vmatprep.subr.mxu0 0.0
    %336 = vmatpush1.msra.mxu0 0.0
    %337 = vmatprep.subr.mxu0 0.0
    %338 = vmatpush1.msra.mxu0 0.0
    %339 = vmatprep.subr.mxu0 0.0
    %340 = vmatpush1.msra.mxu0 0.0
    %341 = vmatprep.subr.mxu0 0.0
    %342 = vmatpush1.msra.mxu0 0.0
    %343 = vmatprep.subr.mxu0 0.0
    %344 = vmatpush1.msra.mxu0 0.0
    %345 = vmatprep.subr.mxu0 0.0
    %346 = vmatpush1.msra.mxu0 0.0
    %347 = vmatprep.subr.mxu0 0.0
    %348 = vmatpush1.msra.mxu0 0.0
    %349 = vmatprep.subr.mxu0 0.0
    %350 = vmatpush1.msra.mxu0 0.0
    %351 = vmatprep.subr.mxu0 0.0
    %352 = vmatpush1.msra.mxu0 0.0
    %353 = vmatprep.subr.mxu0 0.0
    %354 = vmatpush1.msra.mxu0 0.0
    %355 = vmatprep.subr.mxu0 0.0
    %356 = vmatpush1.msra.mxu0 0.0
    %357 = vmatprep.subr.mxu0 0.0
    %358 = vmatpush1.msra.mxu0 0.0
    %359 = vmatprep.subr.mxu0 0.0
    %360 = vmatpush1.msra.mxu0 0.0
    %361 = vmatprep.subr.mxu0 0.0
    %362 = vmatpush1.msra.mxu0 0.0
    %363 = vmatprep.subr.mxu0 0.0
    %364 = vmatpush1.msra.mxu0 0.0
    %365 = vmatprep.subr.mxu0 0.0
    %366 = vmatpush1.msra.mxu0 0.0
    %367 = vmatprep.subr.mxu0 0.0
    %368 = vmatpush1.msra.mxu0 0.0
    %369 = vmatprep.subr.mxu0 0.0
    %370 = vmatpush1.msra.mxu0 0.0
    %371 = vmatprep.subr.mxu0 0.0
    %372 = vmatpush1.msra.mxu0 0.0
    %373 = vmatprep.subr.mxu0 0.0
    %374 = vmatpush1.msra.mxu0 0.0
    %375 = vmatprep.subr.mxu0 0.0
    %376 = vmatpush1.msra.mxu0 0.0
    %377 = vmatprep.subr.mxu0 0.0
    %378 = vmatpush1.msra.mxu0 0.0
    %379 = vmatprep.subr.mxu0 0.0
    %380 = vmatpush1.msra.mxu0 0.0
    %381 = vmatprep.subr.mxu0 0.0
    %382 = vmatpush1.msra.mxu0 0.0
    %383 = vmatprep.mubr.f32.mxu0 0.0
    %384 = vmatmul.mubr.f32.gmra.mrb[0].mxu0 %v317
    %v385 = vpop.f32.mrb[0].mxu0
    %v386 = vadd.f32 %v313, %v385
    %v387 = vpop.f32.mrb[0].mxu0
    %388 = vdwg.mxu0
    %v389 = vadd.f32 %v386, %v208
    %v390 = vxor.u32 %v389, 2147483648
    %v391 = vmul.f32 %v390, 1.442695
    %v392 = vpow.pop %v391
    %v393 = vadd.f32 %v392, 1.0
    %v394 = vrcp.pop %v393
    %v395 = vmul.f32 1.0, %v394
    %v396 = vtanh.pop %v389
    %v397 = vmul.f32 %v395, %v232
    %399 = vrot.lane.b32.xlu0 %v396, 64
    %v400 = vpop.permute.xlu0 %399
    %v402 = vmul.f32 %v395, %v400
    %404 = vrot.lane.b32.xlu0 %v402, 32
    %v405 = vpop.permute.xlu0 %404
    %v407 = vadd.f32 %v397, %v405
    %v408 = vtanh.pop %v407
    %410 = vrot.lane.b32.xlu0 %v408, 64
    %v411 = vpop.permute.xlu0 %410
    %v413 = vmul.f32 %v395, %v411
    %s414 = scalar_lea.vmem %s0, 16
    %v415 = vld [vmem:[%s414] sm:$0xff]
    %417 = vrot.lane.b32.xlu0 %v413, 32
    %v418 = vpop.permute.xlu0 %417
    %v419 = vsel %vm56, %v418, 0
    %421 = vmatprep.subr.mxu0 0.0
    %422 = vmatpush1.msra.mxu0 %v48
    %423 = vmatprep.subr.mxu0 0.0
    %424 = vmatpush1.msra.mxu0 %v49
    %425 = vmatprep.subr.mxu0 0.0
    %426 = vmatpush1.msra.mxu0 %v50
    %427 = vmatprep.subr.mxu0 0.0
    %428 = vmatpush1.msra.mxu0 %v51
    %429 = vmatprep.subr.mxu0 0.0
    %430 = vmatpush1.msra.mxu0 0.0
    %431 = vmatprep.subr.mxu0 0.0
    %432 = vmatpush1.msra.mxu0 0.0
    %433 = vmatprep.subr.mxu0 0.0
    %434 = vmatpush1.msra.mxu0 0.0
    %435 = vmatprep.subr.mxu0 0.0
    %436 = vmatpush1.msra.mxu0 0.0
    %437 = vmatprep.subr.mxu0 0.0
    %438 = vmatpush1.msra.mxu0 0.0
    %439 = vmatprep.subr.mxu0 0.0
    %440 = vmatpush1.msra.mxu0 0.0
    %441 = vmatprep.subr.mxu0 0.0
    %442 = vmatpush1.msra.mxu0 0.0
    %443 = vmatprep.subr.mxu0 0.0
    %444 = vmatpush1.msra.mxu0 0.0
    %445 = vmatprep.subr.mxu0 0.0
    %446 = vmatpush1.msra.mxu0 0.0
    %447 = vmatprep.subr.mxu0 0.0
    %448 = vmatpush1.msra.mxu0 0.0
    %449 = vmatprep.subr.mxu0 0.0
    %450 = vmatpush1.msra.mxu0 0.0
    %451 = vmatprep.subr.mxu0 0.0
    %452 = vmatpush1.msra.mxu0 0.0
    %453 = vmatprep.subr.mxu0 0.0
    %454 = vmatpush1.msra.mxu0 0.0
    %455 = vmatprep.subr.mxu0 0.0
    %456 = vmatpush1.msra.mxu0 0.0
    %457 = vmatprep.subr.mxu0 0.0
    %458 = vmatpush1.msra.mxu0 0.0
    %459 = vmatprep.subr.mxu0 0.0
    %460 = vmatpush1.msra.mxu0 0.0
    %461 = vmatprep.subr.mxu0 0.0
    %462 = vmatpush1.msra.mxu0 0.0
    %463 = vmatprep.subr.mxu0 0.0
    %464 = vmatpush1.msra.mxu0 0.0
    %465 = vmatprep.subr.mxu0 0.0
    %466 = vmatpush1.msra.mxu0 0.0
    %467 = vmatprep.subr.mxu0 0.0
    %468 = vmatpush1.msra.mxu0 0.0
    %469 = vmatprep.subr.mxu0 0.0
    %470 = vmatpush1.msra.mxu0 0.0
    %471 = vmatprep.subr.mxu0 0.0
    %472 = vmatpush1.msra.mxu0 0.0
    %473 = vmatprep.subr.mxu0 0.0
    %474 = vmatpush1.msra.mxu0 0.0
    %475 = vmatprep.subr.mxu0 0.0
    %476 = vmatpush1.msra.mxu0 0.0
    %477 = vmatprep.subr.mxu0 0.0
    %478 = vmatpush1.msra.mxu0 0.0
    %479 = vmatprep.subr.mxu0 0.0
    %480 = vmatpush1.msra.mxu0 0.0
    %481 = vmatprep.subr.mxu0 0.0
    %482 = vmatpush1.msra.mxu0 0.0
    %483 = vmatprep.subr.mxu0 0.0
    %484 = vmatpush1.msra.mxu0 0.0
    %485 = vmatprep.mubr.f32.mxu0 0.0
    %486 = vmatmul.mubr.f32.gmra.mrb[0].mxu0 %v419
    %v487 = vpop.f32.mrb[0].mxu0
    %v488 = vadd.f32 0.0, %v487
    %v489 = vpop.f32.mrb[0].mxu0
    %490 = vdwg.mxu0
    %v492 = vsel %vm130, %v415, 0
    %494 = vmatprep.subr.mxu0 0.0
    %495 = vmatpush1.msra.mxu0 %v46
    %496 = vmatprep.subr.mxu0 0.0
    %497 = vmatpush1.msra.mxu0 %v47
    %498 = vmatprep.subr.mxu0 0.0
    %499 = vmatpush1.msra.mxu0 0.0
    %500 = vmatprep.subr.mxu0 0.0
    %501 = vmatpush1.msra.mxu0 0.0
    %502 = vmatprep.subr.mxu0 0.0
    %503 = vmatpush1.msra.mxu0 0.0
    %504 = vmatprep.subr.mxu0 0.0
    %505 = vmatpush1.msra.mxu0 0.0
    %506 = vmatprep.subr.mxu0 0.0
    %507 = vmatpush1.msra.mxu0 0.0
    %508 = vmatprep.subr.mxu0 0.0
    %509 = vmatpush1.msra.mxu0 0.0
    %510 = vmatprep.subr.mxu0 0.0
    %511 = vmatpush1.msra.mxu0 0.0
    %512 = vmatprep.subr.mxu0 0.0
    %513 = vmatpush1.msra.mxu0 0.0
    %514 = vmatprep.subr.mxu0 0.0
    %515 = vmatpush1.msra.mxu0 0.0
    %516 = vmatprep.subr.mxu0 0.0
    %517 = vmatpush1.msra.mxu0 0.0
    %518 = vmatprep.subr.mxu0 0.0
    %519 = vmatpush1.msra.mxu0 0.0
    %520 = vmatprep.subr.mxu0 0.0
    %521 = vmatpush1.msra.mxu0 0.0
    %522 = vmatprep.subr.mxu0 0.0
    %523 = vmatpush1.msra.mxu0 0.0
    %524 = vmatprep.subr.mxu0 0.0
    %525 = vmatpush1.msra.mxu0 0.0
    %526 = vmatprep.subr.mxu0 0.0
    %527 = vmatpush1.msra.mxu0 0.0
    %528 = vmatprep.subr.mxu0 0.0
    %529 = vmatpush1.msra.mxu0 0.0
    %530 = vmatprep.subr.mxu0 0.0
    %531 = vmatpush1.msra.mxu0 0.0
    %532 = vmatprep.subr.mxu0 0.0
    %533 = vmatpush1.msra.mxu0 0.0
    %534 = vmatprep.subr.mxu0 0.0
    %535 = vmatpush1.msra.mxu0 0.0
    %536 = vmatprep.subr.mxu0 0.0
    %537 = vmatpush1.msra.mxu0 0.0
    %538 = vmatprep.subr.mxu0 0.0
    %539 = vmatpush1.msra.mxu0 0.0
    %540 = vmatprep.subr.mxu0 0.0
    %541 = vmatpush1.msra.mxu0 0.0
    %542 = vmatprep.subr.mxu0 0.0
    %543 = vmatpush1.msra.mxu0 0.0
    %544 = vmatprep.subr.mxu0 0.0
    %545 = vmatpush1.msra.mxu0 0.0
    %546 = vmatprep.subr.mxu0 0.0
    %547 = vmatpush1.msra.mxu0 0.0
    %548 = vmatprep.subr.mxu0 0.0
    %549 = vmatpush1.msra.mxu0 0.0
    %550 = vmatprep.subr.mxu0 0.0
    %551 = vmatpush1.msra.mxu0 0.0
    %552 = vmatprep.subr.mxu0 0.0
    %553 = vmatpush1.msra.mxu0 0.0
    %554 = vmatprep.subr.mxu0 0.0
    %555 = vmatpush1.msra.mxu0 0.0
    %556 = vmatprep.subr.mxu0 0.0
    %557 = vmatpush1.msra.mxu0 0.0
    %558 = vmatprep.mubr.f32.mxu0 0.0
    %559 = vmatmul.mubr.f32.gmra.mrb[0].mxu0 %v492
    %v560 = vpop.f32.mrb[0].mxu0
    %v561 = vadd.f32 %v488, %v560
    %v562 = vpop.f32.mrb[0].mxu0
    %563 = vdwg.mxu0
    %v564 = vadd.f32 %v561, %v208
    %v565 = vxor.u32 %v564, 2147483648
    %v566 = vmul.f32 %v565, 1.442695
    %v567 = vpow.pop %v566
    %v568 = vadd.f32 %v567, 1.0
    %v569 = vrcp.pop %v568
    %v570 = vmul.f32 1.0, %v569
    %v571 = vtanh.pop %v564
    %v572 = vmul.f32 %v570, %v407
    %574 = vrot.lane.b32.xlu0 %v571, 64
    %v575 = vpop.permute.xlu0 %574
    %v577 = vmul.f32 %v570, %v575
    %579 = vrot.lane.b32.xlu0 %v577, 32
    %v580 = vpop.permute.xlu0 %579
    %v582 = vadd.f32 %v572, %v580
    %v583 = vtanh.pop %v582
    %585 = vrot.lane.b32.xlu0 %v583, 64
    %v586 = vpop.permute.xlu0 %585
    %v588 = vmul.f32 %v570, %v586
    %s589 = scalar_lea.vmem %s0, 24
    %v590 = vld [vmem:[%s589] sm:$0xff]
    %592 = vrot.lane.b32.xlu0 %v588, 32
    %v593 = vpop.permute.xlu0 %592
    %v594 = vsel %vm56, %v593, 0
    %596 = vmatprep.subr.mxu0 0.0
    %597 = vmatpush1.msra.mxu0 %v48
    %598 = vmatprep.subr.mxu0 0.0
    %599 = vmatpush1.msra.mxu0 %v49
    %600 = vmatprep.subr.mxu0 0.0
    %601 = vmatpush1.msra.mxu0 %v50
    %602 = vmatprep.subr.mxu0 0.0
    %603 = vmatpush1.msra.mxu0 %v51
    %604 = vmatprep.subr.mxu0 0.0
    %605 = vmatpush1.msra.mxu0 0.0
    %606 = vmatprep.subr.mxu0 0.0
    %607 = vmatpush1.msra.mxu0 0.0
    %608 = vmatprep.subr.mxu0 0.0
    %609 = vmatpush1.msra.mxu0 0.0
    %610 = vmatprep.subr.mxu0 0.0
    %611 = vmatpush1.msra.mxu0 0.0
    %612 = vmatprep.subr.mxu0 0.0
    %613 = vmatpush1.msra.mxu0 0.0
    %614 = vmatprep.subr.mxu0 0.0
    %615 = vmatpush1.msra.mxu0 0.0
    %616 = vmatprep.subr.mxu0 0.0
    %617 = vmatpush1.msra.mxu0 0.0
    %618 = vmatprep.subr.mxu0 0.0
    %619 = vmatpush1.msra.mxu0 0.0
    %620 = vmatprep.subr.mxu0 0.0
    %621 = vmatpush1.msra.mxu0 0.0
    %622 = vmatprep.subr.mxu0 0.0
    %623 = vmatpush1.msra.mxu0 0.0
    %624 = vmatprep.subr.mxu0 0.0
    %625 = vmatpush1.msra.mxu0 0.0
    %626 = vmatprep.subr.mxu0 0.0
    %627 = vmatpush1.msra.mxu0 0.0
    %628 = vmatprep.subr.mxu0 0.0
    %629 = vmatpush1.msra.mxu0 0.0
    %630 = vmatprep.subr.mxu0 0.0
    %631 = vmatpush1.msra.mxu0 0.0
    %632 = vmatprep.subr.mxu0 0.0
    %633 = vmatpush1.msra.mxu0 0.0
    %634 = vmatprep.subr.mxu0 0.0
    %635 = vmatpush1.msra.mxu0 0.0
    %636 = vmatprep.subr.mxu0 0.0
    %637 = vmatpush1.msra.mxu0 0.0
    %638 = vmatprep.subr.mxu0 0.0
    %639 = vmatpush1.msra.mxu0 0.0
    %640 = vmatprep.subr.mxu0 0.0
    %641 = vmatpush1.msra.mxu0 0.0
    %642 = vmatprep.subr.mxu0 0.0
    %643 = vmatpush1.msra.mxu0 0.0
    %644 = vmatprep.subr.mxu0 0.0
    %645 = vmatpush1.msra.mxu0 0.0
    %646 = vmatprep.subr.mxu0 0.0
    %647 = vmatpush1.msra.mxu0 0.0
    %648 = vmatprep.subr.mxu0 0.0
    %649 = vmatpush1.msra.mxu0 0.0
    %650 = vmatprep.subr.mxu0 0.0
    %651 = vmatpush1.msra.mxu0 0.0
    %652 = vmatprep.subr.mxu0 0.0
    %653 = vmatpush1.msra.mxu0 0.0
    %654 = vmatprep.subr.mxu0 0.0
    %655 = vmatpush1.msra.mxu0 0.0
    %656 = vmatprep.subr.mxu0 0.0
    %657 = vmatpush1.msra.mxu0 0.0
    %658 = vmatprep.subr.mxu0 0.0
    %659 = vmatpush1.msra.mxu0 0.0
    %660 = vmatprep.mubr.f32.mxu0 0.0
    %661 = vmatmul.mubr.f32.gmra.mrb[0].mxu0 %v594
    %v662 = vpop.f32.mrb[0].mxu0
    %v663 = vadd.f32 0.0, %v662
    %v664 = vpop.f32.mrb[0].mxu0
    %665 = vdwg.mxu0
    %v667 = vsel %vm130, %v590, 0
    %669 = vmatprep.subr.mxu0 0.0
    %670 = vmatpush1.msra.mxu0 %v46
    %671 = vmatprep.subr.mxu0 0.0
    %672 = vmatpush1.msra.mxu0 %v47
    %673 = vmatprep.subr.mxu0 0.0
    %674 = vmatpush1.msra.mxu0 0.0
    %675 = vmatprep.subr.mxu0 0.0
    %676 = vmatpush1.msra.mxu0 0.0
    %677 = vmatprep.subr.mxu0 0.0
    %678 = vmatpush1.msra.mxu0 0.0
    %679 = vmatprep.subr.mxu0 0.0
    %680 = vmatpush1.msra.mxu0 0.0
    %681 = vmatprep.subr.mxu0 0.0
    %682 = vmatpush1.msra.mxu0 0.0
    %683 = vmatprep.subr.mxu0 0.0
    %684 = vmatpush1.msra.mxu0 0.0
    %685 = vmatprep.subr.mxu0 0.0
    %686 = vmatpush1.msra.mxu0 0.0
    %687 = vmatprep.subr.mxu0 0.0
    %688 = vmatpush1.msra.mxu0 0.0
    %689 = vmatprep.subr.mxu0 0.0
    %690 = vmatpush1.msra.mxu0 0.0
    %691 = vmatprep.subr.mxu0 0.0
    %692 = vmatpush1.msra.mxu0 0.0
    %693 = vmatprep.subr.mxu0 0.0
    %694 = vmatpush1.msra.mxu0 0.0
    %695 = vmatprep.subr.mxu0 0.0
    %696 = vmatpush1.msra.mxu0 0.0
    %697 = vmatprep.subr.mxu0 0.0
    %698 = vmatpush1.msra.mxu0 0.0
    %699 = vmatprep.subr.mxu0 0.0
    %700 = vmatpush1.msra.mxu0 0.0
    %701 = vmatprep.subr.mxu0 0.0
    %702 = vmatpush1.msra.mxu0 0.0
    %703 = vmatprep.subr.mxu0 0.0
    %704 = vmatpush1.msra.mxu0 0.0
    %705 = vmatprep.subr.mxu0 0.0
    %706 = vmatpush1.msra.mxu0 0.0
    %707 = vmatprep.subr.mxu0 0.0
    %708 = vmatpush1.msra.mxu0 0.0
    %709 = vmatprep.subr.mxu0 0.0
    %710 = vmatpush1.msra.mxu0 0.0
    %711 = vmatprep.subr.mxu0 0.0
    %712 = vmatpush1.msra.mxu0 0.0
    %713 = vmatprep.subr.mxu0 0.0
    %714 = vmatpush1.msra.mxu0 0.0
    %715 = vmatprep.subr.mxu0 0.0
    %716 = vmatpush1.msra.mxu0 0.0
    %717 = vmatprep.subr.mxu0 0.0
    %718 = vmatpush1.msra.mxu0 0.0
    %719 = vmatprep.subr.mxu0 0.0
    %720 = vmatpush1.msra.mxu0 0.0
    %721 = vmatprep.subr.mxu0 0.0
    %722 = vmatpush1.msra.mxu0 0.0
    %723 = vmatprep.subr.mxu0 0.0
    %724 = vmatpush1.msra.mxu0 0.0
    %725 = vmatprep.subr.mxu0 0.0
    %726 = vmatpush1.msra.mxu0 0.0
    %727 = vmatprep.subr.mxu0 0.0
    %728 = vmatpush1.msra.mxu0 0.0
    %729 = vmatprep.subr.mxu0 0.0
    %730 = vmatpush1.msra.mxu0 0.0
    %731 = vmatprep.subr.mxu0 0.0
    %732 = vmatpush1.msra.mxu0 0.0
    %733 = vmatprep.mubr.f32.mxu0 0.0
    %734 = vmatmul.mubr.f32.gmra.mrb[0].mxu0 %v667
    %v735 = vpop.f32.mrb[0].mxu0
    %v736 = vadd.f32 %v663, %v735
    %v737 = vpop.f32.mrb[0].mxu0
    %738 = vdwg.mxu0
    %v739 = vadd.f32 %v736, %v208
    %v740 = vxor.u32 %v739, 2147483648
    %v741 = vmul.f32 %v740, 1.442695
    %v742 = vpow.pop %v741
    %v743 = vadd.f32 %v742, 1.0
    %v744 = vrcp.pop %v743
    %v745 = vmul.f32 1.0, %v744
    %v746 = vtanh.pop %v739
    %v747 = vmul.f32 %v745, %v582
    %749 = vrot.lane.b32.xlu0 %v746, 64
    %v750 = vpop.permute.xlu0 %749
    %v752 = vmul.f32 %v745, %v750
    %754 = vrot.lane.b32.xlu0 %v752, 32
    %v755 = vpop.permute.xlu0 %754
    %v757 = vadd.f32 %v747, %v755
    %v758 = vtanh.pop %v757
    %760 = vrot.lane.b32.xlu0 %v758, 64
    %v761 = vpop.permute.xlu0 %760
    %v763 = vmul.f32 %v745, %v761
    %s764 = scalar_lea.vmem %s0, 32
    %v765 = vld [vmem:[%s764] sm:$0xff]
    %767 = vrot.lane.b32.xlu0 %v763, 32
    %v768 = vpop.permute.xlu0 %767
    %v769 = vsel %vm56, %v768, 0
    %771 = vmatprep.subr.mxu0 0.0
    %772 = vmatpush1.msra.mxu0 %v48
    %773 = vmatprep.subr.mxu0 0.0
    %774 = vmatpush1.msra.mxu0 %v49
    %775 = vmatprep.subr.mxu0 0.0
    %776 = vmatpush1.msra.mxu0 %v50
    %777 = vmatprep.subr.mxu0 0.0
    %778 = vmatpush1.msra.mxu0 %v51
    %779 = vmatprep.subr.mxu0 0.0
    %780 = vmatpush1.msra.mxu0 0.0
    %781 = vmatprep.subr.mxu0 0.0
    %782 = vmatpush1.msra.mxu0 0.0
    %783 = vmatprep.subr.mxu0 0.0
    %784 = vmatpush1.msra.mxu0 0.0
    %785 = vmatprep.subr.mxu0 0.0
    %786 = vmatpush1.msra.mxu0 0.0
    %787 = vmatprep.subr.mxu0 0.0
    %788 = vmatpush1.msra.mxu0 0.0
    %789 = vmatprep.subr.mxu0 0.0
    %790 = vmatpush1.msra.mxu0 0.0
    %791 = vmatprep.subr.mxu0 0.0
    %792 = vmatpush1.msra.mxu0 0.0
    %793 = vmatprep.subr.mxu0 0.0
    %794 = vmatpush1.msra.mxu0 0.0
    %795 = vmatprep.subr.mxu0 0.0
    %796 = vmatpush1.msra.mxu0 0.0
    %797 = vmatprep.subr.mxu0 0.0
    %798 = vmatpush1.msra.mxu0 0.0
    %799 = vmatprep.subr.mxu0 0.0
    %800 = vmatpush1.msra.mxu0 0.0
    %801 = vmatprep.subr.mxu0 0.0
    %802 = vmatpush1.msra.mxu0 0.0
    %803 = vmatprep.subr.mxu0 0.0
    %804 = vmatpush1.msra.mxu0 0.0
    %805 = vmatprep.subr.mxu0 0.0
    %806 = vmatpush1.msra.mxu0 0.0
    %807 = vmatprep.subr.mxu0 0.0
    %808 = vmatpush1.msra.mxu0 0.0
    %809 = vmatprep.subr.mxu0 0.0
    %810 = vmatpush1.msra.mxu0 0.0
    %811 = vmatprep.subr.mxu0 0.0
    %812 = vmatpush1.msra.mxu0 0.0
    %813 = vmatprep.subr.mxu0 0.0
    %814 = vmatpush1.msra.mxu0 0.0
    %815 = vmatprep.subr.mxu0 0.0
    %816 = vmatpush1.msra.mxu0 0.0
    %817 = vmatprep.subr.mxu0 0.0
    %818 = vmatpush1.msra.mxu0 0.0
    %819 = vmatprep.subr.mxu0 0.0
    %820 = vmatpush1.msra.mxu0 0.0
    %821 = vmatprep.subr.mxu0 0.0
    %822 = vmatpush1.msra.mxu0 0.0
    %823 = vmatprep.subr.mxu0 0.0
    %824 = vmatpush1.msra.mxu0 0.0
    %825 = vmatprep.subr.mxu0 0.0
    %826 = vmatpush1.msra.mxu0 0.0
    %827 = vmatprep.subr.mxu0 0.0
    %828 = vmatpush1.msra.mxu0 0.0
    %829 = vmatprep.subr.mxu0 0.0
    %830 = vmatpush1.msra.mxu0 0.0
    %831 = vmatprep.subr.mxu0 0.0
    %832 = vmatpush1.msra.mxu0 0.0
    %833 = vmatprep.subr.mxu0 0.0
    %834 = vmatpush1.msra.mxu0 0.0
    %835 = vmatprep.mubr.f32.mxu0 0.0
    %836 = vmatmul.mubr.f32.gmra.mrb[0].mxu0 %v769
    %v837 = vpop.f32.mrb[0].mxu0
    %v838 = vadd.f32 0.0, %v837
    %v839 = vpop.f32.mrb[0].mxu0
    %840 = vdwg.mxu0
    %v842 = vsel %vm130, %v765, 0
    %844 = vmatprep.subr.mxu0 0.0
    %845 = vmatpush1.msra.mxu0 %v46
    %846 = vmatprep.subr.mxu0 0.0
    %847 = vmatpush1.msra.mxu0 %v47
    %848 = vmatprep.subr.mxu0 0.0
    %849 = vmatpush1.msra.mxu0 0.0
    %850 = vmatprep.subr.mxu0 0.0
    %851 = vmatpush1.msra.mxu0 0.0
    %852 = vmatprep.subr.mxu0 0.0
    %853 = vmatpush1.msra.mxu0 0.0
    %854 = vmatprep.subr.mxu0 0.0
    %855 = vmatpush1.msra.mxu0 0.0
    %856 = vmatprep.subr.mxu0 0.0
    %857 = vmatpush1.msra.mxu0 0.0
    %858 = vmatprep.subr.mxu0 0.0
    %859 = vmatpush1.msra.mxu0 0.0
    %860 = vmatprep.subr.mxu0 0.0
    %861 = vmatpush1.msra.mxu0 0.0
    %862 = vmatprep.subr.mxu0 0.0
    %863 = vmatpush1.msra.mxu0 0.0
    %864 = vmatprep.subr.mxu0 0.0
    %865 = vmatpush1.msra.mxu0 0.0
    %866 = vmatprep.subr.mxu0 0.0
    %867 = vmatpush1.msra.mxu0 0.0
    %868 = vmatprep.subr.mxu0 0.0
    %869 = vmatpush1.msra.mxu0 0.0
    %870 = vmatprep.subr.mxu0 0.0
    %871 = vmatpush1.msra.mxu0 0.0
    %872 = vmatprep.subr.mxu0 0.0
    %873 = vmatpush1.msra.mxu0 0.0
    %874 = vmatprep.subr.mxu0 0.0
    %875 = vmatpush1.msra.mxu0 0.0
    %876 = vmatprep.subr.mxu0 0.0
    %877 = vmatpush1.msra.mxu0 0.0
    %878 = vmatprep.subr.mxu0 0.0
    %879 = vmatpush1.msra.mxu0 0.0
    %880 = vmatprep.subr.mxu0 0.0
    %881 = vmatpush1.msra.mxu0 0.0
    %882 = vmatprep.subr.mxu0 0.0
    %883 = vmatpush1.msra.mxu0 0.0
    %884 = vmatprep.subr.mxu0 0.0
    %885 = vmatpush1.msra.mxu0 0.0
    %886 = vmatprep.subr.mxu0 0.0
    %887 = vmatpush1.msra.mxu0 0.0
    %888 = vmatprep.subr.mxu0 0.0
    %889 = vmatpush1.msra.mxu0 0.0
    %890 = vmatprep.subr.mxu0 0.0
    %891 = vmatpush1.msra.mxu0 0.0
    %892 = vmatprep.subr.mxu0 0.0
    %893 = vmatpush1.msra.mxu0 0.0
    %894 = vmatprep.subr.mxu0 0.0
    %895 = vmatpush1.msra.mxu0 0.0
    %896 = vmatprep.subr.mxu0 0.0
    %897 = vmatpush1.msra.mxu0 0.0
    %898 = vmatprep.subr.mxu0 0.0
    %899 = vmatpush1.msra.mxu0 0.0
    %900 = vmatprep.subr.mxu0 0.0
    %901 = vmatpush1.msra.mxu0 0.0
    %902 = vmatprep.subr.mxu0 0.0
    %903 = vmatpush1.msra.mxu0 0.0
    %904 = vmatprep.subr.mxu0 0.0
    %905 = vmatpush1.msra.mxu0 0.0
    %906 = vmatprep.subr.mxu0 0.0
    %907 = vmatpush1.msra.mxu0 0.0
    %908 = vmatprep.mubr.f32.mxu0 0.0
    %909 = vmatmul.mubr.f32.gmra.mrb[0].mxu0 %v842
    %v910 = vpop.f32.mrb[0].mxu0
    %v911 = vadd.f32 %v838, %v910
    %v912 = vpop.f32.mrb[0].mxu0
    %913 = vdwg.mxu0
    %v914 = vadd.f32 %v911, %v208
    %v915 = vxor.u32 %v914, 2147483648
    %v916 = vmul.f32 %v915, 1.442695
    %v917 = vpow.pop %v916
    %v918 = vadd.f32 %v917, 1.0
    %v919 = vrcp.pop %v918
    %v920 = vmul.f32 1.0, %v919
    %v921 = vtanh.pop %v914
    %v922 = vmul.f32 %v920, %v757
    %924 = vrot.lane.b32.xlu0 %v921, 64
    %v925 = vpop.permute.xlu0 %924
    %v927 = vmul.f32 %v920, %v925
    %929 = vrot.lane.b32.xlu0 %v927, 32
    %v930 = vpop.permute.xlu0 %929
    %v932 = vadd.f32 %v922, %v930
    %v933 = vtanh.pop %v932
    %935 = vrot.lane.b32.xlu0 %v933, 64
    %v936 = vpop.permute.xlu0 %935
    %v938 = vmul.f32 %v920, %v936
    %s939 = scalar_lea.vmem %s0, 40
    %v940 = vld [vmem:[%s939] sm:$0xff]
    %942 = vrot.lane.b32.xlu0 %v938, 32
    %v943 = vpop.permute.xlu0 %942
    %v944 = vsel %vm56, %v943, 0
    %946 = vmatprep.subr.mxu0 0.0
    %947 = vmatpush1.msra.mxu0 %v48
    %948 = vmatprep.subr.mxu0 0.0
    %949 = vmatpush1.msra.mxu0 %v49
    %950 = vmatprep.subr.mxu0 0.0
    %951 = vmatpush1.msra.mxu0 %v50
    %952 = vmatprep.subr.mxu0 0.0
    %953 = vmatpush1.msra.mxu0 %v51
    %954 = vmatprep.subr.mxu0 0.0
    %955 = vmatpush1.msra.mxu0 0.0
    %956 = vmatprep.subr.mxu0 0.0
    %957 = vmatpush1.msra.mxu0 0.0
    %958 = vmatprep.subr.mxu0 0.0
    %959 = vmatpush1.msra.mxu0 0.0
    %960 = vmatprep.subr.mxu0 0.0
    %961 = vmatpush1.msra.mxu0 0.0
    %962 = vmatprep.subr.mxu0 0.0
    %963 = vmatpush1.msra.mxu0 0.0
    %964 = vmatprep.subr.mxu0 0.0
    %965 = vmatpush1.msra.mxu0 0.0
    %966 = vmatprep.subr.mxu0 0.0
    %967 = vmatpush1.msra.mxu0 0.0
    %968 = vmatprep.subr.mxu0 0.0
    %969 = vmatpush1.msra.mxu0 0.0
    %970 = vmatprep.subr.mxu0 0.0
    %971 = vmatpush1.msra.mxu0 0.0
    %972 = vmatprep.subr.mxu0 0.0
    %973 = vmatpush1.msra.mxu0 0.0
    %974 = vmatprep.subr.mxu0 0.0
    %975 = vmatpush1.msra.mxu0 0.0
    %976 = vmatprep.subr.mxu0 0.0
    %977 = vmatpush1.msra.mxu0 0.0
    %978 = vmatprep.subr.mxu0 0.0
    %979 = vmatpush1.msra.mxu0 0.0
    %980 = vmatprep.subr.mxu0 0.0
    %981 = vmatpush1.msra.mxu0 0.0
    %982 = vmatprep.subr.mxu0 0.0
    %983 = vmatpush1.msra.mxu0 0.0
    %984 = vmatprep.subr.mxu0 0.0
    %985 = vmatpush1.msra.mxu0 0.0
    %986 = vmatprep.subr.mxu0 0.0
    %987 = vmatpush1.msra.mxu0 0.0
    %988 = vmatprep.subr.mxu0 0.0
    %989 = vmatpush1.msra.mxu0 0.0
    %990 = vmatprep.subr.mxu0 0.0
    %991 = vmatpush1.msra.mxu0 0.0
    %992 = vmatprep.subr.mxu0 0.0
    %993 = vmatpush1.msra.mxu0 0.0
    %994 = vmatprep.subr.mxu0 0.0
    %995 = vmatpush1.msra.mxu0 0.0
    %996 = vmatprep.subr.mxu0 0.0
    %997 = vmatpush1.msra.mxu0 0.0
    %998 = vmatprep.subr.mxu0 0.0
    %999 = vmatpush1.msra.mxu0 0.0
    %1000 = vmatprep.subr.mxu0 0.0
    %1001 = vmatpush1.msra.mxu0 0.0
    %1002 = vmatprep.subr.mxu0 0.0
    %1003 = vmatpush1.msra.mxu0 0.0
    %1004 = vmatprep.subr.mxu0 0.0
    %1005 = vmatpush1.msra.mxu0 0.0
    %1006 = vmatprep.subr.mxu0 0.0
    %1007 = vmatpush1.msra.mxu0 0.0
    %1008 = vmatprep.subr.mxu0 0.0
    %1009 = vmatpush1.msra.mxu0 0.0
    %1010 = vmatprep.mubr.f32.mxu0 0.0
    %1011 = vmatmul.mubr.f32.gmra.mrb[0].mxu0 %v944
    %v1012 = vpop.f32.mrb[0].mxu0
    %v1013 = vadd.f32 0.0, %v1012
    %v1014 = vpop.f32.mrb[0].mxu0
    %1015 = vdwg.mxu0
    %v1017 = vsel %vm130, %v940, 0
    %1019 = vmatprep.subr.mxu0 0.0
    %1020 = vmatpush1.msra.mxu0 %v46
    %1021 = vmatprep.subr.mxu0 0.0
    %1022 = vmatpush1.msra.mxu0 %v47
    %1023 = vmatprep.subr.mxu0 0.0
    %1024 = vmatpush1.msra.mxu0 0.0
    %1025 = vmatprep.subr.mxu0 0.0
    %1026 = vmatpush1.msra.mxu0 0.0
    %1027 = vmatprep.subr.mxu0 0.0
    %1028 = vmatpush1.msra.mxu0 0.0
    %1029 = vmatprep.subr.mxu0 0.0
    %1030 = vmatpush1.msra.mxu0 0.0
    %1031 = vmatprep.subr.mxu0 0.0
    %1032 = vmatpush1.msra.mxu0 0.0
    %1033 = vmatprep.subr.mxu0 0.0
    %1034 = vmatpush1.msra.mxu0 0.0
    %1035 = vmatprep.subr.mxu0 0.0
    %1036 = vmatpush1.msra.mxu0 0.0
    %1037 = vmatprep.subr.mxu0 0.0
    %1038 = vmatpush1.msra.mxu0 0.0
    %1039 = vmatprep.subr.mxu0 0.0
    %1040 = vmatpush1.msra.mxu0 0.0
    %1041 = vmatprep.subr.mxu0 0.0
    %1042 = vmatpush1.msra.mxu0 0.0
    %1043 = vmatprep.subr.mxu0 0.0
    %1044 = vmatpush1.msra.mxu0 0.0
    %1045 = vmatprep.subr.mxu0 0.0
    %1046 = vmatpush1.msra.mxu0 0.0
    %1047 = vmatprep.subr.mxu0 0.0
    %1048 = vmatpush1.msra.mxu0 0.0
    %1049 = vmatprep.subr.mxu0 0.0
    %1050 = vmatpush1.msra.mxu0 0.0
    %1051 = vmatprep.subr.mxu0 0.0
    %1052 = vmatpush1.msra.mxu0 0.0
    %1053 = vmatprep.subr.mxu0 0.0
    %1054 = vmatpush1.msra.mxu0 0.0
    %1055 = vmatprep.subr.mxu0 0.0
    %1056 = vmatpush1.msra.mxu0 0.0
    %1057 = vmatprep.subr.mxu0 0.0
    %1058 = vmatpush1.msra.mxu0 0.0
    %1059 = vmatprep.subr.mxu0 0.0
    %1060 = vmatpush1.msra.mxu0 0.0
    %1061 = vmatprep.subr.mxu0 0.0
    %1062 = vmatpush1.msra.mxu0 0.0
    %1063 = vmatprep.subr.mxu0 0.0
    %1064 = vmatpush1.msra.mxu0 0.0
    %1065 = vmatprep.subr.mxu0 0.0
    %1066 = vmatpush1.msra.mxu0 0.0
    %1067 = vmatprep.subr.mxu0 0.0
    %1068 = vmatpush1.msra.mxu0 0.0
    %1069 = vmatprep.subr.mxu0 0.0
    %1070 = vmatpush1.msra.mxu0 0.0
    %1071 = vmatprep.subr.mxu0 0.0
    %1072 = vmatpush1.msra.mxu0 0.0
    %1073 = vmatprep.subr.mxu0 0.0
    %1074 = vmatpush1.msra.mxu0 0.0
    %1075 = vmatprep.subr.mxu0 0.0
    %1076 = vmatpush1.msra.mxu0 0.0
    %1077 = vmatprep.subr.mxu0 0.0
    %1078 = vmatpush1.msra.mxu0 0.0
    %1079 = vmatprep.subr.mxu0 0.0
    %1080 = vmatpush1.msra.mxu0 0.0
    %1081 = vmatprep.subr.mxu0 0.0
    %1082 = vmatpush1.msra.mxu0 0.0
    %1083 = vmatprep.mubr.f32.mxu0 0.0
    %1084 = vmatmul.mubr.f32.gmra.mrb[0].mxu0 %v1017
    %v1085 = vpop.f32.mrb[0].mxu0
    %v1086 = vadd.f32 %v1013, %v1085
    %v1087 = vpop.f32.mrb[0].mxu0
    %1088 = vdwg.mxu0
    %v1089 = vadd.f32 %v1086, %v208
    %v1090 = vxor.u32 %v1089, 2147483648
    %v1091 = vmul.f32 %v1090, 1.442695
    %v1092 = vpow.pop %v1091
    %v1093 = vadd.f32 %v1092, 1.0
    %v1094 = vrcp.pop %v1093
    %v1095 = vmul.f32 1.0, %v1094
    %v1096 = vtanh.pop %v1089
    %v1097 = vmul.f32 %v1095, %v932
    %1099 = vrot.lane.b32.xlu0 %v1096, 64
    %v1100 = vpop.permute.xlu0 %1099
    %v1102 = vmul.f32 %v1095, %v1100
    %1104 = vrot.lane.b32.xlu0 %v1102, 32
    %v1105 = vpop.permute.xlu0 %1104
    %v1107 = vadd.f32 %v1097, %v1105
    %v1108 = vtanh.pop %v1107
    %1110 = vrot.lane.b32.xlu0 %v1108, 64
    %v1111 = vpop.permute.xlu0 %1110
    %v1113 = vmul.f32 %v1095, %v1111
    %s1114 = scalar_lea.vmem %s0, 48
    %v1115 = vld [vmem:[%s1114] sm:$0xff]
    %1117 = vrot.lane.b32.xlu0 %v1113, 32
    %v1118 = vpop.permute.xlu0 %1117
    %v1119 = vsel %vm56, %v1118, 0
    %1121 = vmatprep.subr.mxu0 0.0
    %1122 = vmatpush1.msra.mxu0 %v48
    %1123 = vmatprep.subr.mxu0 0.0
    %1124 = vmatpush1.msra.mxu0 %v49
    %1125 = vmatprep.subr.mxu0 0.0
    %1126 = vmatpush1.msra.mxu0 %v50
    %1127 = vmatprep.subr.mxu0 0.0
    %1128 = vmatpush1.msra.mxu0 %v51
    %1129 = vmatprep.subr.mxu0 0.0
    %1130 = vmatpush1.msra.mxu0 0.0
    %1131 = vmatprep.subr.mxu0 0.0
    %1132 = vmatpush1.msra.mxu0 0.0
    %1133 = vmatprep.subr.mxu0 0.0
    %1134 = vmatpush1.msra.mxu0 0.0
    %1135 = vmatprep.subr.mxu0 0.0
    %1136 = vmatpush1.msra.mxu0 0.0
    %1137 = vmatprep.subr.mxu0 0.0
    %1138 = vmatpush1.msra.mxu0 0.0
    %1139 = vmatprep.subr.mxu0 0.0
    %1140 = vmatpush1.msra.mxu0 0.0
    %1141 = vmatprep.subr.mxu0 0.0
    %1142 = vmatpush1.msra.mxu0 0.0
    %1143 = vmatprep.subr.mxu0 0.0
    %1144 = vmatpush1.msra.mxu0 0.0
    %1145 = vmatprep.subr.mxu0 0.0
    %1146 = vmatpush1.msra.mxu0 0.0
    %1147 = vmatprep.subr.mxu0 0.0
    %1148 = vmatpush1.msra.mxu0 0.0
    %1149 = vmatprep.subr.mxu0 0.0
    %1150 = vmatpush1.msra.mxu0 0.0
    %1151 = vmatprep.subr.mxu0 0.0
    %1152 = vmatpush1.msra.mxu0 0.0
    %1153 = vmatprep.subr.mxu0 0.0
    %1154 = vmatpush1.msra.mxu0 0.0
    %1155 = vmatprep.subr.mxu0 0.0
    %1156 = vmatpush1.msra.mxu0 0.0
    %1157 = vmatprep.subr.mxu0 0.0
    %1158 = vmatpush1.msra.mxu0 0.0
    %1159 = vmatprep.subr.mxu0 0.0
    %1160 = vmatpush1.msra.mxu0 0.0
    %1161 = vmatprep.subr.mxu0 0.0
    %1162 = vmatpush1.msra.mxu0 0.0
    %1163 = vmatprep.subr.mxu0 0.0
    %1164 = vmatpush1.msra.mxu0 0.0
    %1165 = vmatprep.subr.mxu0 0.0
    %1166 = vmatpush1.msra.mxu0 0.0
    %1167 = vmatprep.subr.mxu0 0.0
    %1168 = vmatpush1.msra.mxu0 0.0
    %1169 = vmatprep.subr.mxu0 0.0
    %1170 = vmatpush1.msra.mxu0 0.0
    %1171 = vmatprep.subr.mxu0 0.0
    %1172 = vmatpush1.msra.mxu0 0.0
    %1173 = vmatprep.subr.mxu0 0.0
    %1174 = vmatpush1.msra.mxu0 0.0
    %1175 = vmatprep.subr.mxu0 0.0
    %1176 = vmatpush1.msra.mxu0 0.0
    %1177 = vmatprep.subr.mxu0 0.0
    %1178 = vmatpush1.msra.mxu0 0.0
    %1179 = vmatprep.subr.mxu0 0.0
    %1180 = vmatpush1.msra.mxu0 0.0
    %1181 = vmatprep.subr.mxu0 0.0
    %1182 = vmatpush1.msra.mxu0 0.0
    %1183 = vmatprep.subr.mxu0 0.0
    %1184 = vmatpush1.msra.mxu0 0.0
    %1185 = vmatprep.mubr.f32.mxu0 0.0
    %1186 = vmatmul.mubr.f32.gmra.mrb[0].mxu0 %v1119
    %v1187 = vpop.f32.mrb[0].mxu0
    %v1188 = vadd.f32 0.0, %v1187
    %v1189 = vpop.f32.mrb[0].mxu0
    %1190 = vdwg.mxu0
    %v1192 = vsel %vm130, %v1115, 0
    %1194 = vmatprep.subr.mxu0 0.0
    %1195 = vmatpush1.msra.mxu0 %v46
    %1196 = vmatprep.subr.mxu0 0.0
    %1197 = vmatpush1.msra.mxu0 %v47
    %1198 = vmatprep.subr.mxu0 0.0
    %1199 = vmatpush1.msra.mxu0 0.0
    %1200 = vmatprep.subr.mxu0 0.0
    %1201 = vmatpush1.msra.mxu0 0.0
    %1202 = vmatprep.subr.mxu0 0.0
    %1203 = vmatpush1.msra.mxu0 0.0
    %1204 = vmatprep.subr.mxu0 0.0
    %1205 = vmatpush1.msra.mxu0 0.0
    %1206 = vmatprep.subr.mxu0 0.0
    %1207 = vmatpush1.msra.mxu0 0.0
    %1208 = vmatprep.subr.mxu0 0.0
    %1209 = vmatpush1.msra.mxu0 0.0
    %1210 = vmatprep.subr.mxu0 0.0
    %1211 = vmatpush1.msra.mxu0 0.0
    %1212 = vmatprep.subr.mxu0 0.0
    %1213 = vmatpush1.msra.mxu0 0.0
    %1214 = vmatprep.subr.mxu0 0.0
    %1215 = vmatpush1.msra.mxu0 0.0
    %1216 = vmatprep.subr.mxu0 0.0
    %1217 = vmatpush1.msra.mxu0 0.0
    %1218 = vmatprep.subr.mxu0 0.0
    %1219 = vmatpush1.msra.mxu0 0.0
    %1220 = vmatprep.subr.mxu0 0.0
    %1221 = vmatpush1.msra.mxu0 0.0
    %1222 = vmatprep.subr.mxu0 0.0
    %1223 = vmatpush1.msra.mxu0 0.0
    %1224 = vmatprep.subr.mxu0 0.0
    %1225 = vmatpush1.msra.mxu0 0.0
    %1226 = vmatprep.subr.mxu0 0.0
    %1227 = vmatpush1.msra.mxu0 0.0
    %1228 = vmatprep.subr.mxu0 0.0
    %1229 = vmatpush1.msra.mxu0 0.0
    %1230 = vmatprep.subr.mxu0 0.0
    %1231 = vmatpush1.msra.mxu0 0.0
    %1232 = vmatprep.subr.mxu0 0.0
    %1233 = vmatpush1.msra.mxu0 0.0
    %1234 = vmatprep.subr.mxu0 0.0
    %1235 = vmatpush1.msra.mxu0 0.0
    %1236 = vmatprep.subr.mxu0 0.0
    %1237 = vmatpush1.msra.mxu0 0.0
    %1238 = vmatprep.subr.mxu0 0.0
    %1239 = vmatpush1.msra.mxu0 0.0
    %1240 = vmatprep.subr.mxu0 0.0
    %1241 = vmatpush1.msra.mxu0 0.0
    %1242 = vmatprep.subr.mxu0 0.0
    %1243 = vmatpush1.msra.mxu0 0.0
    %1244 = vmatprep.subr.mxu0 0.0
    %1245 = vmatpush1.msra.mxu0 0.0
    %1246 = vmatprep.subr.mxu0 0.0
    %1247 = vmatpush1.msra.mxu0 0.0
    %1248 = vmatprep.subr.mxu0 0.0
    %1249 = vmatpush1.msra.mxu0 0.0
    %1250 = vmatprep.subr.mxu0 0.0
    %1251 = vmatpush1.msra.mxu0 0.0
    %1252 = vmatprep.subr.mxu0 0.0
    %1253 = vmatpush1.msra.mxu0 0.0
    %1254 = vmatprep.subr.mxu0 0.0
    %1255 = vmatpush1.msra.mxu0 0.0
    %1256 = vmatprep.subr.mxu0 0.0
    %1257 = vmatpush1.msra.mxu0 0.0
    %1258 = vmatprep.mubr.f32.mxu0 0.0
    %1259 = vmatmul.mubr.f32.gmra.mrb[0].mxu0 %v1192
    %v1260 = vpop.f32.mrb[0].mxu0
    %v1261 = vadd.f32 %v1188, %v1260
    %v1262 = vpop.f32.mrb[0].mxu0
    %1263 = vdwg.mxu0
    %v1264 = vadd.f32 %v1261, %v208
    %v1265 = vxor.u32 %v1264, 2147483648
    %v1266 = vmul.f32 %v1265, 1.442695
    %v1267 = vpow.pop %v1266
    %v1268 = vadd.f32 %v1267, 1.0
    %v1269 = vrcp.pop %v1268
    %v1270 = vmul.f32 1.0, %v1269
    %v1271 = vtanh.pop %v1264
    %v1272 = vmul.f32 %v1270, %v1107
    %1274 = vrot.lane.b32.xlu0 %v1271, 64
    %v1275 = vpop.permute.xlu0 %1274
    %v1277 = vmul.f32 %v1270, %v1275
    %1279 = vrot.lane.b32.xlu0 %v1277, 32
    %v1280 = vpop.permute.xlu0 %1279
    %v1282 = vadd.f32 %v1272, %v1280
    %v1283 = vtanh.pop %v1282
    %1285 = vrot.lane.b32.xlu0 %v1283, 64
    %v1286 = vpop.permute.xlu0 %1285
    %v1288 = vmul.f32 %v1270, %v1286
    %s1289 = scalar_lea.vmem %s0, 56
    %v1290 = vld [vmem:[%s1289] sm:$0xff]
    %1292 = vrot.lane.b32.xlu0 %v1288, 32
    %v1293 = vpop.permute.xlu0 %1292
    %v1294 = vsel %vm56, %v1293, 0
    %1296 = vmatprep.subr.mxu0 0.0
    %1297 = vmatpush1.msra.mxu0 %v48
    %1298 = vmatprep.subr.mxu0 0.0
    %1299 = vmatpush1.msra.mxu0 %v49
    %1300 = vmatprep.subr.mxu0 0.0
    %1301 = vmatpush1.msra.mxu0 %v50
    %1302 = vmatprep.subr.mxu0 0.0
    %1303 = vmatpush1.msra.mxu0 %v51
    %1304 = vmatprep.subr.mxu0 0.0
    %1305 = vmatpush1.msra.mxu0 0.0
    %1306 = vmatprep.subr.mxu0 0.0
    %1307 = vmatpush1.msra.mxu0 0.0
    %1308 = vmatprep.subr.mxu0 0.0
    %1309 = vmatpush1.msra.mxu0 0.0
    %1310 = vmatprep.subr.mxu0 0.0
    %1311 = vmatpush1.msra.mxu0 0.0
    %1312 = vmatprep.subr.mxu0 0.0
    %1313 = vmatpush1.msra.mxu0 0.0
    %1314 = vmatprep.subr.mxu0 0.0
    %1315 = vmatpush1.msra.mxu0 0.0
    %1316 = vmatprep.subr.mxu0 0.0
    %1317 = vmatpush1.msra.mxu0 0.0
    %1318 = vmatprep.subr.mxu0 0.0
    %1319 = vmatpush1.msra.mxu0 0.0
    %1320 = vmatprep.subr.mxu0 0.0
    %1321 = vmatpush1.msra.mxu0 0.0
    %1322 = vmatprep.subr.mxu0 0.0
    %1323 = vmatpush1.msra.mxu0 0.0
    %1324 = vmatprep.subr.mxu0 0.0
    %1325 = vmatpush1.msra.mxu0 0.0
    %1326 = vmatprep.subr.mxu0 0.0
    %1327 = vmatpush1.msra.mxu0 0.0
    %1328 = vmatprep.subr.mxu0 0.0
    %1329 = vmatpush1.msra.mxu0 0.0
    %1330 = vmatprep.subr.mxu0 0.0
    %1331 = vmatpush1.msra.mxu0 0.0
    %1332 = vmatprep.subr.mxu0 0.0
    %1333 = vmatpush1.msra.mxu0 0.0
    %1334 = vmatprep.subr.mxu0 0.0
    %1335 = vmatpush1.msra.mxu0 0.0
    %1336 = vmatprep.subr.mxu0 0.0
    %1337 = vmatpush1.msra.mxu0 0.0
    %1338 = vmatprep.subr.mxu0 0.0
    %1339 = vmatpush1.msra.mxu0 0.0
    %1340 = vmatprep.subr.mxu0 0.0
    %1341 = vmatpush1.msra.mxu0 0.0
    %1342 = vmatprep.subr.mxu0 0.0
    %1343 = vmatpush1.msra.mxu0 0.0
    %1344 = vmatprep.subr.mxu0 0.0
    %1345 = vmatpush1.msra.mxu0 0.0
    %1346 = vmatprep.subr.mxu0 0.0
    %1347 = vmatpush1.msra.mxu0 0.0
    %1348 = vmatprep.subr.mxu0 0.0
    %1349 = vmatpush1.msra.mxu0 0.0
    %1350 = vmatprep.subr.mxu0 0.0
    %1351 = vmatpush1.msra.mxu0 0.0
    %1352 = vmatprep.subr.mxu0 0.0
    %1353 = vmatpush1.msra.mxu0 0.0
    %1354 = vmatprep.subr.mxu0 0.0
    %1355 = vmatpush1.msra.mxu0 0.0
    %1356 = vmatprep.subr.mxu0 0.0
    %1357 = vmatpush1.msra.mxu0 0.0
    %1358 = vmatprep.subr.mxu0 0.0
    %1359 = vmatpush1.msra.mxu0 0.0
    %1360 = vmatprep.mubr.f32.mxu0 0.0
    %1361 = vmatmul.mubr.f32.gmra.mrb[0].mxu0 %v1294
    %v1362 = vpop.f32.mrb[0].mxu0
    %v1363 = vadd.f32 0.0, %v1362
    %v1364 = vpop.f32.mrb[0].mxu0
    %1365 = vdwg.mxu0
    %v1367 = vsel %vm130, %v1290, 0
    %1369 = vmatprep.subr.mxu0 0.0
    %1370 = vmatpush1.msra.mxu0 %v46
    %1371 = vmatprep.subr.mxu0 0.0
    %1372 = vmatpush1.msra.mxu0 %v47
    %1373 = vmatprep.subr.mxu0 0.0
    %1374 = vmatpush1.msra.mxu0 0.0
    %1375 = vmatprep.subr.mxu0 0.0
    %1376 = vmatpush1.msra.mxu0 0.0
    %1377 = vmatprep.subr.mxu0 0.0
    %1378 = vmatpush1.msra.mxu0 0.0
    %1379 = vmatprep.subr.mxu0 0.0
    %1380 = vmatpush1.msra.mxu0 0.0
    %1381 = vmatprep.subr.mxu0 0.0
    %1382 = vmatpush1.msra.mxu0 0.0
    %1383 = vmatprep.subr.mxu0 0.0
    %1384 = vmatpush1.msra.mxu0 0.0
    %1385 = vmatprep.subr.mxu0 0.0
    %1386 = vmatpush1.msra.mxu0 0.0
    %1387 = vmatprep.subr.mxu0 0.0
    %1388 = vmatpush1.msra.mxu0 0.0
    %1389 = vmatprep.subr.mxu0 0.0
    %1390 = vmatpush1.msra.mxu0 0.0
    %1391 = vmatprep.subr.mxu0 0.0
    %1392 = vmatpush1.msra.mxu0 0.0
    %1393 = vmatprep.subr.mxu0 0.0
    %1394 = vmatpush1.msra.mxu0 0.0
    %1395 = vmatprep.subr.mxu0 0.0
    %1396 = vmatpush1.msra.mxu0 0.0
    %1397 = vmatprep.subr.mxu0 0.0
    %1398 = vmatpush1.msra.mxu0 0.0
    %1399 = vmatprep.subr.mxu0 0.0
    %1400 = vmatpush1.msra.mxu0 0.0
    %1401 = vmatprep.subr.mxu0 0.0
    %1402 = vmatpush1.msra.mxu0 0.0
    %1403 = vmatprep.subr.mxu0 0.0
    %1404 = vmatpush1.msra.mxu0 0.0
    %1405 = vmatprep.subr.mxu0 0.0
    %1406 = vmatpush1.msra.mxu0 0.0
    %1407 = vmatprep.subr.mxu0 0.0
    %1408 = vmatpush1.msra.mxu0 0.0
    %1409 = vmatprep.subr.mxu0 0.0
    %1410 = vmatpush1.msra.mxu0 0.0
    %1411 = vmatprep.subr.mxu0 0.0
    %1412 = vmatpush1.msra.mxu0 0.0
    %1413 = vmatprep.subr.mxu0 0.0
    %1414 = vmatpush1.msra.mxu0 0.0
    %1415 = vmatprep.subr.mxu0 0.0
    %1416 = vmatpush1.msra.mxu0 0.0
    %1417 = vmatprep.subr.mxu0 0.0
    %1418 = vmatpush1.msra.mxu0 0.0
    %1419 = vmatprep.subr.mxu0 0.0
    %1420 = vmatpush1.msra.mxu0 0.0
    %1421 = vmatprep.subr.mxu0 0.0
    %1422 = vmatpush1.msra.mxu0 0.0
    %1423 = vmatprep.subr.mxu0 0.0
    %1424 = vmatpush1.msra.mxu0 0.0
    %1425 = vmatprep.subr.mxu0 0.0
    %1426 = vmatpush1.msra.mxu0 0.0
    %1427 = vmatprep.subr.mxu0 0.0
    %1428 = vmatpush1.msra.mxu0 0.0
    %1429 = vmatprep.subr.mxu0 0.0
    %1430 = vmatpush1.msra.mxu0 0.0
    %1431 = vmatprep.subr.mxu0 0.0
    %1432 = vmatpush1.msra.mxu0 0.0
    %1433 = vmatprep.mubr.f32.mxu0 0.0
    %1434 = vmatmul.mubr.f32.gmra.mrb[0].mxu0 %v1367
    %v1435 = vpop.f32.mrb[0].mxu0
    %v1436 = vadd.f32 %v1363, %v1435
    %v1437 = vpop.f32.mrb[0].mxu0
    %1438 = vdwg.mxu0
    %v1439 = vadd.f32 %v1436, %v208
    %v1440 = vxor.u32 %v1439, 2147483648
    %v1441 = vmul.f32 %v1440, 1.442695
    %v1442 = vpow.pop %v1441
    %v1443 = vadd.f32 %v1442, 1.0
    %v1444 = vrcp.pop %v1443
    %v1445 = vmul.f32 1.0, %v1444
    %v1446 = vtanh.pop %v1439
    %v1447 = vmul.f32 %v1445, %v1282
    %1449 = vrot.lane.b32.xlu0 %v1446, 64
    %v1450 = vpop.permute.xlu0 %1449
    %v1452 = vmul.f32 %v1445, %v1450
    %1454 = vrot.lane.b32.xlu0 %v1452, 32
    %v1455 = vpop.permute.xlu0 %1454
    %v1457 = vadd.f32 %v1447, %v1455
    %v1458 = vtanh.pop %v1457
    %1460 = vrot.lane.b32.xlu0 %v1458, 64
    %v1461 = vpop.permute.xlu0 %1460
    %v1463 = vmul.f32 %v1445, %v1461
    %v1464 = vld [vmem:[%s8] sm:$0xff]
    %v1465 = vld [vmem:[%s8 + $0x8] sm:$0xff]
    %v1466 = vld [vmem:[%s8 + $0x10] sm:$0xff]
    %v1467 = vld [vmem:[%s8 + $0x18] sm:$0xff]
    %1469 = vrot.lane.b32.xlu0 %v1463, 32
    %v1470 = vpop.permute.xlu0 %1469
    %v1471 = vsel %vm56, %v1470, 0
    %1473 = vmatprep.subr.mxu0 0.0
    %1474 = vmatpush1.msra.mxu0 %v1464
    %1475 = vmatprep.subr.mxu0 0.0
    %1476 = vmatpush1.msra.mxu0 %v1465
    %1477 = vmatprep.subr.mxu0 0.0
    %1478 = vmatpush1.msra.mxu0 %v1466
    %1479 = vmatprep.subr.mxu0 0.0
    %1480 = vmatpush1.msra.mxu0 %v1467
    %1481 = vmatprep.subr.mxu0 0.0
    %1482 = vmatpush1.msra.mxu0 0.0
    %1483 = vmatprep.subr.mxu0 0.0
    %1484 = vmatpush1.msra.mxu0 0.0
    %1485 = vmatprep.subr.mxu0 0.0
    %1486 = vmatpush1.msra.mxu0 0.0
    %1487 = vmatprep.subr.mxu0 0.0
    %1488 = vmatpush1.msra.mxu0 0.0
    %1489 = vmatprep.subr.mxu0 0.0
    %1490 = vmatpush1.msra.mxu0 0.0
    %1491 = vmatprep.subr.mxu0 0.0
    %1492 = vmatpush1.msra.mxu0 0.0
    %1493 = vmatprep.subr.mxu0 0.0
    %1494 = vmatpush1.msra.mxu0 0.0
    %1495 = vmatprep.subr.mxu0 0.0
    %1496 = vmatpush1.msra.mxu0 0.0
    %1497 = vmatprep.subr.mxu0 0.0
    %1498 = vmatpush1.msra.mxu0 0.0
    %1499 = vmatprep.subr.mxu0 0.0
    %1500 = vmatpush1.msra.mxu0 0.0
    %1501 = vmatprep.subr.mxu0 0.0
    %1502 = vmatpush1.msra.mxu0 0.0
    %1503 = vmatprep.subr.mxu0 0.0
    %1504 = vmatpush1.msra.mxu0 0.0
    %1505 = vmatprep.subr.mxu0 0.0
    %1506 = vmatpush1.msra.mxu0 0.0
    %1507 = vmatprep.subr.mxu0 0.0
    %1508 = vmatpush1.msra.mxu0 0.0
    %1509 = vmatprep.subr.mxu0 0.0
    %1510 = vmatpush1.msra.mxu0 0.0
    %1511 = vmatprep.subr.mxu0 0.0
    %1512 = vmatpush1.msra.mxu0 0.0
    %1513 = vmatprep.subr.mxu0 0.0
    %1514 = vmatpush1.msra.mxu0 0.0
    %1515 = vmatprep.subr.mxu0 0.0
    %1516 = vmatpush1.msra.mxu0 0.0
    %1517 = vmatprep.subr.mxu0 0.0
    %1518 = vmatpush1.msra.mxu0 0.0
    %1519 = vmatprep.subr.mxu0 0.0
    %1520 = vmatpush1.msra.mxu0 0.0
    %1521 = vmatprep.subr.mxu0 0.0
    %1522 = vmatpush1.msra.mxu0 0.0
    %1523 = vmatprep.subr.mxu0 0.0
    %1524 = vmatpush1.msra.mxu0 0.0
    %1525 = vmatprep.subr.mxu0 0.0
    %1526 = vmatpush1.msra.mxu0 0.0
    %1527 = vmatprep.subr.mxu0 0.0
    %1528 = vmatpush1.msra.mxu0 0.0
    %1529 = vmatprep.subr.mxu0 0.0
    %1530 = vmatpush1.msra.mxu0 0.0
    %1531 = vmatprep.subr.mxu0 0.0
    %1532 = vmatpush1.msra.mxu0 0.0
    %1533 = vmatprep.subr.mxu0 0.0
    %1534 = vmatpush1.msra.mxu0 0.0
    %1535 = vmatprep.subr.mxu0 0.0
    %1536 = vmatpush1.msra.mxu0 0.0
    %1537 = vmatprep.mubr.f32.mxu0 0.0
    %1538 = vmatmul.mubr.f32.gmra.mrb[0].mxu0 %v1471
    %v1539 = vpop.f32.mrb[0].mxu0
    %v1540 = vadd.f32 0.0, %v1539
    %v1541 = vpop.f32.mrb[0].mxu0
    %1542 = vdwg.mxu0
    %v1543 = vld [vmem:[%s1] sm:$0xff]
    %v1544 = vld [vmem:[%s1 + $0x8] sm:$0xff]
    %v1545 = vld [vmem:[%s1 + $0x10] sm:$0xff]
    %v1546 = vld [vmem:[%s1 + $0x18] sm:$0xff]
    %v1547 = vld [vmem:[%s1 + $0x20] sm:$0xff]
    %v1548 = vld [vmem:[%s1 + $0x28] sm:$0xff]
    %v1549 = vld [vmem:[%s1 + $0x30] sm:$0xff]
    %v1550 = vld [vmem:[%s1 + $0x38] sm:$0xff]
    %v1551 = vld [vmem:[%s10] sm:$0xf]
    %v1552 = vld [vmem:[%s10 + $0x4] sm:$0xf]
    %v1553 = vld [vmem:[%s10 + $0x8] sm:$0xf]
    %v1554 = vld [vmem:[%s10 + $0xc] sm:$0xf]
    %v1555 = vld [vmem:[%s10 + $0x10] sm:$0xf]
    %v1556 = vld [vmem:[%s10 + $0x14] sm:$0xf]
    %v1557 = vld [vmem:[%s10 + $0x18] sm:$0xf]
    %v1558 = vld [vmem:[%s10 + $0x1c] sm:$0xf]
    %v1559 = vld [vmem:[%s10 + $0x20] sm:$0xf]
    %v1560 = vld [vmem:[%s10 + $0x24] sm:$0xf]
    %v1561 = vld [vmem:[%s10 + $0x28] sm:$0xf]
    %v1562 = vld [vmem:[%s10 + $0x2c] sm:$0xf]
    %v1563 = vld [vmem:[%s10 + $0x30] sm:$0xf]
    %v1564 = vld [vmem:[%s10 + $0x34] sm:$0xf]
    %v1565 = vld [vmem:[%s10 + $0x38] sm:$0xf]
    %v1566 = vld [vmem:[%s10 + $0x3c] sm:$0xf]
    %v1567 = vld [vmem:[%s10 + $0x40] sm:$0xf]
    %v1568 = vld [vmem:[%s10 + $0x44] sm:$0xf]
    %v1569 = vld [vmem:[%s10 + $0x48] sm:$0xf]
    %v1570 = vld [vmem:[%s10 + $0x4c] sm:$0xf]
    %v1571 = vld [vmem:[%s10 + $0x50] sm:$0xf]
    %v1572 = vld [vmem:[%s10 + $0x54] sm:$0xf]
    %v1573 = vld [vmem:[%s10 + $0x58] sm:$0xf]
    %v1574 = vld [vmem:[%s10 + $0x5c] sm:$0xf]
    %v1575 = vld [vmem:[%s10 + $0x60] sm:$0xf]
    %v1576 = vld [vmem:[%s10 + $0x64] sm:$0xf]
    %v1577 = vld [vmem:[%s10 + $0x68] sm:$0xf]
    %v1578 = vld [vmem:[%s10 + $0x6c] sm:$0xf]
    %v1579 = vld [vmem:[%s10 + $0x70] sm:$0xf]
    %v1580 = vld [vmem:[%s10 + $0x74] sm:$0xf]
    %v1581 = vld [vmem:[%s10 + $0x78] sm:$0xf]
    %v1582 = vld [vmem:[%s10 + $0x7c] sm:$0xf]
    %v1583 = vld [vmem:[%s10 + $0x80] sm:$0xf]
    %v1584 = vld [vmem:[%s10 + $0x84] sm:$0xf]
    %v1585 = vld [vmem:[%s10 + $0x88] sm:$0xf]
    %v1586 = vld [vmem:[%s10 + $0x8c] sm:$0xf]
    %v1587 = vld [vmem:[%s10 + $0x90] sm:$0xf]
    %v1588 = vld [vmem:[%s10 + $0x94] sm:$0xf]
    %v1589 = vld [vmem:[%s10 + $0x98] sm:$0xf]
    %v1590 = vld [vmem:[%s10 + $0x9c] sm:$0xf]
    %v1591 = vld [vmem:[%s10 + $0xa0] sm:$0xf]
    %v1592 = vld [vmem:[%s10 + $0xa4] sm:$0xf]
    %v1593 = vld [vmem:[%s10 + $0xa8] sm:$0xf]
    %v1594 = vld [vmem:[%s10 + $0xac] sm:$0xf]
    %v1595 = vld [vmem:[%s10 + $0xb0] sm:$0xf]
    %v1596 = vld [vmem:[%s10 + $0xb4] sm:$0xf]
    %v1597 = vld [vmem:[%s10 + $0xb8] sm:$0xf]
    %v1598 = vld [vmem:[%s10 + $0xbc] sm:$0xf]
    %v1599 = vld [vmem:[%s10 + $0xc0] sm:$0xf]
    %v1600 = vld [vmem:[%s10 + $0xc4] sm:$0xf]
    %v1601 = vld [vmem:[%s10 + $0xc8] sm:$0xf]
    %v1602 = vld [vmem:[%s10 + $0xcc] sm:$0xf]
    %v1603 = vld [vmem:[%s10 + $0xd0] sm:$0xf]
    %v1604 = vld [vmem:[%s10 + $0xd4] sm:$0xf]
    %v1605 = vld [vmem:[%s10 + $0xd8] sm:$0xf]
    %v1606 = vld [vmem:[%s10 + $0xdc] sm:$0xf]
    %v1607 = vld [vmem:[%s10 + $0xe0] sm:$0xf]
    %v1608 = vld [vmem:[%s10 + $0xe4] sm:$0xf]
    %v1609 = vld [vmem:[%s10 + $0xe8] sm:$0xf]
    %v1610 = vld [vmem:[%s10 + $0xec] sm:$0xf]
    %v1611 = vld [vmem:[%s10 + $0xf0] sm:$0xf]
    %v1612 = vld [vmem:[%s10 + $0xf4] sm:$0xf]
    %v1613 = vld [vmem:[%s10 + $0xf8] sm:$0xf]
    %v1614 = vld [vmem:[%s10 + $0xfc] sm:$0xf]
    %v1615 = vld [vmem:[%s10 + $0x100] sm:$0xf]
    %v1616 = vld [vmem:[%s10 + $0x104] sm:$0xf]
    %v1617 = vld [vmem:[%s10 + $0x108] sm:$0xf]
    %v1618 = vld [vmem:[%s10 + $0x10c] sm:$0xf]
    %v1619 = vld [vmem:[%s10 + $0x110] sm:$0xf]
    %v1620 = vld [vmem:[%s10 + $0x114] sm:$0xf]
    %v1621 = vld [vmem:[%s10 + $0x118] sm:$0xf]
    %v1622 = vld [vmem:[%s10 + $0x11c] sm:$0xf]
    %v1623 = vld [vmem:[%s10 + $0x120] sm:$0xf]
    %v1624 = vld [vmem:[%s10 + $0x124] sm:$0xf]
    %v1625 = vld [vmem:[%s10 + $0x128] sm:$0xf]
    %v1626 = vld [vmem:[%s10 + $0x12c] sm:$0xf]
    %v1627 = vld [vmem:[%s10 + $0x130] sm:$0xf]
    %v1628 = vld [vmem:[%s10 + $0x134] sm:$0xf]
    %v1629 = vld [vmem:[%s10 + $0x138] sm:$0xf]
    %v1630 = vld [vmem:[%s10 + $0x13c] sm:$0xf]
    %v1631 = vld [vmem:[%s10 + $0x140] sm:$0xf]
    %v1632 = vld [vmem:[%s10 + $0x144] sm:$0xf]
    %v1633 = vld [vmem:[%s10 + $0x148] sm:$0xf]
    %v1634 = vld [vmem:[%s10 + $0x14c] sm:$0xf]
    %v1635 = vld [vmem:[%s10 + $0x150] sm:$0xf]
    %v1636 = vld [vmem:[%s10 + $0x154] sm:$0xf]
    %v1637 = vld [vmem:[%s10 + $0x158] sm:$0xf]
    %v1638 = vld [vmem:[%s10 + $0x15c] sm:$0xf]
    %v1639 = vld [vmem:[%s10 + $0x160] sm:$0xf]
    %v1640 = vld [vmem:[%s10 + $0x164] sm:$0xf]
    %v1641 = vld [vmem:[%s10 + $0x168] sm:$0xf]
    %v1642 = vld [vmem:[%s10 + $0x16c] sm:$0xf]
    %v1643 = vld [vmem:[%s10 + $0x170] sm:$0xf]
    %v1644 = vld [vmem:[%s10 + $0x174] sm:$0xf]
    %v1645 = vld [vmem:[%s10 + $0x178] sm:$0xf]
    %v1646 = vld [vmem:[%s10 + $0x17c] sm:$0xf]
    %v1647 = vld [vmem:[%s10 + $0x180] sm:$0xf]
    %v1648 = vld [vmem:[%s10 + $0x184] sm:$0xf]
    %v1649 = vld [vmem:[%s10 + $0x188] sm:$0xf]
    %v1650 = vld [vmem:[%s10 + $0x18c] sm:$0xf]
    %v1651 = vld [vmem:[%s10 + $0x190] sm:$0xf]
    %v1652 = vld [vmem:[%s10 + $0x194] sm:$0xf]
    %v1653 = vld [vmem:[%s10 + $0x198] sm:$0xf]
    %v1654 = vld [vmem:[%s10 + $0x19c] sm:$0xf]
    %v1655 = vld [vmem:[%s10 + $0x1a0] sm:$0xf]
    %v1656 = vld [vmem:[%s10 + $0x1a4] sm:$0xf]
    %v1657 = vld [vmem:[%s10 + $0x1a8] sm:$0xf]
    %v1658 = vld [vmem:[%s10 + $0x1ac] sm:$0xf]
    %v1659 = vld [vmem:[%s10 + $0x1b0] sm:$0xf]
    %v1660 = vld [vmem:[%s10 + $0x1b4] sm:$0xf]
    %v1661 = vld [vmem:[%s10 + $0x1b8] sm:$0xf]
    %v1662 = vld [vmem:[%s10 + $0x1bc] sm:$0xf]
    %v1663 = vld [vmem:[%s10 + $0x1c0] sm:$0xf]
    %v1664 = vld [vmem:[%s10 + $0x1c4] sm:$0xf]
    %v1665 = vld [vmem:[%s10 + $0x1c8] sm:$0xf]
    %v1666 = vld [vmem:[%s10 + $0x1cc] sm:$0xf]
    %v1667 = vld [vmem:[%s10 + $0x1d0] sm:$0xf]
    %v1668 = vld [vmem:[%s10 + $0x1d4] sm:$0xf]
    %v1669 = vld [vmem:[%s10 + $0x1d8] sm:$0xf]
    %v1670 = vld [vmem:[%s10 + $0x1dc] sm:$0xf]
    %v1671 = vld [vmem:[%s10 + $0x1e0] sm:$0xf]
    %v1672 = vld [vmem:[%s10 + $0x1e4] sm:$0xf]
    %v1673 = vld [vmem:[%s10 + $0x1e8] sm:$0xf]
    %v1674 = vld [vmem:[%s10 + $0x1ec] sm:$0xf]
    %v1675 = vld [vmem:[%s10 + $0x1f0] sm:$0xf]
    %v1676 = vld [vmem:[%s10 + $0x1f4] sm:$0xf]
    %v1677 = vld [vmem:[%s10 + $0x1f8] sm:$0xf]
    %v1678 = vld [vmem:[%s10 + $0x1fc] sm:$0xf]
    %v1679 = vld [vmem:[%s10 + $0x200] sm:$0xf]
    %v1680 = vld [vmem:[%s10 + $0x204] sm:$0xf]
    %v1681 = vld [vmem:[%s10 + $0x208] sm:$0xf]
    %v1682 = vld [vmem:[%s10 + $0x20c] sm:$0xf]
    %v1683 = vld [vmem:[%s10 + $0x210] sm:$0xf]
    %v1684 = vld [vmem:[%s10 + $0x214] sm:$0xf]
    %v1685 = vld [vmem:[%s10 + $0x218] sm:$0xf]
    %v1686 = vld [vmem:[%s10 + $0x21c] sm:$0xf]
    %v1687 = vld [vmem:[%s10 + $0x220] sm:$0xf]
    %v1688 = vld [vmem:[%s10 + $0x224] sm:$0xf]
    %v1689 = vld [vmem:[%s10 + $0x228] sm:$0xf]
    %v1690 = vld [vmem:[%s10 + $0x22c] sm:$0xf]
    %v1691 = vld [vmem:[%s10 + $0x230] sm:$0xf]
    %v1692 = vld [vmem:[%s10 + $0x234] sm:$0xf]
    %v1693 = vld [vmem:[%s10 + $0x238] sm:$0xf]
    %v1694 = vld [vmem:[%s10 + $0x23c] sm:$0xf]
    %v1695 = vld [vmem:[%s10 + $0x240] sm:$0xf]
    %v1696 = vld [vmem:[%s10 + $0x244] sm:$0xf]
    %v1697 = vld [vmem:[%s10 + $0x248] sm:$0xf]
    %v1698 = vld [vmem:[%s10 + $0x24c] sm:$0xf]
    %v1699 = vld [vmem:[%s10 + $0x250] sm:$0xf]
    %v1700 = vld [vmem:[%s10 + $0x254] sm:$0xf]
    %v1701 = vld [vmem:[%s10 + $0x258] sm:$0xf]
    %v1702 = vld [vmem:[%s10 + $0x25c] sm:$0xf]
    %v1703 = vld [vmem:[%s10 + $0x260] sm:$0xf]
    %v1704 = vld [vmem:[%s10 + $0x264] sm:$0xf]
    %v1705 = vld [vmem:[%s10 + $0x268] sm:$0xf]
    %v1706 = vld [vmem:[%s10 + $0x26c] sm:$0xf]
    %v1707 = vld [vmem:[%s10 + $0x270] sm:$0xf]
    %v1708 = vld [vmem:[%s10 + $0x274] sm:$0xf]
    %v1709 = vld [vmem:[%s10 + $0x278] sm:$0xf]
    %v1710 = vld [vmem:[%s10 + $0x27c] sm:$0xf]
    %v1711 = vld [vmem:[%s10 + $0x280] sm:$0xf]
    %v1712 = vld [vmem:[%s10 + $0x284] sm:$0xf]
    %v1713 = vld [vmem:[%s10 + $0x288] sm:$0xf]
    %v1714 = vld [vmem:[%s10 + $0x28c] sm:$0xf]
    %v1715 = vld [vmem:[%s10 + $0x290] sm:$0xf]
    %v1716 = vld [vmem:[%s10 + $0x294] sm:$0xf]
    %v1717 = vld [vmem:[%s10 + $0x298] sm:$0xf]
    %v1718 = vld [vmem:[%s10 + $0x29c] sm:$0xf]
    %v1719 = vld [vmem:[%s10 + $0x2a0] sm:$0xf]
    %v1720 = vld [vmem:[%s10 + $0x2a4] sm:$0xf]
    %v1721 = vld [vmem:[%s10 + $0x2a8] sm:$0xf]
    %v1722 = vld [vmem:[%s10 + $0x2ac] sm:$0xf]
    %v1723 = vld [vmem:[%s10 + $0x2b0] sm:$0xf]
    %v1724 = vld [vmem:[%s10 + $0x2b4] sm:$0xf]
    %v1725 = vld [vmem:[%s10 + $0x2b8] sm:$0xf]
    %v1726 = vld [vmem:[%s10 + $0x2bc] sm:$0xf]
    %v1727 = vld [vmem:[%s10 + $0x2c0] sm:$0xf]
    %v1728 = vld [vmem:[%s10 + $0x2c4] sm:$0xf]
    %v1729 = vld [vmem:[%s10 + $0x2c8] sm:$0xf]
    %v1730 = vld [vmem:[%s10 + $0x2cc] sm:$0xf]
    %v1731 = vld [vmem:[%s10 + $0x2d0] sm:$0xf]
    %v1732 = vld [vmem:[%s10 + $0x2d4] sm:$0xf]
    %v1733 = vld [vmem:[%s10 + $0x2d8] sm:$0xf]
    %v1734 = vld [vmem:[%s10 + $0x2dc] sm:$0xf]
    %v1735 = vld [vmem:[%s10 + $0x2e0] sm:$0xf]
    %v1736 = vld [vmem:[%s10 + $0x2e4] sm:$0xf]
    %v1737 = vld [vmem:[%s10 + $0x2e8] sm:$0xf]
    %v1738 = vld [vmem:[%s10 + $0x2ec] sm:$0xf]
    %v1739 = vld [vmem:[%s10 + $0x2f0] sm:$0xf]
    %v1740 = vld [vmem:[%s10 + $0x2f4] sm:$0xf]
    %v1741 = vld [vmem:[%s10 + $0x2f8] sm:$0xf]
    %v1742 = vld [vmem:[%s10 + $0x2fc] sm:$0xf]
    %v1743 = vld [vmem:[%s10 + $0x300] sm:$0xf]
    %v1744 = vld [vmem:[%s10 + $0x304] sm:$0xf]
    %v1745 = vld [vmem:[%s10 + $0x308] sm:$0xf]
    %v1746 = vld [vmem:[%s10 + $0x30c] sm:$0xf]
    %v1747 = vld [vmem:[%s10 + $0x310] sm:$0xf]
    %v1748 = vld [vmem:[%s10 + $0x314] sm:$0xf]
    %v1749 = vld [vmem:[%s10 + $0x318] sm:$0xf]
    %v1750 = vld [vmem:[%s10 + $0x31c] sm:$0xf]
    %v1751 = vld [vmem:[%s10 + $0x320] sm:$0xf]
    %v1752 = vld [vmem:[%s10 + $0x324] sm:$0xf]
    %v1753 = vld [vmem:[%s10 + $0x328] sm:$0xf]
    %v1754 = vld [vmem:[%s10 + $0x32c] sm:$0xf]
    %v1755 = vld [vmem:[%s10 + $0x330] sm:$0xf]
    %v1756 = vld [vmem:[%s10 + $0x334] sm:$0xf]
    %v1757 = vld [vmem:[%s10 + $0x338] sm:$0xf]
    %v1758 = vld [vmem:[%s10 + $0x33c] sm:$0xf]
    %v1759 = vld [vmem:[%s10 + $0x340] sm:$0xf]
    %v1760 = vld [vmem:[%s10 + $0x344] sm:$0xf]
    %v1761 = vld [vmem:[%s10 + $0x348] sm:$0xf]
    %v1762 = vld [vmem:[%s10 + $0x34c] sm:$0xf]
    %v1763 = vld [vmem:[%s10 + $0x350] sm:$0xf]
    %v1764 = vld [vmem:[%s10 + $0x354] sm:$0xf]
    %v1765 = vld [vmem:[%s10 + $0x358] sm:$0xf]
    %v1766 = vld [vmem:[%s10 + $0x35c] sm:$0xf]
    %v1767 = vld [vmem:[%s10 + $0x360] sm:$0xf]
    %v1768 = vld [vmem:[%s10 + $0x364] sm:$0xf]
    %v1769 = vld [vmem:[%s10 + $0x368] sm:$0xf]
    %v1770 = vld [vmem:[%s10 + $0x36c] sm:$0xf]
    %v1771 = vld [vmem:[%s10 + $0x370] sm:$0xf]
    %v1772 = vld [vmem:[%s10 + $0x374] sm:$0xf]
    %v1773 = vld [vmem:[%s10 + $0x378] sm:$0xf]
    %v1774 = vld [vmem:[%s10 + $0x37c] sm:$0xf]
    %v1775 = vld [vmem:[%s10 + $0x380] sm:$0xf]
    %v1776 = vld [vmem:[%s10 + $0x384] sm:$0xf]
    %v1777 = vld [vmem:[%s10 + $0x388] sm:$0xf]
    %v1778 = vld [vmem:[%s10 + $0x38c] sm:$0xf]
    %v1779 = vld [vmem:[%s10 + $0x390] sm:$0xf]
    %v1780 = vld [vmem:[%s10 + $0x394] sm:$0xf]
    %v1781 = vld [vmem:[%s10 + $0x398] sm:$0xf]
    %v1782 = vld [vmem:[%s10 + $0x39c] sm:$0xf]
    %v1783 = vld [vmem:[%s10 + $0x3a0] sm:$0xf]
    %v1784 = vld [vmem:[%s10 + $0x3a4] sm:$0xf]
    %v1785 = vld [vmem:[%s10 + $0x3a8] sm:$0xf]
    %v1786 = vld [vmem:[%s10 + $0x3ac] sm:$0xf]
    %v1787 = vld [vmem:[%s10 + $0x3b0] sm:$0xf]
    %v1788 = vld [vmem:[%s10 + $0x3b4] sm:$0xf]
    %v1789 = vld [vmem:[%s10 + $0x3b8] sm:$0xf]
    %v1790 = vld [vmem:[%s10 + $0x3bc] sm:$0xf]
    %v1791 = vld [vmem:[%s10 + $0x3c0] sm:$0xf]
    %v1792 = vld [vmem:[%s10 + $0x3c4] sm:$0xf]
    %v1793 = vld [vmem:[%s10 + $0x3c8] sm:$0xf]
    %v1794 = vld [vmem:[%s10 + $0x3cc] sm:$0xf]
    %v1795 = vld [vmem:[%s10 + $0x3d0] sm:$0xf]
    %v1796 = vld [vmem:[%s10 + $0x3d4] sm:$0xf]
    %v1797 = vld [vmem:[%s10 + $0x3d8] sm:$0xf]
    %v1798 = vld [vmem:[%s10 + $0x3dc] sm:$0xf]
    %v1799 = vld [vmem:[%s10 + $0x3e0] sm:$0xf]
    %v1800 = vld [vmem:[%s10 + $0x3e4] sm:$0xf]
    %v1801 = vld [vmem:[%s10 + $0x3e8] sm:$0xf]
    %v1802 = vld [vmem:[%s10 + $0x3ec] sm:$0xf]
    %v1803 = vld [vmem:[%s10 + $0x3f0] sm:$0xf]
    %v1804 = vld [vmem:[%s10 + $0x3f4] sm:$0xf]
    %v1805 = vld [vmem:[%s10 + $0x3f8] sm:$0xf]
    %v1806 = vld [vmem:[%s10 + $0x3fc] sm:$0xf]
    %v1815 = vunpack.c.l.b16 %v1543
    %v1816 = vunpack.c.h.b16 %v1543
    %v1817 = vunpack.c.l.b16 %v1544
    %v1818 = vunpack.c.h.b16 %v1544
    %v1819 = vunpack.c.l.b16 %v1545
    %v1820 = vunpack.c.h.b16 %v1545
    %v1821 = vunpack.c.l.b16 %v1546
    %v1822 = vunpack.c.h.b16 %v1546
    %v1823 = vunpack.c.l.b16 %v1547
    %v1824 = vunpack.c.h.b16 %v1547
    %v1825 = vunpack.c.l.b16 %v1548
    %v1826 = vunpack.c.h.b16 %v1548
    %v1827 = vunpack.c.l.b16 %v1549
    %v1828 = vunpack.c.h.b16 %v1549
    %v1829 = vunpack.c.l.b16 %v1550
    %v1830 = vunpack.c.h.b16 %v1550
    %v1831 = vpack.c.b16 %v1815, %v1815
    %v1832 = vpack.c.b16 %v1816, %v1816
    %v1833 = vpack.c.b16 %v1817, %v1817
    %v1834 = vpack.c.b16 %v1818, %v1818
    %v1835 = vpack.c.b16 %v1819, %v1819
    %v1836 = vpack.c.b16 %v1820, %v1820
    %v1837 = vpack.c.b16 %v1821, %v1821
    %v1838 = vpack.c.b16 %v1822, %v1822
    %v1839 = vpack.c.b16 %v1823, %v1823
    %v1840 = vpack.c.b16 %v1824, %v1824
    %v1841 = vpack.c.b16 %v1825, %v1825
    %v1842 = vpack.c.b16 %v1826, %v1826
    %v1843 = vpack.c.b16 %v1827, %v1827
    %v1844 = vpack.c.b16 %v1828, %v1828
    %v1845 = vpack.c.b16 %v1829, %v1829
    %v1846 = vpack.c.b16 %v1830, %v1830
    %v2119 = vunpack.c.l.b16 %v1551
    %v2120 = vunpack.c.l.b16 %v1552
    %v2121 = vunpack.c.l.b16 %v1553
    %v2122 = vunpack.c.l.b16 %v1554
    %v2123 = vunpack.c.l.b16 %v1555
    %v2124 = vunpack.c.l.b16 %v1556
    %v2125 = vunpack.c.l.b16 %v1557
    %v2126 = vunpack.c.l.b16 %v1558
    %v2127 = vunpack.c.l.b16 %v1559
    %v2128 = vunpack.c.l.b16 %v1560
    %v2129 = vunpack.c.l.b16 %v1561
    %v2130 = vunpack.c.l.b16 %v1562
    %v2131 = vunpack.c.l.b16 %v1563
    %v2132 = vunpack.c.l.b16 %v1564
    %v2133 = vunpack.c.l.b16 %v1565
    %v2134 = vunpack.c.l.b16 %v1566
    %v2135 = vunpack.c.l.b16 %v1567
    %v2136 = vunpack.c.l.b16 %v1568
    %v2137 = vunpack.c.l.b16 %v1569
    %v2138 = vunpack.c.l.b16 %v1570
    %v2139 = vunpack.c.l.b16 %v1571
    %v2140 = vunpack.c.l.b16 %v1572
    %v2141 = vunpack.c.l.b16 %v1573
    %v2142 = vunpack.c.l.b16 %v1574
    %v2143 = vunpack.c.l.b16 %v1575
    %v2144 = vunpack.c.l.b16 %v1576
    %v2145 = vunpack.c.l.b16 %v1577
    %v2146 = vunpack.c.l.b16 %v1578
    %v2147 = vunpack.c.l.b16 %v1579
    %v2148 = vunpack.c.l.b16 %v1580
    %v2149 = vunpack.c.l.b16 %v1581
    %v2150 = vunpack.c.l.b16 %v1582
    %v2151 = vunpack.c.l.b16 %v1583
    %v2152 = vunpack.c.l.b16 %v1584
    %v2153 = vunpack.c.l.b16 %v1585
    %v2154 = vunpack.c.l.b16 %v1586
    %v2155 = vunpack.c.l.b16 %v1587
    %v2156 = vunpack.c.l.b16 %v1588
    %v2157 = vunpack.c.l.b16 %v1589
    %v2158 = vunpack.c.l.b16 %v1590
    %v2159 = vunpack.c.l.b16 %v1591
    %v2160 = vunpack.c.l.b16 %v1592
    %v2161 = vunpack.c.l.b16 %v1593
    %v2162 = vunpack.c.l.b16 %v1594
    %v2163 = vunpack.c.l.b16 %v1595
    %v2164 = vunpack.c.l.b16 %v1596
    %v2165 = vunpack.c.l.b16 %v1597
    %v2166 = vunpack.c.l.b16 %v1598
    %v2167 = vunpack.c.l.b16 %v1599
    %v2168 = vunpack.c.l.b16 %v1600
    %v2169 = vunpack.c.l.b16 %v1601
    %v2170 = vunpack.c.l.b16 %v1602
    %v2171 = vunpack.c.l.b16 %v1603
    %v2172 = vunpack.c.l.b16 %v1604
    %v2173 = vunpack.c.l.b16 %v1605
    %v2174 = vunpack.c.l.b16 %v1606
    %v2175 = vunpack.c.l.b16 %v1607
    %v2176 = vunpack.c.l.b16 %v1608
    %v2177 = vunpack.c.l.b16 %v1609
    %v2178 = vunpack.c.l.b16 %v1610
    %v2179 = vunpack.c.l.b16 %v1611
    %v2180 = vunpack.c.l.b16 %v1612
    %v2181 = vunpack.c.l.b16 %v1613
    %v2182 = vunpack.c.l.b16 %v1614
    %v2183 = vunpack.c.l.b16 %v1615
    %v2184 = vunpack.c.l.b16 %v1616
    %v2185 = vunpack.c.l.b16 %v1617
    %v2186 = vunpack.c.l.b16 %v1618
    %v2187 = vunpack.c.l.b16 %v1619
    %v2188 = vunpack.c.l.b16 %v1620
    %v2189 = vunpack.c.l.b16 %v1621
    %v2190 = vunpack.c.l.b16 %v1622
    %v2191 = vunpack.c.l.b16 %v1623
    %v2192 = vunpack.c.l.b16 %v1624
    %v2193 = vunpack.c.l.b16 %v1625
    %v2194 = vunpack.c.l.b16 %v1626
    %v2195 = vunpack.c.l.b16 %v1627
    %v2196 = vunpack.c.l.b16 %v1628
    %v2197 = vunpack.c.l.b16 %v1629
    %v2198 = vunpack.c.l.b16 %v1630
    %v2199 = vunpack.c.l.b16 %v1631
    %v2200 = vunpack.c.l.b16 %v1632
    %v2201 = vunpack.c.l.b16 %v1633
    %v2202 = vunpack.c.l.b16 %v1634
    %v2203 = vunpack.c.l.b16 %v1635
    %v2204 = vunpack.c.l.b16 %v1636
    %v2205 = vunpack.c.l.b16 %v1637
    %v2206 = vunpack.c.l.b16 %v1638
    %v2207 = vunpack.c.l.b16 %v1639
    %v2208 = vunpack.c.l.b16 %v1640
    %v2209 = vunpack.c.l.b16 %v1641
    %v2210 = vunpack.c.l.b16 %v1642
    %v2211 = vunpack.c.l.b16 %v1643
    %v2212 = vunpack.c.l.b16 %v1644
    %v2213 = vunpack.c.l.b16 %v1645
    %v2214 = vunpack.c.l.b16 %v1646
    %v2215 = vunpack.c.l.b16 %v1647
    %v2216 = vunpack.c.l.b16 %v1648
    %v2217 = vunpack.c.l.b16 %v1649
    %v2218 = vunpack.c.l.b16 %v1650
    %v2219 = vunpack.c.l.b16 %v1651
    %v2220 = vunpack.c.l.b16 %v1652
    %v2221 = vunpack.c.l.b16 %v1653
    %v2222 = vunpack.c.l.b16 %v1654
    %v2223 = vunpack.c.l.b16 %v1655
    %v2224 = vunpack.c.l.b16 %v1656
    %v2225 = vunpack.c.l.b16 %v1657
    %v2226 = vunpack.c.l.b16 %v1658
    %v2227 = vunpack.c.l.b16 %v1659
    %v2228 = vunpack.c.l.b16 %v1660
    %v2229 = vunpack.c.l.b16 %v1661
    %v2230 = vunpack.c.l.b16 %v1662
    %v2231 = vunpack.c.l.b16 %v1663
    %v2232 = vunpack.c.l.b16 %v1664
    %v2233 = vunpack.c.l.b16 %v1665
    %v2234 = vunpack.c.l.b16 %v1666
    %v2235 = vunpack.c.l.b16 %v1667
    %v2236 = vunpack.c.l.b16 %v1668
    %v2237 = vunpack.c.l.b16 %v1669
    %v2238 = vunpack.c.l.b16 %v1670
    %v2239 = vunpack.c.l.b16 %v1671
    %v2240 = vunpack.c.l.b16 %v1672
    %v2241 = vunpack.c.l.b16 %v1673
    %v2242 = vunpack.c.l.b16 %v1674
    %v2243 = vunpack.c.l.b16 %v1675
    %v2244 = vunpack.c.l.b16 %v1676
    %v2245 = vunpack.c.l.b16 %v1677
    %v2246 = vunpack.c.l.b16 %v1678
    %v2247 = vunpack.c.l.b16 %v1679
    %v2248 = vunpack.c.l.b16 %v1680
    %v2249 = vunpack.c.l.b16 %v1681
    %v2250 = vunpack.c.l.b16 %v1682
    %v2251 = vunpack.c.l.b16 %v1683
    %v2252 = vunpack.c.l.b16 %v1684
    %v2253 = vunpack.c.l.b16 %v1685
    %v2254 = vunpack.c.l.b16 %v1686
    %v2255 = vunpack.c.l.b16 %v1687
    %v2256 = vunpack.c.l.b16 %v1688
    %v2257 = vunpack.c.l.b16 %v1689
    %v2258 = vunpack.c.l.b16 %v1690
    %v2259 = vunpack.c.l.b16 %v1691
    %v2260 = vunpack.c.l.b16 %v1692
    %v2261 = vunpack.c.l.b16 %v1693
    %v2262 = vunpack.c.l.b16 %v1694
    %v2263 = vunpack.c.l.b16 %v1695
    %v2264 = vunpack.c.l.b16 %v1696
    %v2265 = vunpack.c.l.b16 %v1697
    %v2266 = vunpack.c.l.b16 %v1698
    %v2267 = vunpack.c.l.b16 %v1699
    %v2268 = vunpack.c.l.b16 %v1700
    %v2269 = vunpack.c.l.b16 %v1701
    %v2270 = vunpack.c.l.b16 %v1702
    %v2271 = vunpack.c.l.b16 %v1703
    %v2272 = vunpack.c.l.b16 %v1704
    %v2273 = vunpack.c.l.b16 %v1705
    %v2274 = vunpack.c.l.b16 %v1706
    %v2275 = vunpack.c.l.b16 %v1707
    %v2276 = vunpack.c.l.b16 %v1708
    %v2277 = vunpack.c.l.b16 %v1709
    %v2278 = vunpack.c.l.b16 %v1710
    %v2279 = vunpack.c.l.b16 %v1711
    %v2280 = vunpack.c.l.b16 %v1712
    %v2281 = vunpack.c.l.b16 %v1713
    %v2282 = vunpack.c.l.b16 %v1714
    %v2283 = vunpack.c.l.b16 %v1715
    %v2284 = vunpack.c.l.b16 %v1716
    %v2285 = vunpack.c.l.b16 %v1717
    %v2286 = vunpack.c.l.b16 %v1718
    %v2287 = vunpack.c.l.b16 %v1719
    %v2288 = vunpack.c.l.b16 %v1720
    %v2289 = vunpack.c.l.b16 %v1721
    %v2290 = vunpack.c.l.b16 %v1722
    %v2291 = vunpack.c.l.b16 %v1723
    %v2292 = vunpack.c.l.b16 %v1724
    %v2293 = vunpack.c.l.b16 %v1725
    %v2294 = vunpack.c.l.b16 %v1726
    %v2295 = vunpack.c.l.b16 %v1727
    %v2296 = vunpack.c.l.b16 %v1728
    %v2297 = vunpack.c.l.b16 %v1729
    %v2298 = vunpack.c.l.b16 %v1730
    %v2299 = vunpack.c.l.b16 %v1731
    %v2300 = vunpack.c.l.b16 %v1732
    %v2301 = vunpack.c.l.b16 %v1733
    %v2302 = vunpack.c.l.b16 %v1734
    %v2303 = vunpack.c.l.b16 %v1735
    %v2304 = vunpack.c.l.b16 %v1736
    %v2305 = vunpack.c.l.b16 %v1737
    %v2306 = vunpack.c.l.b16 %v1738
    %v2307 = vunpack.c.l.b16 %v1739
    %v2308 = vunpack.c.l.b16 %v1740
    %v2309 = vunpack.c.l.b16 %v1741
    %v2310 = vunpack.c.l.b16 %v1742
    %v2311 = vunpack.c.l.b16 %v1743
    %v2312 = vunpack.c.l.b16 %v1744
    %v2313 = vunpack.c.l.b16 %v1745
    %v2314 = vunpack.c.l.b16 %v1746
    %v2315 = vunpack.c.l.b16 %v1747
    %v2316 = vunpack.c.l.b16 %v1748
    %v2317 = vunpack.c.l.b16 %v1749
    %v2318 = vunpack.c.l.b16 %v1750
    %v2319 = vunpack.c.l.b16 %v1751
    %v2320 = vunpack.c.l.b16 %v1752
    %v2321 = vunpack.c.l.b16 %v1753
    %v2322 = vunpack.c.l.b16 %v1754
    %v2323 = vunpack.c.l.b16 %v1755
    %v2324 = vunpack.c.l.b16 %v1756
    %v2325 = vunpack.c.l.b16 %v1757
    %v2326 = vunpack.c.l.b16 %v1758
    %v2327 = vunpack.c.l.b16 %v1759
    %v2328 = vunpack.c.l.b16 %v1760
    %v2329 = vunpack.c.l.b16 %v1761
    %v2330 = vunpack.c.l.b16 %v1762
    %v2331 = vunpack.c.l.b16 %v1763
    %v2332 = vunpack.c.l.b16 %v1764
    %v2333 = vunpack.c.l.b16 %v1765
    %v2334 = vunpack.c.l.b16 %v1766
    %v2335 = vunpack.c.l.b16 %v1767
    %v2336 = vunpack.c.l.b16 %v1768
    %v2337 = vunpack.c.l.b16 %v1769
    %v2338 = vunpack.c.l.b16 %v1770
    %v2339 = vunpack.c.l.b16 %v1771
    %v2340 = vunpack.c.l.b16 %v1772
    %v2341 = vunpack.c.l.b16 %v1773
    %v2342 = vunpack.c.l.b16 %v1774
    %v2343 = vunpack.c.l.b16 %v1775
    %v2344 = vunpack.c.l.b16 %v1776
    %v2345 = vunpack.c.l.b16 %v1777
    %v2346 = vunpack.c.l.b16 %v1778
    %v2347 = vunpack.c.l.b16 %v1779
    %v2348 = vunpack.c.l.b16 %v1780
    %v2349 = vunpack.c.l.b16 %v1781
    %v2350 = vunpack.c.l.b16 %v1782
    %v2351 = vunpack.c.l.b16 %v1783
    %v2352 = vunpack.c.l.b16 %v1784
    %v2353 = vunpack.c.l.b16 %v1785
    %v2354 = vunpack.c.l.b16 %v1786
    %v2355 = vunpack.c.l.b16 %v1787
    %v2356 = vunpack.c.l.b16 %v1788
    %v2357 = vunpack.c.l.b16 %v1789
    %v2358 = vunpack.c.l.b16 %v1790
    %v2359 = vunpack.c.l.b16 %v1791
    %v2360 = vunpack.c.l.b16 %v1792
    %v2361 = vunpack.c.l.b16 %v1793
    %v2362 = vunpack.c.l.b16 %v1794
    %v2363 = vunpack.c.l.b16 %v1795
    %v2364 = vunpack.c.l.b16 %v1796
    %v2365 = vunpack.c.l.b16 %v1797
    %v2366 = vunpack.c.l.b16 %v1798
    %v2367 = vunpack.c.l.b16 %v1799
    %v2368 = vunpack.c.l.b16 %v1800
    %v2369 = vunpack.c.l.b16 %v1801
    %v2370 = vunpack.c.l.b16 %v1802
    %v2371 = vunpack.c.l.b16 %v1803
    %v2372 = vunpack.c.l.b16 %v1804
    %v2373 = vunpack.c.l.b16 %v1805
    %v2374 = vunpack.c.l.b16 %v1806
    %v2375 = vpack.c.b16 %v2120, %v2119
    %v2376 = vpack.c.b16 %v2122, %v2121
    %v2377 = vpack.c.b16 %v2124, %v2123
    %v2378 = vpack.c.b16 %v2126, %v2125
    %v2379 = vpack.c.b16 %v2128, %v2127
    %v2380 = vpack.c.b16 %v2130, %v2129
    %v2381 = vpack.c.b16 %v2132, %v2131
    %v2382 = vpack.c.b16 %v2134, %v2133
    %v2383 = vpack.c.b16 %v2136, %v2135
    %v2384 = vpack.c.b16 %v2138, %v2137
    %v2385 = vpack.c.b16 %v2140, %v2139
    %v2386 = vpack.c.b16 %v2142, %v2141
    %v2387 = vpack.c.b16 %v2144, %v2143
    %v2388 = vpack.c.b16 %v2146, %v2145
    %v2389 = vpack.c.b16 %v2148, %v2147
    %v2390 = vpack.c.b16 %v2150, %v2149
    %v2391 = vpack.c.b16 %v2152, %v2151
    %v2392 = vpack.c.b16 %v2154, %v2153
    %v2393 = vpack.c.b16 %v2156, %v2155
    %v2394 = vpack.c.b16 %v2158, %v2157
    %v2395 = vpack.c.b16 %v2160, %v2159
    %v2396 = vpack.c.b16 %v2162, %v2161
    %v2397 = vpack.c.b16 %v2164, %v2163
    %v2398 = vpack.c.b16 %v2166, %v2165
    %v2399 = vpack.c.b16 %v2168, %v2167
    %v2400 = vpack.c.b16 %v2170, %v2169
    %v2401 = vpack.c.b16 %v2172, %v2171
    %v2402 = vpack.c.b16 %v2174, %v2173
    %v2403 = vpack.c.b16 %v2176, %v2175
    %v2404 = vpack.c.b16 %v2178, %v2177
    %v2405 = vpack.c.b16 %v2180, %v2179
    %v2406 = vpack.c.b16 %v2182, %v2181
    %v2407 = vpack.c.b16 %v2184, %v2183
    %v2408 = vpack.c.b16 %v2186, %v2185
    %v2409 = vpack.c.b16 %v2188, %v2187
    %v2410 = vpack.c.b16 %v2190, %v2189
    %v2411 = vpack.c.b16 %v2192, %v2191
    %v2412 = vpack.c.b16 %v2194, %v2193
    %v2413 = vpack.c.b16 %v2196, %v2195
    %v2414 = vpack.c.b16 %v2198, %v2197
    %v2415 = vpack.c.b16 %v2200, %v2199
    %v2416 = vpack.c.b16 %v2202, %v2201
    %v2417 = vpack.c.b16 %v2204, %v2203
    %v2418 = vpack.c.b16 %v2206, %v2205
    %v2419 = vpack.c.b16 %v2208, %v2207
    %v2420 = vpack.c.b16 %v2210, %v2209
    %v2421 = vpack.c.b16 %v2212, %v2211
    %v2422 = vpack.c.b16 %v2214, %v2213
    %v2423 = vpack.c.b16 %v2216, %v2215
    %v2424 = vpack.c.b16 %v2218, %v2217
    %v2425 = vpack.c.b16 %v2220, %v2219
    %v2426 = vpack.c.b16 %v2222, %v2221
    %v2427 = vpack.c.b16 %v2224, %v2223
    %v2428 = vpack.c.b16 %v2226, %v2225
    %v2429 = vpack.c.b16 %v2228, %v2227
    %v2430 = vpack.c.b16 %v2230, %v2229
    %v2431 = vpack.c.b16 %v2232, %v2231
    %v2432 = vpack.c.b16 %v2234, %v2233
    %v2433 = vpack.c.b16 %v2236, %v2235
    %v2434 = vpack.c.b16 %v2238, %v2237
    %v2435 = vpack.c.b16 %v2240, %v2239
    %v2436 = vpack.c.b16 %v2242, %v2241
    %v2437 = vpack.c.b16 %v2244, %v2243
    %v2438 = vpack.c.b16 %v2246, %v2245
    %v2439 = vpack.c.b16 %v2248, %v2247
    %v2440 = vpack.c.b16 %v2250, %v2249
    %v2441 = vpack.c.b16 %v2252, %v2251
    %v2442 = vpack.c.b16 %v2254, %v2253
    %v2443 = vpack.c.b16 %v2256, %v2255
    %v2444 = vpack.c.b16 %v2258, %v2257
    %v2445 = vpack.c.b16 %v2260, %v2259
    %v2446 = vpack.c.b16 %v2262, %v2261
    %v2447 = vpack.c.b16 %v2264, %v2263
    %v2448 = vpack.c.b16 %v2266, %v2265
    %v2449 = vpack.c.b16 %v2268, %v2267
    %v2450 = vpack.c.b16 %v2270, %v2269
    %v2451 = vpack.c.b16 %v2272, %v2271
    %v2452 = vpack.c.b16 %v2274, %v2273
    %v2453 = vpack.c.b16 %v2276, %v2275
    %v2454 = vpack.c.b16 %v2278, %v2277
    %v2455 = vpack.c.b16 %v2280, %v2279
    %v2456 = vpack.c.b16 %v2282, %v2281
    %v2457 = vpack.c.b16 %v2284, %v2283
    %v2458 = vpack.c.b16 %v2286, %v2285
    %v2459 = vpack.c.b16 %v2288, %v2287
    %v2460 = vpack.c.b16 %v2290, %v2289
    %v2461 = vpack.c.b16 %v2292, %v2291
    %v2462 = vpack.c.b16 %v2294, %v2293
    %v2463 = vpack.c.b16 %v2296, %v2295
    %v2464 = vpack.c.b16 %v2298, %v2297
    %v2465 = vpack.c.b16 %v2300, %v2299
    %v2466 = vpack.c.b16 %v2302, %v2301
    %v2467 = vpack.c.b16 %v2304, %v2303
    %v2468 = vpack.c.b16 %v2306, %v2305
    %v2469 = vpack.c.b16 %v2308, %v2307
    %v2470 = vpack.c.b16 %v2310, %v2309
    %v2471 = vpack.c.b16 %v2312, %v2311
    %v2472 = vpack.c.b16 %v2314, %v2313
    %v2473 = vpack.c.b16 %v2316, %v2315
    %v2474 = vpack.c.b16 %v2318, %v2317
    %v2475 = vpack.c.b16 %v2320, %v2319
    %v2476 = vpack.c.b16 %v2322, %v2321
    %v2477 = vpack.c.b16 %v2324, %v2323
    %v2478 = vpack.c.b16 %v2326, %v2325
    %v2479 = vpack.c.b16 %v2328, %v2327
    %v2480 = vpack.c.b16 %v2330, %v2329
    %v2481 = vpack.c.b16 %v2332, %v2331
    %v2482 = vpack.c.b16 %v2334, %v2333
    %v2483 = vpack.c.b16 %v2336, %v2335
    %v2484 = vpack.c.b16 %v2338, %v2337
    %v2485 = vpack.c.b16 %v2340, %v2339
    %v2486 = vpack.c.b16 %v2342, %v2341
    %v2487 = vpack.c.b16 %v2344, %v2343
    %v2488 = vpack.c.b16 %v2346, %v2345
    %v2489 = vpack.c.b16 %v2348, %v2347
    %v2490 = vpack.c.b16 %v2350, %v2349
    %v2491 = vpack.c.b16 %v2352, %v2351
    %v2492 = vpack.c.b16 %v2354, %v2353
    %v2493 = vpack.c.b16 %v2356, %v2355
    %v2494 = vpack.c.b16 %v2358, %v2357
    %v2495 = vpack.c.b16 %v2360, %v2359
    %v2496 = vpack.c.b16 %v2362, %v2361
    %v2497 = vpack.c.b16 %v2364, %v2363
    %v2498 = vpack.c.b16 %v2366, %v2365
    %v2499 = vpack.c.b16 %v2368, %v2367
    %v2500 = vpack.c.b16 %v2370, %v2369
    %v2501 = vpack.c.b16 %v2372, %v2371
    %v2502 = vpack.c.b16 %v2374, %v2373
    %2631 = vmatprep.subr.bf16.mxu0 0
    %2632 = vmatpush1.bf16.msra.mxu0 %v2375
    %2633 = vmatprep.subr.bf16.mxu0 0
    %2634 = vmatpush1.bf16.msra.mxu0 %v2376
    %2635 = vmatprep.subr.bf16.mxu0 0
    %2636 = vmatpush1.bf16.msra.mxu0 %v2377
    %2637 = vmatprep.subr.bf16.mxu0 0
    %2638 = vmatpush1.bf16.msra.mxu0 %v2378
    %2639 = vmatprep.subr.bf16.mxu0 0
    %2640 = vmatpush1.bf16.msra.mxu0 %v2379
    %2641 = vmatprep.subr.bf16.mxu0 0
    %2642 = vmatpush1.bf16.msra.mxu0 %v2380
    %2643 = vmatprep.subr.bf16.mxu0 0
    %2644 = vmatpush1.bf16.msra.mxu0 %v2381
    %2645 = vmatprep.subr.bf16.mxu0 0
    %2646 = vmatpush1.bf16.msra.mxu0 %v2382
    %2647 = vmatprep.subr.bf16.mxu0 0
    %2648 = vmatpush1.bf16.msra.mxu0 %v2383
    %2649 = vmatprep.subr.bf16.mxu0 0
    %2650 = vmatpush1.bf16.msra.mxu0 %v2384
    %2651 = vmatprep.subr.bf16.mxu0 0
    %2652 = vmatpush1.bf16.msra.mxu0 %v2385
    %2653 = vmatprep.subr.bf16.mxu0 0
    %2654 = vmatpush1.bf16.msra.mxu0 %v2386
    %2655 = vmatprep.subr.bf16.mxu0 0
    %2656 = vmatpush1.bf16.msra.mxu0 %v2387
    %2657 = vmatprep.subr.bf16.mxu0 0
    %2658 = vmatpush1.bf16.msra.mxu0 %v2388
    %2659 = vmatprep.subr.bf16.mxu0 0
    %2660 = vmatpush1.bf16.msra.mxu0 %v2389
    %2661 = vmatprep.subr.bf16.mxu0 0
    %2662 = vmatpush1.bf16.msra.mxu0 %v2390
    %2663 = vmatprep.mubr.bf16.mxu0 %v1832
    %2664 = vmatmul.mubr.bf16.gmra.mrb[0].mxu0 %v1831
    %v2665 = vpop.f32.mrb[0].mxu0
    %v2666 = vadd.f32 0.0, %v2665
    %v2667 = vpop.f32.mrb[0].mxu0
    %v2668 = vpop.f32.mrb[0].mxu0
    %v2669 = vpop.f32.mrb[0].mxu0
    %2670 = vdwg.mxu0
    %2671 = vmatprep.subr.bf16.mxu0 0
    %2672 = vmatpush1.bf16.msra.mxu0 %v2391
    %2673 = vmatprep.subr.bf16.mxu0 0
    %2674 = vmatpush1.bf16.msra.mxu0 %v2392
    %2675 = vmatprep.subr.bf16.mxu0 0
    %2676 = vmatpush1.bf16.msra.mxu0 %v2393
    %2677 = vmatprep.subr.bf16.mxu0 0
    %2678 = vmatpush1.bf16.msra.mxu0 %v2394
    %2679 = vmatprep.subr.bf16.mxu0 0
    %2680 = vmatpush1.bf16.msra.mxu0 %v2395
    %2681 = vmatprep.subr.bf16.mxu0 0
    %2682 = vmatpush1.bf16.msra.mxu0 %v2396
    %2683 = vmatprep.subr.bf16.mxu0 0
    %2684 = vmatpush1.bf16.msra.mxu0 %v2397
    %2685 = vmatprep.subr.bf16.mxu0 0
    %2686 = vmatpush1.bf16.msra.mxu0 %v2398
    %2687 = vmatprep.subr.bf16.mxu0 0
    %2688 = vmatpush1.bf16.msra.mxu0 %v2399
    %2689 = vmatprep.subr.bf16.mxu0 0
    %2690 = vmatpush1.bf16.msra.mxu0 %v2400
    %2691 = vmatprep.subr.bf16.mxu0 0
    %2692 = vmatpush1.bf16.msra.mxu0 %v2401
    %2693 = vmatprep.subr.bf16.mxu0 0
    %2694 = vmatpush1.bf16.msra.mxu0 %v2402
    %2695 = vmatprep.subr.bf16.mxu0 0
    %2696 = vmatpush1.bf16.msra.mxu0 %v2403
    %2697 = vmatprep.subr.bf16.mxu0 0
    %2698 = vmatpush1.bf16.msra.mxu0 %v2404
    %2699 = vmatprep.subr.bf16.mxu0 0
    %2700 = vmatpush1.bf16.msra.mxu0 %v2405
    %2701 = vmatprep.subr.bf16.mxu0 0
    %2702 = vmatpush1.bf16.msra.mxu0 %v2406
    %2703 = vmatprep.mubr.bf16.mxu0 %v1834
    %2704 = vmatmul.mubr.bf16.gmra.mrb[0].mxu0 %v1833
    %v2705 = vpop.f32.mrb[0].mxu0
    %v2706 = vadd.f32 %v2666, %v2705
    %v2707 = vpop.f32.mrb[0].mxu0
    %v2708 = vpop.f32.mrb[0].mxu0
    %v2709 = vpop.f32.mrb[0].mxu0
    %2710 = vdwg.mxu0
    %2711 = vmatprep.subr.bf16.mxu0 0
    %2712 = vmatpush1.bf16.msra.mxu0 %v2407
    %2713 = vmatprep.subr.bf16.mxu0 0
    %2714 = vmatpush1.bf16.msra.mxu0 %v2408
    %2715 = vmatprep.subr.bf16.mxu0 0
    %2716 = vmatpush1.bf16.msra.mxu0 %v2409
    %2717 = vmatprep.subr.bf16.mxu0 0
    %2718 = vmatpush1.bf16.msra.mxu0 %v2410
    %2719 = vmatprep.subr.bf16.mxu0 0
    %2720 = vmatpush1.bf16.msra.mxu0 %v2411
    %2721 = vmatprep.subr.bf16.mxu0 0
    %2722 = vmatpush1.bf16.msra.mxu0 %v2412
    %2723 = vmatprep.subr.bf16.mxu0 0
    %2724 = vmatpush1.bf16.msra.mxu0 %v2413
    %2725 = vmatprep.subr.bf16.mxu0 0
    %2726 = vmatpush1.bf16.msra.mxu0 %v2414
    %2727 = vmatprep.subr.bf16.mxu0 0
    %2728 = vmatpush1.bf16.msra.mxu0 %v2415
    %2729 = vmatprep.subr.bf16.mxu0 0
    %2730 = vmatpush1.bf16.msra.mxu0 %v2416
    %2731 = vmatprep.subr.bf16.mxu0 0
    %2732 = vmatpush1.bf16.msra.mxu0 %v2417
    %2733 = vmatprep.subr.bf16.mxu0 0
    %2734 = vmatpush1.bf16.msra.mxu0 %v2418
    %2735 = vmatprep.subr.bf16.mxu0 0
    %2736 = vmatpush1.bf16.msra.mxu0 %v2419
    %2737 = vmatprep.subr.bf16.mxu0 0
    %2738 = vmatpush1.bf16.msra.mxu0 %v2420
    %2739 = vmatprep.subr.bf16.mxu0 0
    %2740 = vmatpush1.bf16.msra.mxu0 %v2421
    %2741 = vmatprep.subr.bf16.mxu0 0
    %2742 = vmatpush1.bf16.msra.mxu0 %v2422
    %2743 = vmatprep.mubr.bf16.mxu0 %v1836
    %2744 = vmatmul.mubr.bf16.gmra.mrb[0].mxu0 %v1835
    %v2745 = vpop.f32.mrb[0].mxu0
    %v2746 = vadd.f32 %v2706, %v2745
    %v2747 = vpop.f32.mrb[0].mxu0
    %v2748 = vpop.f32.mrb[0].mxu0
    %v2749 = vpop.f32.mrb[0].mxu0
    %2750 = vdwg.mxu0
    %2751 = vmatprep.subr.bf16.mxu0 0
    %2752 = vmatpush1.bf16.msra.mxu0 %v2423
    %2753 = vmatprep.subr.bf16.mxu0 0
    %2754 = vmatpush1.bf16.msra.mxu0 %v2424
    %2755 = vmatprep.subr.bf16.mxu0 0
    %2756 = vmatpush1.bf16.msra.mxu0 %v2425
    %2757 = vmatprep.subr.bf16.mxu0 0
    %2758 = vmatpush1.bf16.msra.mxu0 %v2426
    %2759 = vmatprep.subr.bf16.mxu0 0
    %2760 = vmatpush1.bf16.msra.mxu0 %v2427
    %2761 = vmatprep.subr.bf16.mxu0 0
    %2762 = vmatpush1.bf16.msra.mxu0 %v2428
    %2763 = vmatprep.subr.bf16.mxu0 0
    %2764 = vmatpush1.bf16.msra.mxu0 %v2429
    %2765 = vmatprep.subr.bf16.mxu0 0
    %2766 = vmatpush1.bf16.msra.mxu0 %v2430
    %2767 = vmatprep.subr.bf16.mxu0 0
    %2768 = vmatpush1.bf16.msra.mxu0 %v2431
    %2769 = vmatprep.subr.bf16.mxu0 0
    %2770 = vmatpush1.bf16.msra.mxu0 %v2432
    %2771 = vmatprep.subr.bf16.mxu0 0
    %2772 = vmatpush1.bf16.msra.mxu0 %v2433
    %2773 = vmatprep.subr.bf16.mxu0 0
    %2774 = vmatpush1.bf16.msra.mxu0 %v2434
    %2775 = vmatprep.subr.bf16.mxu0 0
    %2776 = vmatpush1.bf16.msra.mxu0 %v2435
    %2777 = vmatprep.subr.bf16.mxu0 0
    %2778 = vmatpush1.bf16.msra.mxu0 %v2436
    %2779 = vmatprep.subr.bf16.mxu0 0
    %2780 = vmatpush1.bf16.msra.mxu0 %v2437
    %2781 = vmatprep.subr.bf16.mxu0 0
    %2782 = vmatpush1.bf16.msra.mxu0 %v2438
    %2783 = vmatprep.mubr.bf16.mxu0 %v1838
    %2784 = vmatmul.mubr.bf16.gmra.mrb[0].mxu0 %v1837
    %v2785 = vpop.f32.mrb[0].mxu0
    %v2786 = vadd.f32 %v2746, %v2785
    %v2787 = vpop.f32.mrb[0].mxu0
    %v2788 = vpop.f32.mrb[0].mxu0
    %v2789 = vpop.f32.mrb[0].mxu0
    %2790 = vdwg.mxu0
    %2791 = vmatprep.subr.bf16.mxu0 0
    %2792 = vmatpush1.bf16.msra.mxu0 %v2439
    %2793 = vmatprep.subr.bf16.mxu0 0
    %2794 = vmatpush1.bf16.msra.mxu0 %v2440
    %2795 = vmatprep.subr.bf16.mxu0 0
    %2796 = vmatpush1.bf16.msra.mxu0 %v2441
    %2797 = vmatprep.subr.bf16.mxu0 0
    %2798 = vmatpush1.bf16.msra.mxu0 %v2442
    %2799 = vmatprep.subr.bf16.mxu0 0
    %2800 = vmatpush1.bf16.msra.mxu0 %v2443
    %2801 = vmatprep.subr.bf16.mxu0 0
    %2802 = vmatpush1.bf16.msra.mxu0 %v2444
    %2803 = vmatprep.subr.bf16.mxu0 0
    %2804 = vmatpush1.bf16.msra.mxu0 %v2445
    %2805 = vmatprep.subr.bf16.mxu0 0
    %2806 = vmatpush1.bf16.msra.mxu0 %v2446
    %2807 = vmatprep.subr.bf16.mxu0 0
    %2808 = vmatpush1.bf16.msra.mxu0 %v2447
    %2809 = vmatprep.subr.bf16.mxu0 0
    %2810 = vmatpush1.bf16.msra.mxu0 %v2448
    %2811 = vmatprep.subr.bf16.mxu0 0
    %2812 = vmatpush1.bf16.msra.mxu0 %v2449
    %2813 = vmatprep.subr.bf16.mxu0 0
    %2814 = vmatpush1.bf16.msra.mxu0 %v2450
    %2815 = vmatprep.subr.bf16.mxu0 0
    %2816 = vmatpush1.bf16.msra.mxu0 %v2451
    %2817 = vmatprep.subr.bf16.mxu0 0
    %2818 = vmatpush1.bf16.msra.mxu0 %v2452
    %2819 = vmatprep.subr.bf16.mxu0 0
    %2820 = vmatpush1.bf16.msra.mxu0 %v2453
    %2821 = vmatprep.subr.bf16.mxu0 0
    %2822 = vmatpush1.bf16.msra.mxu0 %v2454
    %2823 = vmatprep.mubr.bf16.mxu0 %v1840
    %2824 = vmatmul.mubr.bf16.gmra.mrb[0].mxu0 %v1839
    %v2825 = vpop.f32.mrb[0].mxu0
    %v2826 = vadd.f32 %v2786, %v2825
    %v2827 = vpop.f32.mrb[0].mxu0
    %v2828 = vpop.f32.mrb[0].mxu0
    %v2829 = vpop.f32.mrb[0].mxu0
    %2830 = vdwg.mxu0
    %2831 = vmatprep.subr.bf16.mxu0 0
    %2832 = vmatpush1.bf16.msra.mxu0 %v2455
    %2833 = vmatprep.subr.bf16.mxu0 0
    %2834 = vmatpush1.bf16.msra.mxu0 %v2456
    %2835 = vmatprep.subr.bf16.mxu0 0
    %2836 = vmatpush1.bf16.msra.mxu0 %v2457
    %2837 = vmatprep.subr.bf16.mxu0 0
    %2838 = vmatpush1.bf16.msra.mxu0 %v2458
    %2839 = vmatprep.subr.bf16.mxu0 0
    %2840 = vmatpush1.bf16.msra.mxu0 %v2459
    %2841 = vmatprep.subr.bf16.mxu0 0
    %2842 = vmatpush1.bf16.msra.mxu0 %v2460
    %2843 = vmatprep.subr.bf16.mxu0 0
    %2844 = vmatpush1.bf16.msra.mxu0 %v2461
    %2845 = vmatprep.subr.bf16.mxu0 0
    %2846 = vmatpush1.bf16.msra.mxu0 %v2462
    %2847 = vmatprep.subr.bf16.mxu0 0
    %2848 = vmatpush1.bf16.msra.mxu0 %v2463
    %2849 = vmatprep.subr.bf16.mxu0 0
    %2850 = vmatpush1.bf16.msra.mxu0 %v2464
    %2851 = vmatprep.subr.bf16.mxu0 0
    %2852 = vmatpush1.bf16.msra.mxu0 %v2465
    %2853 = vmatprep.subr.bf16.mxu0 0
    %2854 = vmatpush1.bf16.msra.mxu0 %v2466
    %2855 = vmatprep.subr.bf16.mxu0 0
    %2856 = vmatpush1.bf16.msra.mxu0 %v2467
    %2857 = vmatprep.subr.bf16.mxu0 0
    %2858 = vmatpush1.bf16.msra.mxu0 %v2468
    %2859 = vmatprep.subr.bf16.mxu0 0
    %2860 = vmatpush1.bf16.msra.mxu0 %v2469
    %2861 = vmatprep.subr.bf16.mxu0 0
    %2862 = vmatpush1.bf16.msra.mxu0 %v2470
    %2863 = vmatprep.mubr.bf16.mxu0 %v1842
    %2864 = vmatmul.mubr.bf16.gmra.mrb[0].mxu0 %v1841
    %v2865 = vpop.f32.mrb[0].mxu0
    %v2866 = vadd.f32 %v2826, %v2865
    %v2867 = vpop.f32.mrb[0].mxu0
    %v2868 = vpop.f32.mrb[0].mxu0
    %v2869 = vpop.f32.mrb[0].mxu0
    %2870 = vdwg.mxu0
    %2871 = vmatprep.subr.bf16.mxu0 0
    %2872 = vmatpush1.bf16.msra.mxu0 %v2471
    %2873 = vmatprep.subr.bf16.mxu0 0
    %2874 = vmatpush1.bf16.msra.mxu0 %v2472
    %2875 = vmatprep.subr.bf16.mxu0 0
    %2876 = vmatpush1.bf16.msra.mxu0 %v2473
    %2877 = vmatprep.subr.bf16.mxu0 0
    %2878 = vmatpush1.bf16.msra.mxu0 %v2474
    %2879 = vmatprep.subr.bf16.mxu0 0
    %2880 = vmatpush1.bf16.msra.mxu0 %v2475
    %2881 = vmatprep.subr.bf16.mxu0 0
    %2882 = vmatpush1.bf16.msra.mxu0 %v2476
    %2883 = vmatprep.subr.bf16.mxu0 0
    %2884 = vmatpush1.bf16.msra.mxu0 %v2477
    %2885 = vmatprep.subr.bf16.mxu0 0
    %2886 = vmatpush1.bf16.msra.mxu0 %v2478
    %2887 = vmatprep.subr.bf16.mxu0 0
    %2888 = vmatpush1.bf16.msra.mxu0 %v2479
    %2889 = vmatprep.subr.bf16.mxu0 0
    %2890 = vmatpush1.bf16.msra.mxu0 %v2480
    %2891 = vmatprep.subr.bf16.mxu0 0
    %2892 = vmatpush1.bf16.msra.mxu0 %v2481
    %2893 = vmatprep.subr.bf16.mxu0 0
    %2894 = vmatpush1.bf16.msra.mxu0 %v2482
    %2895 = vmatprep.subr.bf16.mxu0 0
    %2896 = vmatpush1.bf16.msra.mxu0 %v2483
    %2897 = vmatprep.subr.bf16.mxu0 0
    %2898 = vmatpush1.bf16.msra.mxu0 %v2484
    %2899 = vmatprep.subr.bf16.mxu0 0
    %2900 = vmatpush1.bf16.msra.mxu0 %v2485
    %2901 = vmatprep.subr.bf16.mxu0 0
    %2902 = vmatpush1.bf16.msra.mxu0 %v2486
    %2903 = vmatprep.mubr.bf16.mxu0 %v1844
    %2904 = vmatmul.mubr.bf16.gmra.mrb[0].mxu0 %v1843
    %v2905 = vpop.f32.mrb[0].mxu0
    %v2906 = vadd.f32 %v2866, %v2905
    %v2907 = vpop.f32.mrb[0].mxu0
    %v2908 = vpop.f32.mrb[0].mxu0
    %v2909 = vpop.f32.mrb[0].mxu0
    %2910 = vdwg.mxu0
    %2911 = vmatprep.subr.bf16.mxu0 0
    %2912 = vmatpush1.bf16.msra.mxu0 %v2487
    %2913 = vmatprep.subr.bf16.mxu0 0
    %2914 = vmatpush1.bf16.msra.mxu0 %v2488
    %2915 = vmatprep.subr.bf16.mxu0 0
    %2916 = vmatpush1.bf16.msra.mxu0 %v2489
    %2917 = vmatprep.subr.bf16.mxu0 0
    %2918 = vmatpush1.bf16.msra.mxu0 %v2490
    %2919 = vmatprep.subr.bf16.mxu0 0
    %2920 = vmatpush1.bf16.msra.mxu0 %v2491
    %2921 = vmatprep.subr.bf16.mxu0 0
    %2922 = vmatpush1.bf16.msra.mxu0 %v2492
    %2923 = vmatprep.subr.bf16.mxu0 0
    %2924 = vmatpush1.bf16.msra.mxu0 %v2493
    %2925 = vmatprep.subr.bf16.mxu0 0
    %2926 = vmatpush1.bf16.msra.mxu0 %v2494
    %2927 = vmatprep.subr.bf16.mxu0 0
    %2928 = vmatpush1.bf16.msra.mxu0 %v2495
    %2929 = vmatprep.subr.bf16.mxu0 0
    %2930 = vmatpush1.bf16.msra.mxu0 %v2496
    %2931 = vmatprep.subr.bf16.mxu0 0
    %2932 = vmatpush1.bf16.msra.mxu0 %v2497
    %2933 = vmatprep.subr.bf16.mxu0 0
    %2934 = vmatpush1.bf16.msra.mxu0 %v2498
    %2935 = vmatprep.subr.bf16.mxu0 0
    %2936 = vmatpush1.bf16.msra.mxu0 %v2499
    %2937 = vmatprep.subr.bf16.mxu0 0
    %2938 = vmatpush1.bf16.msra.mxu0 %v2500
    %2939 = vmatprep.subr.bf16.mxu0 0
    %2940 = vmatpush1.bf16.msra.mxu0 %v2501
    %2941 = vmatprep.subr.bf16.mxu0 0
    %2942 = vmatpush1.bf16.msra.mxu0 %v2502
    %2943 = vmatprep.mubr.bf16.mxu0 %v1846
    %2944 = vmatmul.mubr.bf16.gmra.mrb[0].mxu0 %v1845
    %v2945 = vpop.f32.mrb[0].mxu0
    %v2946 = vadd.f32 %v2906, %v2945
    %v2947 = vpop.f32.mrb[0].mxu0
    %v2948 = vpop.f32.mrb[0].mxu0
    %v2949 = vpop.f32.mrb[0].mxu0
    %2950 = vdwg.mxu0
    %v2951 = vld [vmem:[%s11] sm:$0xff]
    %v2952 = vld [vmem:[%s11 + $0x8] sm:$0xff]
    %v2953 = vld [vmem:[%s11 + $0x10] sm:$0xff]
    %v2954 = vld [vmem:[%s11 + $0x18] sm:$0xff]
    %v2956 = vsel %vm56, %v2946, 0
    %2958 = vmatprep.subr.mxu0 0.0
    %2959 = vmatpush1.msra.mxu0 %v2951
    %2960 = vmatprep.subr.mxu0 0.0
    %2961 = vmatpush1.msra.mxu0 %v2952
    %2962 = vmatprep.subr.mxu0 0.0
    %2963 = vmatpush1.msra.mxu0 %v2953
    %2964 = vmatprep.subr.mxu0 0.0
    %2965 = vmatpush1.msra.mxu0 %v2954
    %2966 = vmatprep.subr.mxu0 0.0
    %2967 = vmatpush1.msra.mxu0 0.0
    %2968 = vmatprep.subr.mxu0 0.0
    %2969 = vmatpush1.msra.mxu0 0.0
    %2970 = vmatprep.subr.mxu0 0.0
    %2971 = vmatpush1.msra.mxu0 0.0
    %2972 = vmatprep.subr.mxu0 0.0
    %2973 = vmatpush1.msra.mxu0 0.0
    %2974 = vmatprep.subr.mxu0 0.0
    %2975 = vmatpush1.msra.mxu0 0.0
    %2976 = vmatprep.subr.mxu0 0.0
    %2977 = vmatpush1.msra.mxu0 0.0
    %2978 = vmatprep.subr.mxu0 0.0
    %2979 = vmatpush1.msra.mxu0 0.0
    %2980 = vmatprep.subr.mxu0 0.0
    %2981 = vmatpush1.msra.mxu0 0.0
    %2982 = vmatprep.subr.mxu0 0.0
    %2983 = vmatpush1.msra.mxu0 0.0
    %2984 = vmatprep.subr.mxu0 0.0
    %2985 = vmatpush1.msra.mxu0 0.0
    %2986 = vmatprep.subr.mxu0 0.0
    %2987 = vmatpush1.msra.mxu0 0.0
    %2988 = vmatprep.subr.mxu0 0.0
    %2989 = vmatpush1.msra.mxu0 0.0
    %2990 = vmatprep.subr.mxu0 0.0
    %2991 = vmatpush1.msra.mxu0 0.0
    %2992 = vmatprep.subr.mxu0 0.0
    %2993 = vmatpush1.msra.mxu0 0.0
    %2994 = vmatprep.subr.mxu0 0.0
    %2995 = vmatpush1.msra.mxu0 0.0
    %2996 = vmatprep.subr.mxu0 0.0
    %2997 = vmatpush1.msra.mxu0 0.0
    %2998 = vmatprep.subr.mxu0 0.0
    %2999 = vmatpush1.msra.mxu0 0.0
    %3000 = vmatprep.subr.mxu0 0.0
    %3001 = vmatpush1.msra.mxu0 0.0
    %3002 = vmatprep.subr.mxu0 0.0
    %3003 = vmatpush1.msra.mxu0 0.0
    %3004 = vmatprep.subr.mxu0 0.0
    %3005 = vmatpush1.msra.mxu0 0.0
    %3006 = vmatprep.subr.mxu0 0.0
    %3007 = vmatpush1.msra.mxu0 0.0
    %3008 = vmatprep.subr.mxu0 0.0
    %3009 = vmatpush1.msra.mxu0 0.0
    %3010 = vmatprep.subr.mxu0 0.0
    %3011 = vmatpush1.msra.mxu0 0.0
    %3012 = vmatprep.subr.mxu0 0.0
    %3013 = vmatpush1.msra.mxu0 0.0
    %3014 = vmatprep.subr.mxu0 0.0
    %3015 = vmatpush1.msra.mxu0 0.0
    %3016 = vmatprep.subr.mxu0 0.0
    %3017 = vmatpush1.msra.mxu0 0.0
    %3018 = vmatprep.subr.mxu0 0.0
    %3019 = vmatpush1.msra.mxu0 0.0
    %3020 = vmatprep.subr.mxu0 0.0
    %3021 = vmatpush1.msra.mxu0 0.0
    %3022 = vmatprep.mubr.f32.mxu0 0.0
    %3023 = vmatmul.mubr.f32.gmra.mrb[0].mxu0 %v2956
    %v3024 = vpop.f32.mrb[0].mxu0
    %v3025 = vadd.f32 0.0, %v3024
    %v3026 = vpop.f32.mrb[0].mxu0
    %3027 = vdwg.mxu0
    %v3028 = vld [vmem:[%s4] sm:$0x1]
    %v3029 = vld [vmem:[%s12] sm:$0x1]
    %v3030 = vld [vmem:[%s9] sm:$0x1]
    %v3031 = vsub.f32 %v3030, %v3029
    %v3032 = vmul.f32 %v3028, %v3031
    %v3033 = vadd.f32 %v3029, %v3032
    %v3034 = vsub.f32 %v1540, %v3025
    %v3036 = vlaneseq
    %v3037 = vshrl.u32 %v3036, 7
    %v3038 = vsub.s32 0, %v3037
    %v3039 = vrot.slane %v3028, %v3038
    %v3041 = vmul.f32 %v3039, %v3034
    %v3042 = vadd.f32 %v3025, %v3041
    %v3044 = vlaneseq
    %v3045 = vshrl.u32 %v3044, 7
    %v3046 = vsub.s32 0, %v3045
    %v3047 = vrot.slane %v3033, %v3046
    %v3049 = vadd.f32 %v3042, %v3047
    %3050 = vst [vmem:[#allocation2] sm:$0xff] %v3049
    // Predicated region
    $region54: #{tpu_custom_call.1} parent=1 // pred_check
      _
    $region55: #{tpu_custom_call.1} parent=1 // pred_check_branch
      %3052 = sbr.rel (0) target = $region57
    $region56: #{tpu_custom_call.1} parent=1 // pred_region
      %s3054 = ssub.s32 128, 128
      %3055 = vsyncadd [#allocation3], %s3054
      %s3057 = sshll.u32 [#allocation2], 4
      %s3058 = int_to_ptr.vmem [resolvable:$true] %s3057
      %3060 = dma.vmem_to_hbm [thread:$0]  %s3058, 128, %s13, [#allocation3]
    $region57: #{tpu_custom_call.1} parent=1 // pred_fallthru
      _
    // Predicated region
    $region58: #{tpu_custom_call.1} parent=1 // pred_check
      _
    $region59: #{tpu_custom_call.1} parent=1 // pred_check_branch
      %3062 = sbr.rel (0) target = $region61
    $region60: #{tpu_custom_call.1} parent=1 // pred_region
      %3063 = dma.done [#allocation3], 128
    $region61: #{tpu_custom_call.1} parent=1 // pred_fallthru
      _
    %3064 = vsyncpa [#allocation3], 1

</llo_original>
